<compile_context>
chip_gen: v7x
topology: tpu7x:2x2x1
jax: 0.10.0
libtpu: 0.0.40
codegen_flags: <defaults>
</compile_context>

<pallas_src>
import jax
import jax.numpy as jnp
from jax import lax
from jax.experimental import pallas as pl
from jax.experimental.pallas import tpu as pltpu

# Small synthetic config consistent with the module's forward.
N, L, D, H, E, LAYERS = 2, 8, 32, 4, 32, 2   # prompts, seq, width, heads, proj dim, layers
DH = D // H
NL = N * L
LN_EPS = 1e-5
NEG_INF = -1e30   # finite large-negative mask value (robust to padded rows)


def _layernorm(v, g, b):
    mu = jnp.mean(v, axis=-1, keepdims=True)
    var = jnp.mean(jnp.square(v - mu), axis=-1, keepdims=True)
    return (v - mu) * lax.rsqrt(var + LN_EPS) * g + b


# ---------------------------------------------------------------- kernel -----

def fused_text_encoder_kernel(
        eot_ref,                                    # SMEM scalar prefetch, (N,)
        x0_ref, mask_ref,                           # resident: prompts+pos, attn mask
        ln1_g, ln1_b, wqkv, bqkv, woh, bo,          # (LAYERS, ...) stacks, VMEM-resident
        ln2_g, ln2_b, w1, b1, w2, b2,
        lnf_g, lnf_b, proj_ref,                     # final LN / text projection
        o_ref,                                      # output (N, E)
        x_sc):                                      # VMEM scratch (NL, D)
    x = x0_ref[...]                 # (NL, D): prompts + positional embedding (wrapper-folded)
    mask = mask_ref[...]            # (NL, NL) block-diagonal causal mask
    scale = DH ** -0.5

    for l in range(LAYERS):         # static unrolled; all weights already in VMEM
        # ---- attention branch ----
        h1 = _layernorm(x, ln1_g[l], ln1_b[l])
        qkv = jnp.dot(h1, wqkv[l], preferred_element_type=jnp.float32) + bqkv[l]
        # per-head lane slices of packed qkv stacked along a new leading axis -> (H, NL, DH)
        q3 = jnp.stack([qkv[:, hh * DH:(hh + 1) * DH] for hh in range(H)],
                       axis=0) * scale                                # scale hoisted into q
        k3 = jnp.stack([qkv[:, D + hh * DH:D + (hh + 1) * DH] for hh in range(H)], axis=0)
        v3 = jnp.stack([qkv[:, 2 * D + hh * DH:2 * D + (hh + 1) * DH] for hh in range(H)],
                       axis=0)
        s = jnp.einsum('hqd,hkd->hqk', q3, k3,
                       preferred_element_type=jnp.float32) + mask     # (H, NL, NL)
        m = jnp.max(s, axis=-1, keepdims=True)
        p = jnp.exp(s - m)
        p = p * pl.reciprocal(jnp.sum(p, axis=-1, keepdims=True), approx=True)
        ctx = jnp.einsum('hqk,hkd->hqd', p, v3,
                         preferred_element_type=jnp.float32)          # (H, NL, DH)
        # output projection as batched per-head matmul + leading-axis reduce
        part = jnp.einsum('hnd,hdf->hnf', ctx, woh[l],
                          preferred_element_type=jnp.float32)         # (H, NL, D)
        x = x + jnp.sum(part, axis=0) + bo[l]

        # ---- MLP branch (QuickGELU, as in CLIP) ----
        h2 = _layernorm(x, ln2_g[l], ln2_b[l])
        h2 = jnp.dot(h2, w1[l], preferred_element_type=jnp.float32) + b1[l]
        h2 = h2 * jax.nn.sigmoid(1.702 * h2)
        x = x + jnp.dot(h2, w2[l], preferred_element_type=jnp.float32) + b2[l]

    # ---- ln_final + EOT gather (dynamic SMEM-indexed row slices) + projection ----
    x_sc[...] = x
    rows = [x_sc[pl.ds(b * L + eot_ref[b], 1), :] for b in range(N)]   # each (1, D)
    sel = jnp.concatenate(rows, axis=0)                                # (N, D)
    sel = _layernorm(sel, lnf_g[...], lnf_b[...])
    o_ref[...] = jnp.dot(sel, proj_ref[...], preferred_element_type=jnp.float32)


# --------------------------------------------------------------- wrapper -----

def _const_spec(shape):
    nd = len(shape)
    return pl.BlockSpec(tuple(shape), lambda i, eot, _nd=nd: (0,) * _nd)


def _build_mask():
    # block-diagonal causal mask over the flattened (N*L) rows
    idx = jnp.arange(NL)
    batch = idx // L
    pos = idx % L
    allowed = (batch[:, None] == batch[None, :]) & (pos[None, :] <= pos[:, None])
    return jnp.where(allowed, 0.0, NEG_INF).astype(jnp.float32)


_LAYER_KEYS = ['ln1_g', 'ln1_b', 'wqkv', 'bqkv', 'wo', 'bo',
               'ln2_g', 'ln2_b', 'w1', 'b1', 'w2', 'b2']


def text_encoder(prompts, tokenized_prompts, params):
    # cheap int glue, like torch .argmax(dim=-1); prefetched into SMEM
    eot = jnp.argmax(tokenized_prompts, axis=-1).astype(jnp.int32)          # (N,)

    # fold positional embedding into the prompts once (wrapper-side XLA add)
    x0 = (prompts.astype(jnp.float32) + params['pos'][None]).reshape(NL, D)  # (NL, D)
    mask = _build_mask()                                                     # (NL, NL)

    # stack per-layer weights -> (LAYERS, ...); all are VMEM-resident (tiny)
    stacks = {k: jnp.stack([lp[k] for lp in params['layers']]) for k in _LAYER_KEYS}
    woh = stacks['wo'].reshape(LAYERS, H, DH, D)    # per-head out-proj slices

    inputs = [x0, mask,
              stacks['ln1_g'], stacks['ln1_b'], stacks['wqkv'], stacks['bqkv'],
              woh, stacks['bo'],
              stacks['ln2_g'], stacks['ln2_b'],
              stacks['w1'], stacks['b1'], stacks['w2'], stacks['b2'],
              params['lnf_g'], params['lnf_b'], params['proj']]

    out = pl.pallas_call(
        fused_text_encoder_kernel,
        out_shape=jax.ShapeDtypeStruct((N, E), jnp.float32),
        grid_spec=pltpu.PrefetchScalarGridSpec(
            num_scalar_prefetch=1,
            grid=(1,),                               # single fused step
            in_specs=[_const_spec(a.shape) for a in inputs],
            out_specs=pl.BlockSpec((N, E), lambda i, eot: (0, 0)),
            scratch_shapes=[pltpu.VMEM((NL, D), jnp.float32)]),
        compiler_params=pltpu.CompilerParams(
            dimension_semantics=("arbitrary",)),
    )(eot, *inputs)
    return out


# ----------------------------------------------------------------- params ----

def init_params(key):
    keys = iter(jax.random.split(key, 8 + LAYERS * 16))

    def normal(shape, scale=0.02):
        return scale * jax.random.normal(next(keys), shape, jnp.float32)

    params = {
        'pos': normal((L, D)),
        'lnf_g': 1.0 + normal((1, D)),
        'lnf_b': normal((1, D)),
        'proj': normal((D, E)),
        'layers': [],
    }
    for _ in range(LAYERS):
        params['layers'].append({
            'ln1_g': 1.0 + normal((1, D)), 'ln1_b': normal((1, D)),
            'wqkv': normal((D, 3 * D)),    'bqkv': normal((1, 3 * D)),
            'wo': normal((D, D)),          'bo': normal((1, D)),
            'ln2_g': 1.0 + normal((1, D)), 'ln2_b': normal((1, D)),
            'w1': normal((D, 4 * D)),      'b1': normal((1, 4 * D)),
            'w2': normal((4 * D, D)),      'b2': normal((1, D)),
        })
    return params


# -------------------------------------------------------------- reference ----

def reference(prompts, tok, params):
    x = prompts + params['pos'][None]
    causal = jnp.where(jnp.arange(L)[None, :] <= jnp.arange(L)[:, None], 0.0, -jnp.inf)
    for p in params['layers']:
        h = _layernorm(x, p['ln1_g'][0], p['ln1_b'][0])
        qkv = h @ p['wqkv'] + p['bqkv'][0]
        q, k, v = jnp.split(qkv, 3, axis=-1)
        q = q.reshape(N, L, H, DH)
        k = k.reshape(N, L, H, DH)
        v = v.reshape(N, L, H, DH)
        sc = jnp.einsum('nqhd,nkhd->nhqk', q, k) * (DH ** -0.5) + causal
        att = jax.nn.softmax(sc, axis=-1)
        ctx = jnp.einsum('nhqk,nkhd->nqhd', att, v).reshape(N, L, D)
        x = x + ctx @ p['wo'] + p['bo'][0]
        h2 = _layernorm(x, p['ln2_g'][0], p['ln2_b'][0])
        h2 = h2 @ p['w1'] + p['b1'][0]
        h2 = h2 * jax.nn.sigmoid(1.702 * h2)
        x = x + h2 @ p['w2'] + p['b2'][0]
    eot = jnp.argmax(tok, axis=-1)
    x = _layernorm(x, params['lnf_g'][0], params['lnf_b'][0])
    sel = x[jnp.arange(N), eot]
    return sel @ params['proj']


# ------------------------------------------------------------------- main ----

if __name__ == "__main__":
    key = jax.random.PRNGKey(0)
    kp, kt, kw = jax.random.split(key, 3)
    params = init_params(kw)

    prompts = 0.02 * jax.random.normal(kp, (N, L, D), jnp.float32)
    tokenized_prompts = jax.random.randint(kt, (N, L), 1, 100, dtype=jnp.int32)
    # plant the "EOT" (max) token at known positions, like CLIP tokenization
    eot_pos = jnp.array([L - 1, L // 2], jnp.int32)
    tokenized_prompts = tokenized_prompts.at[jnp.arange(N), eot_pos].set(1000)

    out = text_encoder(prompts, tokenized_prompts, params)
    out = jax.block_until_ready(out)

    ref = reference(prompts, tokenized_prompts, params)
    assert out.shape == (N, E), out.shape
    assert jnp.allclose(out, ref, atol=1e-3, rtol=1e-3), \
        float(jnp.max(jnp.abs(out - ref)))
    print("KERNEL_OK")
</pallas_src>

<mosaic_0001>
module attributes {stable_mosaic.version = 11 : i64} {
  func.func @fused_text_encoder_kernel(%arg0: i32, %arg1: memref<2xi32, #tpu.memory_space<smem>>, %arg2: memref<16x32xf32, #tpu.memory_space<vmem>>, %arg3: memref<16x16xf32, #tpu.memory_space<vmem>>, %arg4: memref<2x1x32xf32, #tpu.memory_space<vmem>>, %arg5: memref<2x1x32xf32, #tpu.memory_space<vmem>>, %arg6: memref<2x32x96xf32, #tpu.memory_space<vmem>>, %arg7: memref<2x1x96xf32, #tpu.memory_space<vmem>>, %arg8: memref<2x4x8x32xf32, #tpu.memory_space<vmem>>, %arg9: memref<2x1x32xf32, #tpu.memory_space<vmem>>, %arg10: memref<2x1x32xf32, #tpu.memory_space<vmem>>, %arg11: memref<2x1x32xf32, #tpu.memory_space<vmem>>, %arg12: memref<2x32x128xf32, #tpu.memory_space<vmem>>, %arg13: memref<2x1x128xf32, #tpu.memory_space<vmem>>, %arg14: memref<2x128x32xf32, #tpu.memory_space<vmem>>, %arg15: memref<2x1x32xf32, #tpu.memory_space<vmem>>, %arg16: memref<1x32xf32, #tpu.memory_space<vmem>>, %arg17: memref<1x32xf32, #tpu.memory_space<vmem>>, %arg18: memref<32x32xf32, #tpu.memory_space<vmem>>, %arg19: memref<2x32xf32, #tpu.memory_space<vmem>>, %arg20: memref<16x32xf32, #tpu.memory_space<vmem>>) attributes {dimension_semantics = [#tpu.dimension_semantics<arbitrary>], iteration_bounds = array<i64: 1>, scalar_prefetch = 1 : i64, scratch_operands = 1 : i64, tpu.core_type = #tpu.core_type<tc>, window_params = [{pipeline_mode = #tpu.pipeline_mode<synchronous>, transform_indices = @transform_0, window_bounds = array<i64: 16, 32>}, {pipeline_mode = #tpu.pipeline_mode<synchronous>, transform_indices = @transform_1, window_bounds = array<i64: 16, 16>}, {pipeline_mode = #tpu.pipeline_mode<synchronous>, transform_indices = @transform_2, window_bounds = array<i64: 2, 1, 32>}, {pipeline_mode = #tpu.pipeline_mode<synchronous>, transform_indices = @transform_3, window_bounds = array<i64: 2, 1, 32>}, {pipeline_mode = #tpu.pipeline_mode<synchronous>, transform_indices = @transform_4, window_bounds = array<i64: 2, 32, 96>}, {pipeline_mode = #tpu.pipeline_mode<synchronous>, transform_indices = @transform_5, window_bounds = array<i64: 2, 1, 96>}, {pipeline_mode = #tpu.pipeline_mode<synchronous>, transform_indices = @transform_6, window_bounds = array<i64: 2, 4, 8, 32>}, {pipeline_mode = #tpu.pipeline_mode<synchronous>, transform_indices = @transform_7, window_bounds = array<i64: 2, 1, 32>}, {pipeline_mode = #tpu.pipeline_mode<synchronous>, transform_indices = @transform_8, window_bounds = array<i64: 2, 1, 32>}, {pipeline_mode = #tpu.pipeline_mode<synchronous>, transform_indices = @transform_9, window_bounds = array<i64: 2, 1, 32>}, {pipeline_mode = #tpu.pipeline_mode<synchronous>, transform_indices = @transform_10, window_bounds = array<i64: 2, 32, 128>}, {pipeline_mode = #tpu.pipeline_mode<synchronous>, transform_indices = @transform_11, window_bounds = array<i64: 2, 1, 128>}, {pipeline_mode = #tpu.pipeline_mode<synchronous>, transform_indices = @transform_12, window_bounds = array<i64: 2, 128, 32>}, {pipeline_mode = #tpu.pipeline_mode<synchronous>, transform_indices = @transform_13, window_bounds = array<i64: 2, 1, 32>}, {pipeline_mode = #tpu.pipeline_mode<synchronous>, transform_indices = @transform_14, window_bounds = array<i64: 1, 32>}, {pipeline_mode = #tpu.pipeline_mode<synchronous>, transform_indices = @transform_15, window_bounds = array<i64: 1, 32>}, {pipeline_mode = #tpu.pipeline_mode<synchronous>, transform_indices = @transform_16, window_bounds = array<i64: 32, 32>}, {pipeline_mode = #tpu.pipeline_mode<synchronous>, transform_indices = @transform_17, window_bounds = array<i64: 2, 32>}]} {
    %c0 = arith.constant 0 : index
    %c0_0 = arith.constant 0 : index
    %0 = vector.load %arg2[%c0, %c0_0] : memref<16x32xf32, #tpu.memory_space<vmem>>, vector<16x32xf32>
    %c0_1 = arith.constant 0 : index
    %c0_2 = arith.constant 0 : index
    %1 = vector.load %arg3[%c0_1, %c0_2] : memref<16x16xf32, #tpu.memory_space<vmem>>, vector<16x16xf32>
    %c0_3 = arith.constant 0 : index
    %c0_4 = arith.constant 0 : index
    %c0_5 = arith.constant 0 : index
    %2 = vector.load %arg4[%c0_3, %c0_4, %c0_5] : memref<2x1x32xf32, #tpu.memory_space<vmem>>, vector<1x1x32xf32>
    %3 = vector.shape_cast %2 : vector<1x1x32xf32> to vector<1x32xf32>
    %c0_6 = arith.constant 0 : index
    %c0_7 = arith.constant 0 : index
    %c0_8 = arith.constant 0 : index
    %4 = vector.load %arg5[%c0_6, %c0_7, %c0_8] : memref<2x1x32xf32, #tpu.memory_space<vmem>>, vector<1x1x32xf32>
    %5 = vector.shape_cast %4 : vector<1x1x32xf32> to vector<1x32xf32>
    %cst = arith.constant dense<0.000000e+00> : vector<16xf32>
    %6 = vector.multi_reduction <add>, %0, %cst [1] : vector<16x32xf32> to vector<16xf32>
    %7 = vector.shape_cast %6 : vector<16xf32> to vector<16x1xf32>
    %cst_9 = arith.constant 3.200000e+01 : f32
    %8 = vector.broadcast %cst_9 : f32 to vector<16x1xf32>
    %9 = arith.divf %7, %8 : vector<16x1xf32>
    %10 = vector.broadcast %9 : vector<16x1xf32> to vector<16x32xf32>
    %11 = arith.subf %0, %10 : vector<16x32xf32>
    %12 = arith.mulf %11, %11 : vector<16x32xf32>
    %cst_10 = arith.constant dense<0.000000e+00> : vector<16xf32>
    %13 = vector.multi_reduction <add>, %12, %cst_10 [1] : vector<16x32xf32> to vector<16xf32>
    %14 = vector.shape_cast %13 : vector<16xf32> to vector<16x1xf32>
    %cst_11 = arith.constant 3.200000e+01 : f32
    %15 = vector.broadcast %cst_11 : f32 to vector<16x1xf32>
    %16 = arith.divf %14, %15 : vector<16x1xf32>
    %17 = vector.broadcast %9 : vector<16x1xf32> to vector<16x32xf32>
    %18 = arith.subf %0, %17 : vector<16x32xf32>
    %cst_12 = arith.constant 9.99999974E-6 : f32
    %19 = vector.broadcast %cst_12 : f32 to vector<16x1xf32>
    %20 = arith.addf %16, %19 : vector<16x1xf32>
    %21 = math.rsqrt %20 : vector<16x1xf32>
    %22 = vector.broadcast %21 : vector<16x1xf32> to vector<16x32xf32>
    %23 = arith.mulf %18, %22 : vector<16x32xf32>
    %24 = vector.broadcast %3 : vector<1x32xf32> to vector<16x32xf32>
    %25 = arith.mulf %23, %24 : vector<16x32xf32>
    %26 = vector.broadcast %5 : vector<1x32xf32> to vector<16x32xf32>
    %27 = arith.addf %25, %26 : vector<16x32xf32>
    %c0_13 = arith.constant 0 : index
    %c0_14 = arith.constant 0 : index
    %c0_15 = arith.constant 0 : index
    %28 = vector.load %arg6[%c0_13, %c0_14, %c0_15] : memref<2x32x96xf32, #tpu.memory_space<vmem>>, vector<1x32x96xf32>
    %29 = vector.shape_cast %28 : vector<1x32x96xf32> to vector<32x96xf32>
    %cst_16 = arith.constant dense<0.000000e+00> : vector<16x96xf32>
    %30 = tpu.matmul %27, %29, %cst_16 {dimension_numbers = #tpu.dot_dimension_numbers<[1], [0], [0], [1], [0, 0, 1, 1], [], []>} : vector<16x32xf32>, vector<32x96xf32>, vector<16x96xf32> -> vector<16x96xf32>
    %c0_17 = arith.constant 0 : index
    %c0_18 = arith.constant 0 : index
    %c0_19 = arith.constant 0 : index
    %31 = vector.load %arg7[%c0_17, %c0_18, %c0_19] : memref<2x1x96xf32, #tpu.memory_space<vmem>>, vector<1x1x96xf32>
    %32 = vector.shape_cast %31 : vector<1x1x96xf32> to vector<1x96xf32>
    %33 = vector.broadcast %32 : vector<1x96xf32> to vector<16x96xf32>
    %34 = arith.addf %30, %33 : vector<16x96xf32>
    %35 = vector.extract_strided_slice %34 {offsets = [0, 0], sizes = [16, 8], strides = [1, 1]} : vector<16x96xf32> to vector<16x8xf32>
    %36 = vector.extract_strided_slice %34 {offsets = [0, 8], sizes = [16, 8], strides = [1, 1]} : vector<16x96xf32> to vector<16x8xf32>
    %37 = vector.extract_strided_slice %34 {offsets = [0, 16], sizes = [16, 8], strides = [1, 1]} : vector<16x96xf32> to vector<16x8xf32>
    %38 = vector.extract_strided_slice %34 {offsets = [0, 24], sizes = [16, 8], strides = [1, 1]} : vector<16x96xf32> to vector<16x8xf32>
    %39 = vector.shape_cast %35 : vector<16x8xf32> to vector<1x16x8xf32>
    %40 = vector.shape_cast %36 : vector<16x8xf32> to vector<1x16x8xf32>
    %41 = vector.shape_cast %37 : vector<16x8xf32> to vector<1x16x8xf32>
    %42 = vector.shape_cast %38 : vector<16x8xf32> to vector<1x16x8xf32>
    %43 = tpu.concatenate %39, %40, %41, %42 in 0 : vector<1x16x8xf32>, vector<1x16x8xf32>, vector<1x16x8xf32>, vector<1x16x8xf32> -> vector<4x16x8xf32>
    %cst_20 = arith.constant 0.353553385 : f32
    %44 = vector.broadcast %cst_20 : f32 to vector<4x16x8xf32>
    %45 = arith.mulf %43, %44 : vector<4x16x8xf32>
    %46 = vector.extract_strided_slice %34 {offsets = [0, 32], sizes = [16, 8], strides = [1, 1]} : vector<16x96xf32> to vector<16x8xf32>
    %47 = vector.extract_strided_slice %34 {offsets = [0, 40], sizes = [16, 8], strides = [1, 1]} : vector<16x96xf32> to vector<16x8xf32>
    %48 = vector.extract_strided_slice %34 {offsets = [0, 48], sizes = [16, 8], strides = [1, 1]} : vector<16x96xf32> to vector<16x8xf32>
    %49 = vector.extract_strided_slice %34 {offsets = [0, 56], sizes = [16, 8], strides = [1, 1]} : vector<16x96xf32> to vector<16x8xf32>
    %50 = vector.shape_cast %46 : vector<16x8xf32> to vector<1x16x8xf32>
    %51 = vector.shape_cast %47 : vector<16x8xf32> to vector<1x16x8xf32>
    %52 = vector.shape_cast %48 : vector<16x8xf32> to vector<1x16x8xf32>
    %53 = vector.shape_cast %49 : vector<16x8xf32> to vector<1x16x8xf32>
    %54 = tpu.concatenate %50, %51, %52, %53 in 0 : vector<1x16x8xf32>, vector<1x16x8xf32>, vector<1x16x8xf32>, vector<1x16x8xf32> -> vector<4x16x8xf32>
    %55 = vector.extract_strided_slice %34 {offsets = [0, 64], sizes = [16, 8], strides = [1, 1]} : vector<16x96xf32> to vector<16x8xf32>
    %56 = vector.extract_strided_slice %34 {offsets = [0, 72], sizes = [16, 8], strides = [1, 1]} : vector<16x96xf32> to vector<16x8xf32>
    %57 = vector.extract_strided_slice %34 {offsets = [0, 80], sizes = [16, 8], strides = [1, 1]} : vector<16x96xf32> to vector<16x8xf32>
    %58 = vector.extract_strided_slice %34 {offsets = [0, 88], sizes = [16, 8], strides = [1, 1]} : vector<16x96xf32> to vector<16x8xf32>
    %59 = vector.shape_cast %55 : vector<16x8xf32> to vector<1x16x8xf32>
    %60 = vector.shape_cast %56 : vector<16x8xf32> to vector<1x16x8xf32>
    %61 = vector.shape_cast %57 : vector<16x8xf32> to vector<1x16x8xf32>
    %62 = vector.shape_cast %58 : vector<16x8xf32> to vector<1x16x8xf32>
    %63 = tpu.concatenate %59, %60, %61, %62 in 0 : vector<1x16x8xf32>, vector<1x16x8xf32>, vector<1x16x8xf32>, vector<1x16x8xf32> -> vector<4x16x8xf32>
    "tpu.trace_start"() <{level = 10 : i32, message = "hqd,hkd->hqk"}> : () -> ()
    %cst_21 = arith.constant dense<0.000000e+00> : vector<4x16x16xf32>
    %64 = tpu.matmul %45, %54, %cst_21 {dimension_numbers = #tpu.dot_dimension_numbers<[2], [2], [1], [1], [0, 0, 0, 1, 1, 1], [0], [0]>} : vector<4x16x8xf32>, vector<4x16x8xf32>, vector<4x16x16xf32> -> vector<4x16x16xf32>
    "tpu.trace_stop"() : () -> ()
    %65 = vector.shape_cast %1 : vector<16x16xf32> to vector<1x16x16xf32>
    %66 = vector.broadcast %65 : vector<1x16x16xf32> to vector<4x16x16xf32>
    %67 = arith.addf %64, %66 : vector<4x16x16xf32>
    %cst_22 = arith.constant dense<0xFF800000> : vector<4x16xf32>
    %68 = vector.multi_reduction <maximumf>, %67, %cst_22 [2] : vector<4x16x16xf32> to vector<4x16xf32>
    %69 = vector.shape_cast %68 : vector<4x16xf32> to vector<4x16x1xf32>
    %70 = vector.broadcast %69 : vector<4x16x1xf32> to vector<4x16x16xf32>
    %71 = arith.subf %67, %70 : vector<4x16x16xf32>
    %72 = math.exp %71 : vector<4x16x16xf32>
    %cst_23 = arith.constant dense<0.000000e+00> : vector<4x16xf32>
    %73 = vector.multi_reduction <add>, %72, %cst_23 [2] : vector<4x16x16xf32> to vector<4x16xf32>
    %74 = vector.shape_cast %73 : vector<4x16xf32> to vector<4x16x1xf32>
    %75 = tpu.reciprocal %74 {approx = true} : vector<4x16x1xf32> -> vector<4x16x1xf32>
    %76 = vector.broadcast %75 : vector<4x16x1xf32> to vector<4x16x16xf32>
    %77 = arith.mulf %72, %76 : vector<4x16x16xf32>
    "tpu.trace_start"() <{level = 10 : i32, message = "hqk,hkd->hqd"}> : () -> ()
    %cst_24 = arith.constant dense<0.000000e+00> : vector<4x16x8xf32>
    %78 = tpu.matmul %77, %63, %cst_24 {dimension_numbers = #tpu.dot_dimension_numbers<[2], [1], [1], [2], [0, 0, 0, 1, 1, 2], [0], [0]>} : vector<4x16x16xf32>, vector<4x16x8xf32>, vector<4x16x8xf32> -> vector<4x16x8xf32>
    "tpu.trace_stop"() : () -> ()
    %c0_25 = arith.constant 0 : index
    %c0_26 = arith.constant 0 : index
    %c0_27 = arith.constant 0 : index
    %c0_28 = arith.constant 0 : index
    %79 = vector.load %arg8[%c0_25, %c0_26, %c0_27, %c0_28] : memref<2x4x8x32xf32, #tpu.memory_space<vmem>>, vector<1x4x8x32xf32>
    %80 = vector.shape_cast %79 : vector<1x4x8x32xf32> to vector<4x8x32xf32>
    "tpu.trace_start"() <{level = 10 : i32, message = "hnd,hdf->hnf"}> : () -> ()
    %cst_29 = arith.constant dense<0.000000e+00> : vector<4x16x32xf32>
    %81 = tpu.matmul %78, %80, %cst_29 {dimension_numbers = #tpu.dot_dimension_numbers<[2], [1], [1], [2], [0, 0, 0, 1, 1, 2], [0], [0]>} : vector<4x16x8xf32>, vector<4x8x32xf32>, vector<4x16x32xf32> -> vector<4x16x32xf32>
    "tpu.trace_stop"() : () -> ()
    %cst_30 = arith.constant dense<0.000000e+00> : vector<16x32xf32>
    %82 = vector.multi_reduction <add>, %81, %cst_30 [0] : vector<4x16x32xf32> to vector<16x32xf32>
    %83 = arith.addf %0, %82 : vector<16x32xf32>
    %c0_31 = arith.constant 0 : index
    %c0_32 = arith.constant 0 : index
    %c0_33 = arith.constant 0 : index
    %84 = vector.load %arg9[%c0_31, %c0_32, %c0_33] : memref<2x1x32xf32, #tpu.memory_space<vmem>>, vector<1x1x32xf32>
    %85 = vector.shape_cast %84 : vector<1x1x32xf32> to vector<1x32xf32>
    %86 = vector.broadcast %85 : vector<1x32xf32> to vector<16x32xf32>
    %87 = arith.addf %83, %86 : vector<16x32xf32>
    %c0_34 = arith.constant 0 : index
    %c0_35 = arith.constant 0 : index
    %c0_36 = arith.constant 0 : index
    %88 = vector.load %arg10[%c0_34, %c0_35, %c0_36] : memref<2x1x32xf32, #tpu.memory_space<vmem>>, vector<1x1x32xf32>
    %89 = vector.shape_cast %88 : vector<1x1x32xf32> to vector<1x32xf32>
    %c0_37 = arith.constant 0 : index
    %c0_38 = arith.constant 0 : index
    %c0_39 = arith.constant 0 : index
    %90 = vector.load %arg11[%c0_37, %c0_38, %c0_39] : memref<2x1x32xf32, #tpu.memory_space<vmem>>, vector<1x1x32xf32>
    %91 = vector.shape_cast %90 : vector<1x1x32xf32> to vector<1x32xf32>
    %cst_40 = arith.constant dense<0.000000e+00> : vector<16xf32>
    %92 = vector.multi_reduction <add>, %87, %cst_40 [1] : vector<16x32xf32> to vector<16xf32>
    %93 = vector.shape_cast %92 : vector<16xf32> to vector<16x1xf32>
    %cst_41 = arith.constant 3.200000e+01 : f32
    %94 = vector.broadcast %cst_41 : f32 to vector<16x1xf32>
    %95 = arith.divf %93, %94 : vector<16x1xf32>
    %96 = vector.broadcast %95 : vector<16x1xf32> to vector<16x32xf32>
    %97 = arith.subf %87, %96 : vector<16x32xf32>
    %98 = arith.mulf %97, %97 : vector<16x32xf32>
    %cst_42 = arith.constant dense<0.000000e+00> : vector<16xf32>
    %99 = vector.multi_reduction <add>, %98, %cst_42 [1] : vector<16x32xf32> to vector<16xf32>
    %100 = vector.shape_cast %99 : vector<16xf32> to vector<16x1xf32>
    %cst_43 = arith.constant 3.200000e+01 : f32
    %101 = vector.broadcast %cst_43 : f32 to vector<16x1xf32>
    %102 = arith.divf %100, %101 : vector<16x1xf32>
    %103 = vector.broadcast %95 : vector<16x1xf32> to vector<16x32xf32>
    %104 = arith.subf %87, %103 : vector<16x32xf32>
    %cst_44 = arith.constant 9.99999974E-6 : f32
    %105 = vector.broadcast %cst_44 : f32 to vector<16x1xf32>
    %106 = arith.addf %102, %105 : vector<16x1xf32>
    %107 = math.rsqrt %106 : vector<16x1xf32>
    %108 = vector.broadcast %107 : vector<16x1xf32> to vector<16x32xf32>
    %109 = arith.mulf %104, %108 : vector<16x32xf32>
    %110 = vector.broadcast %89 : vector<1x32xf32> to vector<16x32xf32>
    %111 = arith.mulf %109, %110 : vector<16x32xf32>
    %112 = vector.broadcast %91 : vector<1x32xf32> to vector<16x32xf32>
    %113 = arith.addf %111, %112 : vector<16x32xf32>
    %c0_45 = arith.constant 0 : index
    %c0_46 = arith.constant 0 : index
    %c0_47 = arith.constant 0 : index
    %114 = vector.load %arg12[%c0_45, %c0_46, %c0_47] : memref<2x32x128xf32, #tpu.memory_space<vmem>>, vector<1x32x128xf32>
    %115 = vector.shape_cast %114 : vector<1x32x128xf32> to vector<32x128xf32>
    %cst_48 = arith.constant dense<0.000000e+00> : vector<16x128xf32>
    %116 = tpu.matmul %113, %115, %cst_48 {dimension_numbers = #tpu.dot_dimension_numbers<[1], [0], [0], [1], [0, 0, 1, 1], [], []>} : vector<16x32xf32>, vector<32x128xf32>, vector<16x128xf32> -> vector<16x128xf32>
    %c0_49 = arith.constant 0 : index
    %c0_50 = arith.constant 0 : index
    %c0_51 = arith.constant 0 : index
    %117 = vector.load %arg13[%c0_49, %c0_50, %c0_51] : memref<2x1x128xf32, #tpu.memory_space<vmem>>, vector<1x1x128xf32>
    %118 = vector.shape_cast %117 : vector<1x1x128xf32> to vector<1x128xf32>
    %119 = vector.broadcast %118 : vector<1x128xf32> to vector<16x128xf32>
    %120 = arith.addf %116, %119 : vector<16x128xf32>
    %cst_52 = arith.constant 1.702000e+00 : f32
    %121 = vector.broadcast %cst_52 : f32 to vector<16x128xf32>
    %122 = arith.mulf %121, %120 : vector<16x128xf32>
    %123 = arith.negf %122 : vector<16x128xf32>
    %124 = math.exp %123 : vector<16x128xf32>
    %cst_53 = arith.constant 1.000000e+00 : f32
    %125 = vector.broadcast %cst_53 : f32 to vector<16x128xf32>
    %126 = arith.addf %125, %124 : vector<16x128xf32>
    %127 = arith.divf %125, %126 : vector<16x128xf32>
    %128 = arith.mulf %120, %127 : vector<16x128xf32>
    %c0_54 = arith.constant 0 : index
    %c0_55 = arith.constant 0 : index
    %c0_56 = arith.constant 0 : index
    %129 = vector.load %arg14[%c0_54, %c0_55, %c0_56] : memref<2x128x32xf32, #tpu.memory_space<vmem>>, vector<1x128x32xf32>
    %130 = vector.shape_cast %129 : vector<1x128x32xf32> to vector<128x32xf32>
    %cst_57 = arith.constant dense<0.000000e+00> : vector<16x32xf32>
    %131 = tpu.matmul %128, %130, %cst_57 {dimension_numbers = #tpu.dot_dimension_numbers<[1], [0], [0], [1], [0, 0, 1, 1], [], []>} : vector<16x128xf32>, vector<128x32xf32>, vector<16x32xf32> -> vector<16x32xf32>
    %132 = arith.addf %87, %131 : vector<16x32xf32>
    %c0_58 = arith.constant 0 : index
    %c0_59 = arith.constant 0 : index
    %c0_60 = arith.constant 0 : index
    %133 = vector.load %arg15[%c0_58, %c0_59, %c0_60] : memref<2x1x32xf32, #tpu.memory_space<vmem>>, vector<1x1x32xf32>
    %134 = vector.shape_cast %133 : vector<1x1x32xf32> to vector<1x32xf32>
    %135 = vector.broadcast %134 : vector<1x32xf32> to vector<16x32xf32>
    %136 = arith.addf %132, %135 : vector<16x32xf32>
    %c1 = arith.constant 1 : index
    %c0_61 = arith.constant 0 : index
    %c0_62 = arith.constant 0 : index
    %137 = vector.load %arg4[%c1, %c0_61, %c0_62] : memref<2x1x32xf32, #tpu.memory_space<vmem>>, vector<1x1x32xf32>
    %138 = vector.shape_cast %137 : vector<1x1x32xf32> to vector<1x32xf32>
    %c1_63 = arith.constant 1 : index
    %c0_64 = arith.constant 0 : index
    %c0_65 = arith.constant 0 : index
    %139 = vector.load %arg5[%c1_63, %c0_64, %c0_65] : memref<2x1x32xf32, #tpu.memory_space<vmem>>, vector<1x1x32xf32>
    %140 = vector.shape_cast %139 : vector<1x1x32xf32> to vector<1x32xf32>
    %cst_66 = arith.constant dense<0.000000e+00> : vector<16xf32>
    %141 = vector.multi_reduction <add>, %136, %cst_66 [1] : vector<16x32xf32> to vector<16xf32>
    %142 = vector.shape_cast %141 : vector<16xf32> to vector<16x1xf32>
    %cst_67 = arith.constant 3.200000e+01 : f32
    %143 = vector.broadcast %cst_67 : f32 to vector<16x1xf32>
    %144 = arith.divf %142, %143 : vector<16x1xf32>
    %145 = vector.broadcast %144 : vector<16x1xf32> to vector<16x32xf32>
    %146 = arith.subf %136, %145 : vector<16x32xf32>
    %147 = arith.mulf %146, %146 : vector<16x32xf32>
    %cst_68 = arith.constant dense<0.000000e+00> : vector<16xf32>
    %148 = vector.multi_reduction <add>, %147, %cst_68 [1] : vector<16x32xf32> to vector<16xf32>
    %149 = vector.shape_cast %148 : vector<16xf32> to vector<16x1xf32>
    %cst_69 = arith.constant 3.200000e+01 : f32
    %150 = vector.broadcast %cst_69 : f32 to vector<16x1xf32>
    %151 = arith.divf %149, %150 : vector<16x1xf32>
    %152 = vector.broadcast %144 : vector<16x1xf32> to vector<16x32xf32>
    %153 = arith.subf %136, %152 : vector<16x32xf32>
    %cst_70 = arith.constant 9.99999974E-6 : f32
    %154 = vector.broadcast %cst_70 : f32 to vector<16x1xf32>
    %155 = arith.addf %151, %154 : vector<16x1xf32>
    %156 = math.rsqrt %155 : vector<16x1xf32>
    %157 = vector.broadcast %156 : vector<16x1xf32> to vector<16x32xf32>
    %158 = arith.mulf %153, %157 : vector<16x32xf32>
    %159 = vector.broadcast %138 : vector<1x32xf32> to vector<16x32xf32>
    %160 = arith.mulf %158, %159 : vector<16x32xf32>
    %161 = vector.broadcast %140 : vector<1x32xf32> to vector<16x32xf32>
    %162 = arith.addf %160, %161 : vector<16x32xf32>
    %c1_71 = arith.constant 1 : index
    %c0_72 = arith.constant 0 : index
    %c0_73 = arith.constant 0 : index
    %163 = vector.load %arg6[%c1_71, %c0_72, %c0_73] : memref<2x32x96xf32, #tpu.memory_space<vmem>>, vector<1x32x96xf32>
    %164 = vector.shape_cast %163 : vector<1x32x96xf32> to vector<32x96xf32>
    %cst_74 = arith.constant dense<0.000000e+00> : vector<16x96xf32>
    %165 = tpu.matmul %162, %164, %cst_74 {dimension_numbers = #tpu.dot_dimension_numbers<[1], [0], [0], [1], [0, 0, 1, 1], [], []>} : vector<16x32xf32>, vector<32x96xf32>, vector<16x96xf32> -> vector<16x96xf32>
    %c1_75 = arith.constant 1 : index
    %c0_76 = arith.constant 0 : index
    %c0_77 = arith.constant 0 : index
    %166 = vector.load %arg7[%c1_75, %c0_76, %c0_77] : memref<2x1x96xf32, #tpu.memory_space<vmem>>, vector<1x1x96xf32>
    %167 = vector.shape_cast %166 : vector<1x1x96xf32> to vector<1x96xf32>
    %168 = vector.broadcast %167 : vector<1x96xf32> to vector<16x96xf32>
    %169 = arith.addf %165, %168 : vector<16x96xf32>
    %170 = vector.extract_strided_slice %169 {offsets = [0, 0], sizes = [16, 8], strides = [1, 1]} : vector<16x96xf32> to vector<16x8xf32>
    %171 = vector.extract_strided_slice %169 {offsets = [0, 8], sizes = [16, 8], strides = [1, 1]} : vector<16x96xf32> to vector<16x8xf32>
    %172 = vector.extract_strided_slice %169 {offsets = [0, 16], sizes = [16, 8], strides = [1, 1]} : vector<16x96xf32> to vector<16x8xf32>
    %173 = vector.extract_strided_slice %169 {offsets = [0, 24], sizes = [16, 8], strides = [1, 1]} : vector<16x96xf32> to vector<16x8xf32>
    %174 = vector.shape_cast %170 : vector<16x8xf32> to vector<1x16x8xf32>
    %175 = vector.shape_cast %171 : vector<16x8xf32> to vector<1x16x8xf32>
    %176 = vector.shape_cast %172 : vector<16x8xf32> to vector<1x16x8xf32>
    %177 = vector.shape_cast %173 : vector<16x8xf32> to vector<1x16x8xf32>
    %178 = tpu.concatenate %174, %175, %176, %177 in 0 : vector<1x16x8xf32>, vector<1x16x8xf32>, vector<1x16x8xf32>, vector<1x16x8xf32> -> vector<4x16x8xf32>
    %cst_78 = arith.constant 0.353553385 : f32
    %179 = vector.broadcast %cst_78 : f32 to vector<4x16x8xf32>
    %180 = arith.mulf %178, %179 : vector<4x16x8xf32>
    %181 = vector.extract_strided_slice %169 {offsets = [0, 32], sizes = [16, 8], strides = [1, 1]} : vector<16x96xf32> to vector<16x8xf32>
    %182 = vector.extract_strided_slice %169 {offsets = [0, 40], sizes = [16, 8], strides = [1, 1]} : vector<16x96xf32> to vector<16x8xf32>
    %183 = vector.extract_strided_slice %169 {offsets = [0, 48], sizes = [16, 8], strides = [1, 1]} : vector<16x96xf32> to vector<16x8xf32>
    %184 = vector.extract_strided_slice %169 {offsets = [0, 56], sizes = [16, 8], strides = [1, 1]} : vector<16x96xf32> to vector<16x8xf32>
    %185 = vector.shape_cast %181 : vector<16x8xf32> to vector<1x16x8xf32>
    %186 = vector.shape_cast %182 : vector<16x8xf32> to vector<1x16x8xf32>
    %187 = vector.shape_cast %183 : vector<16x8xf32> to vector<1x16x8xf32>
    %188 = vector.shape_cast %184 : vector<16x8xf32> to vector<1x16x8xf32>
    %189 = tpu.concatenate %185, %186, %187, %188 in 0 : vector<1x16x8xf32>, vector<1x16x8xf32>, vector<1x16x8xf32>, vector<1x16x8xf32> -> vector<4x16x8xf32>
    %190 = vector.extract_strided_slice %169 {offsets = [0, 64], sizes = [16, 8], strides = [1, 1]} : vector<16x96xf32> to vector<16x8xf32>
    %191 = vector.extract_strided_slice %169 {offsets = [0, 72], sizes = [16, 8], strides = [1, 1]} : vector<16x96xf32> to vector<16x8xf32>
    %192 = vector.extract_strided_slice %169 {offsets = [0, 80], sizes = [16, 8], strides = [1, 1]} : vector<16x96xf32> to vector<16x8xf32>
    %193 = vector.extract_strided_slice %169 {offsets = [0, 88], sizes = [16, 8], strides = [1, 1]} : vector<16x96xf32> to vector<16x8xf32>
    %194 = vector.shape_cast %190 : vector<16x8xf32> to vector<1x16x8xf32>
    %195 = vector.shape_cast %191 : vector<16x8xf32> to vector<1x16x8xf32>
    %196 = vector.shape_cast %192 : vector<16x8xf32> to vector<1x16x8xf32>
    %197 = vector.shape_cast %193 : vector<16x8xf32> to vector<1x16x8xf32>
    %198 = tpu.concatenate %194, %195, %196, %197 in 0 : vector<1x16x8xf32>, vector<1x16x8xf32>, vector<1x16x8xf32>, vector<1x16x8xf32> -> vector<4x16x8xf32>
    "tpu.trace_start"() <{level = 10 : i32, message = "hqd,hkd->hqk"}> : () -> ()
    %cst_79 = arith.constant dense<0.000000e+00> : vector<4x16x16xf32>
    %199 = tpu.matmul %180, %189, %cst_79 {dimension_numbers = #tpu.dot_dimension_numbers<[2], [2], [1], [1], [0, 0, 0, 1, 1, 1], [0], [0]>} : vector<4x16x8xf32>, vector<4x16x8xf32>, vector<4x16x16xf32> -> vector<4x16x16xf32>
    "tpu.trace_stop"() : () -> ()
    %200 = vector.shape_cast %1 : vector<16x16xf32> to vector<1x16x16xf32>
    %201 = vector.broadcast %200 : vector<1x16x16xf32> to vector<4x16x16xf32>
    %202 = arith.addf %199, %201 : vector<4x16x16xf32>
    %cst_80 = arith.constant dense<0xFF800000> : vector<4x16xf32>
    %203 = vector.multi_reduction <maximumf>, %202, %cst_80 [2] : vector<4x16x16xf32> to vector<4x16xf32>
    %204 = vector.shape_cast %203 : vector<4x16xf32> to vector<4x16x1xf32>
    %205 = vector.broadcast %204 : vector<4x16x1xf32> to vector<4x16x16xf32>
    %206 = arith.subf %202, %205 : vector<4x16x16xf32>
    %207 = math.exp %206 : vector<4x16x16xf32>
    %cst_81 = arith.constant dense<0.000000e+00> : vector<4x16xf32>
    %208 = vector.multi_reduction <add>, %207, %cst_81 [2] : vector<4x16x16xf32> to vector<4x16xf32>
    %209 = vector.shape_cast %208 : vector<4x16xf32> to vector<4x16x1xf32>
    %210 = tpu.reciprocal %209 {approx = true} : vector<4x16x1xf32> -> vector<4x16x1xf32>
    %211 = vector.broadcast %210 : vector<4x16x1xf32> to vector<4x16x16xf32>
    %212 = arith.mulf %207, %211 : vector<4x16x16xf32>
    "tpu.trace_start"() <{level = 10 : i32, message = "hqk,hkd->hqd"}> : () -> ()
    %cst_82 = arith.constant dense<0.000000e+00> : vector<4x16x8xf32>
    %213 = tpu.matmul %212, %198, %cst_82 {dimension_numbers = #tpu.dot_dimension_numbers<[2], [1], [1], [2], [0, 0, 0, 1, 1, 2], [0], [0]>} : vector<4x16x16xf32>, vector<4x16x8xf32>, vector<4x16x8xf32> -> vector<4x16x8xf32>
    "tpu.trace_stop"() : () -> ()
    %c1_83 = arith.constant 1 : index
    %c0_84 = arith.constant 0 : index
    %c0_85 = arith.constant 0 : index
    %c0_86 = arith.constant 0 : index
    %214 = vector.load %arg8[%c1_83, %c0_84, %c0_85, %c0_86] : memref<2x4x8x32xf32, #tpu.memory_space<vmem>>, vector<1x4x8x32xf32>
    %215 = vector.shape_cast %214 : vector<1x4x8x32xf32> to vector<4x8x32xf32>
    "tpu.trace_start"() <{level = 10 : i32, message = "hnd,hdf->hnf"}> : () -> ()
    %cst_87 = arith.constant dense<0.000000e+00> : vector<4x16x32xf32>
    %216 = tpu.matmul %213, %215, %cst_87 {dimension_numbers = #tpu.dot_dimension_numbers<[2], [1], [1], [2], [0, 0, 0, 1, 1, 2], [0], [0]>} : vector<4x16x8xf32>, vector<4x8x32xf32>, vector<4x16x32xf32> -> vector<4x16x32xf32>
    "tpu.trace_stop"() : () -> ()
    %cst_88 = arith.constant dense<0.000000e+00> : vector<16x32xf32>
    %217 = vector.multi_reduction <add>, %216, %cst_88 [0] : vector<4x16x32xf32> to vector<16x32xf32>
    %218 = arith.addf %136, %217 : vector<16x32xf32>
    %c1_89 = arith.constant 1 : index
    %c0_90 = arith.constant 0 : index
    %c0_91 = arith.constant 0 : index
    %219 = vector.load %arg9[%c1_89, %c0_90, %c0_91] : memref<2x1x32xf32, #tpu.memory_space<vmem>>, vector<1x1x32xf32>
    %220 = vector.shape_cast %219 : vector<1x1x32xf32> to vector<1x32xf32>
    %221 = vector.broadcast %220 : vector<1x32xf32> to vector<16x32xf32>
    %222 = arith.addf %218, %221 : vector<16x32xf32>
    %c1_92 = arith.constant 1 : index
    %c0_93 = arith.constant 0 : index
    %c0_94 = arith.constant 0 : index
    %223 = vector.load %arg10[%c1_92, %c0_93, %c0_94] : memref<2x1x32xf32, #tpu.memory_space<vmem>>, vector<1x1x32xf32>
    %224 = vector.shape_cast %223 : vector<1x1x32xf32> to vector<1x32xf32>
    %c1_95 = arith.constant 1 : index
    %c0_96 = arith.constant 0 : index
    %c0_97 = arith.constant 0 : index
    %225 = vector.load %arg11[%c1_95, %c0_96, %c0_97] : memref<2x1x32xf32, #tpu.memory_space<vmem>>, vector<1x1x32xf32>
    %226 = vector.shape_cast %225 : vector<1x1x32xf32> to vector<1x32xf32>
    %cst_98 = arith.constant dense<0.000000e+00> : vector<16xf32>
    %227 = vector.multi_reduction <add>, %222, %cst_98 [1] : vector<16x32xf32> to vector<16xf32>
    %228 = vector.shape_cast %227 : vector<16xf32> to vector<16x1xf32>
    %cst_99 = arith.constant 3.200000e+01 : f32
    %229 = vector.broadcast %cst_99 : f32 to vector<16x1xf32>
    %230 = arith.divf %228, %229 : vector<16x1xf32>
    %231 = vector.broadcast %230 : vector<16x1xf32> to vector<16x32xf32>
    %232 = arith.subf %222, %231 : vector<16x32xf32>
    %233 = arith.mulf %232, %232 : vector<16x32xf32>
    %cst_100 = arith.constant dense<0.000000e+00> : vector<16xf32>
    %234 = vector.multi_reduction <add>, %233, %cst_100 [1] : vector<16x32xf32> to vector<16xf32>
    %235 = vector.shape_cast %234 : vector<16xf32> to vector<16x1xf32>
    %cst_101 = arith.constant 3.200000e+01 : f32
    %236 = vector.broadcast %cst_101 : f32 to vector<16x1xf32>
    %237 = arith.divf %235, %236 : vector<16x1xf32>
    %238 = vector.broadcast %230 : vector<16x1xf32> to vector<16x32xf32>
    %239 = arith.subf %222, %238 : vector<16x32xf32>
    %cst_102 = arith.constant 9.99999974E-6 : f32
    %240 = vector.broadcast %cst_102 : f32 to vector<16x1xf32>
    %241 = arith.addf %237, %240 : vector<16x1xf32>
    %242 = math.rsqrt %241 : vector<16x1xf32>
    %243 = vector.broadcast %242 : vector<16x1xf32> to vector<16x32xf32>
    %244 = arith.mulf %239, %243 : vector<16x32xf32>
    %245 = vector.broadcast %224 : vector<1x32xf32> to vector<16x32xf32>
    %246 = arith.mulf %244, %245 : vector<16x32xf32>
    %247 = vector.broadcast %226 : vector<1x32xf32> to vector<16x32xf32>
    %248 = arith.addf %246, %247 : vector<16x32xf32>
    %c1_103 = arith.constant 1 : index
    %c0_104 = arith.constant 0 : index
    %c0_105 = arith.constant 0 : index
    %249 = vector.load %arg12[%c1_103, %c0_104, %c0_105] : memref<2x32x128xf32, #tpu.memory_space<vmem>>, vector<1x32x128xf32>
    %250 = vector.shape_cast %249 : vector<1x32x128xf32> to vector<32x128xf32>
    %cst_106 = arith.constant dense<0.000000e+00> : vector<16x128xf32>
    %251 = tpu.matmul %248, %250, %cst_106 {dimension_numbers = #tpu.dot_dimension_numbers<[1], [0], [0], [1], [0, 0, 1, 1], [], []>} : vector<16x32xf32>, vector<32x128xf32>, vector<16x128xf32> -> vector<16x128xf32>
    %c1_107 = arith.constant 1 : index
    %c0_108 = arith.constant 0 : index
    %c0_109 = arith.constant 0 : index
    %252 = vector.load %arg13[%c1_107, %c0_108, %c0_109] : memref<2x1x128xf32, #tpu.memory_space<vmem>>, vector<1x1x128xf32>
    %253 = vector.shape_cast %252 : vector<1x1x128xf32> to vector<1x128xf32>
    %254 = vector.broadcast %253 : vector<1x128xf32> to vector<16x128xf32>
    %255 = arith.addf %251, %254 : vector<16x128xf32>
    %cst_110 = arith.constant 1.702000e+00 : f32
    %256 = vector.broadcast %cst_110 : f32 to vector<16x128xf32>
    %257 = arith.mulf %256, %255 : vector<16x128xf32>
    %258 = arith.negf %257 : vector<16x128xf32>
    %259 = math.exp %258 : vector<16x128xf32>
    %cst_111 = arith.constant 1.000000e+00 : f32
    %260 = vector.broadcast %cst_111 : f32 to vector<16x128xf32>
    %261 = arith.addf %260, %259 : vector<16x128xf32>
    %262 = arith.divf %260, %261 : vector<16x128xf32>
    %263 = arith.mulf %255, %262 : vector<16x128xf32>
    %c1_112 = arith.constant 1 : index
    %c0_113 = arith.constant 0 : index
    %c0_114 = arith.constant 0 : index
    %264 = vector.load %arg14[%c1_112, %c0_113, %c0_114] : memref<2x128x32xf32, #tpu.memory_space<vmem>>, vector<1x128x32xf32>
    %265 = vector.shape_cast %264 : vector<1x128x32xf32> to vector<128x32xf32>
    %cst_115 = arith.constant dense<0.000000e+00> : vector<16x32xf32>
    %266 = tpu.matmul %263, %265, %cst_115 {dimension_numbers = #tpu.dot_dimension_numbers<[1], [0], [0], [1], [0, 0, 1, 1], [], []>} : vector<16x128xf32>, vector<128x32xf32>, vector<16x32xf32> -> vector<16x32xf32>
    %267 = arith.addf %222, %266 : vector<16x32xf32>
    %c1_116 = arith.constant 1 : index
    %c0_117 = arith.constant 0 : index
    %c0_118 = arith.constant 0 : index
    %268 = vector.load %arg15[%c1_116, %c0_117, %c0_118] : memref<2x1x32xf32, #tpu.memory_space<vmem>>, vector<1x1x32xf32>
    %269 = vector.shape_cast %268 : vector<1x1x32xf32> to vector<1x32xf32>
    %270 = vector.broadcast %269 : vector<1x32xf32> to vector<16x32xf32>
    %271 = arith.addf %267, %270 : vector<16x32xf32>
    %c0_119 = arith.constant 0 : index
    %c0_120 = arith.constant 0 : index
    %272 = vector.load %arg20[%c0_119, %c0_120] : memref<16x32xf32, #tpu.memory_space<vmem>>, vector<16x32xf32>
    tpu.vector_store %arg20[%c0_119, %c0_120], %271 {strides = array<i32>} : memref<16x32xf32, #tpu.memory_space<vmem>>, vector<16x32xf32>,
    %c0_121 = arith.constant 0 : index
    %273 = memref.load %arg1[%c0_121] : memref<2xi32, #tpu.memory_space<smem>>
    %c0_i32 = arith.constant 0 : i32
    %274 = arith.addi %c0_i32, %273 : i32
    %275 = arith.index_cast %274 : i32 to index
    %c0_122 = arith.constant 0 : index
    %276 = vector.load %arg20[%275, %c0_122] : memref<16x32xf32, #tpu.memory_space<vmem>>, vector<1x32xf32>
    %c1_123 = arith.constant 1 : index
    %277 = memref.load %arg1[%c1_123] : memref<2xi32, #tpu.memory_space<smem>>
    %c8_i32 = arith.constant 8 : i32
    %278 = arith.addi %c8_i32, %277 : i32
    %279 = arith.index_cast %278 : i32 to index
    %c0_124 = arith.constant 0 : index
    %280 = vector.load %arg20[%279, %c0_124] : memref<16x32xf32, #tpu.memory_space<vmem>>, vector<1x32xf32>
    %281 = tpu.concatenate %276, %280 in 0 : vector<1x32xf32>, vector<1x32xf32> -> vector<2x32xf32>
    %c0_125 = arith.constant 0 : index
    %c0_126 = arith.constant 0 : index
    %282 = vector.load %arg16[%c0_125, %c0_126] : memref<1x32xf32, #tpu.memory_space<vmem>>, vector<1x32xf32>
    %c0_127 = arith.constant 0 : index
    %c0_128 = arith.constant 0 : index
    %283 = vector.load %arg17[%c0_127, %c0_128] : memref<1x32xf32, #tpu.memory_space<vmem>>, vector<1x32xf32>
    %cst_129 = arith.constant dense<0.000000e+00> : vector<2xf32>
    %284 = vector.multi_reduction <add>, %281, %cst_129 [1] : vector<2x32xf32> to vector<2xf32>
    %285 = vector.shape_cast %284 : vector<2xf32> to vector<2x1xf32>
    %cst_130 = arith.constant 3.200000e+01 : f32
    %286 = vector.broadcast %cst_130 : f32 to vector<2x1xf32>
    %287 = arith.divf %285, %286 : vector<2x1xf32>
    %288 = vector.broadcast %287 : vector<2x1xf32> to vector<2x32xf32>
    %289 = arith.subf %281, %288 : vector<2x32xf32>
    %290 = arith.mulf %289, %289 : vector<2x32xf32>
    %cst_131 = arith.constant dense<0.000000e+00> : vector<2xf32>
    %291 = vector.multi_reduction <add>, %290, %cst_131 [1] : vector<2x32xf32> to vector<2xf32>
    %292 = vector.shape_cast %291 : vector<2xf32> to vector<2x1xf32>
    %cst_132 = arith.constant 3.200000e+01 : f32
    %293 = vector.broadcast %cst_132 : f32 to vector<2x1xf32>
    %294 = arith.divf %292, %293 : vector<2x1xf32>
    %295 = vector.broadcast %287 : vector<2x1xf32> to vector<2x32xf32>
    %296 = arith.subf %281, %295 : vector<2x32xf32>
    %cst_133 = arith.constant 9.99999974E-6 : f32
    %297 = vector.broadcast %cst_133 : f32 to vector<2x1xf32>
    %298 = arith.addf %294, %297 : vector<2x1xf32>
    %299 = math.rsqrt %298 : vector<2x1xf32>
    %300 = vector.broadcast %299 : vector<2x1xf32> to vector<2x32xf32>
    %301 = arith.mulf %296, %300 : vector<2x32xf32>
    %302 = vector.broadcast %282 : vector<1x32xf32> to vector<2x32xf32>
    %303 = arith.mulf %301, %302 : vector<2x32xf32>
    %304 = vector.broadcast %283 : vector<1x32xf32> to vector<2x32xf32>
    %305 = arith.addf %303, %304 : vector<2x32xf32>
    %c0_134 = arith.constant 0 : index
    %c0_135 = arith.constant 0 : index
    %306 = vector.load %arg18[%c0_134, %c0_135] : memref<32x32xf32, #tpu.memory_space<vmem>>, vector<32x32xf32>
    %cst_136 = arith.constant dense<0.000000e+00> : vector<2x32xf32>
    %307 = tpu.matmul %305, %306, %cst_136 {dimension_numbers = #tpu.dot_dimension_numbers<[1], [0], [0], [1], [0, 0, 1, 1], [], []>} : vector<2x32xf32>, vector<32x32xf32>, vector<2x32xf32> -> vector<2x32xf32>
    %c0_137 = arith.constant 0 : index
    %c0_138 = arith.constant 0 : index
    %308 = vector.load %arg19[%c0_137, %c0_138] : memref<2x32xf32, #tpu.memory_space<vmem>>, vector<2x32xf32>
    tpu.vector_store %arg19[%c0_137, %c0_138], %307 {strides = array<i32>} : memref<2x32xf32, #tpu.memory_space<vmem>>, vector<2x32xf32>,
    return
  }
  func.func @transform_0(%arg0: i32, %arg1: memref<2xi32, #tpu.memory_space<smem>>) -> (i32, i32) {
    %c0_i32 = arith.constant 0 : i32
    %c0_i32_0 = arith.constant 0 : i32
    %c0_i32_1 = arith.constant 0 : i32
    return %c0_i32, %c0_i32_0 : i32, i32
  }
  func.func @transform_1(%arg0: i32, %arg1: memref<2xi32, #tpu.memory_space<smem>>) -> (i32, i32) {
    %c0_i32 = arith.constant 0 : i32
    %c0_i32_0 = arith.constant 0 : i32
    %c0_i32_1 = arith.constant 0 : i32
    return %c0_i32, %c0_i32_0 : i32, i32
  }
  func.func @transform_2(%arg0: i32, %arg1: memref<2xi32, #tpu.memory_space<smem>>) -> (i32, i32, i32) {
    %c0_i32 = arith.constant 0 : i32
    %c0_i32_0 = arith.constant 0 : i32
    %c0_i32_1 = arith.constant 0 : i32
    %c0_i32_2 = arith.constant 0 : i32
    return %c0_i32, %c0_i32_0, %c0_i32_1 : i32, i32, i32
  }
  func.func @transform_3(%arg0: i32, %arg1: memref<2xi32, #tpu.memory_space<smem>>) -> (i32, i32, i32) {
    %c0_i32 = arith.constant 0 : i32
    %c0_i32_0 = arith.constant 0 : i32
    %c0_i32_1 = arith.constant 0 : i32
    %c0_i32_2 = arith.constant 0 : i32
    return %c0_i32, %c0_i32_0, %c0_i32_1 : i32, i32, i32
  }
  func.func @transform_4(%arg0: i32, %arg1: memref<2xi32, #tpu.memory_space<smem>>) -> (i32, i32, i32) {
    %c0_i32 = arith.constant 0 : i32
    %c0_i32_0 = arith.constant 0 : i32
    %c0_i32_1 = arith.constant 0 : i32
    %c0_i32_2 = arith.constant 0 : i32
    return %c0_i32, %c0_i32_0, %c0_i32_1 : i32, i32, i32
  }
  func.func @transform_5(%arg0: i32, %arg1: memref<2xi32, #tpu.memory_space<smem>>) -> (i32, i32, i32) {
    %c0_i32 = arith.constant 0 : i32
    %c0_i32_0 = arith.constant 0 : i32
    %c0_i32_1 = arith.constant 0 : i32
    %c0_i32_2 = arith.constant 0 : i32
    return %c0_i32, %c0_i32_0, %c0_i32_1 : i32, i32, i32
  }
  func.func @transform_6(%arg0: i32, %arg1: memref<2xi32, #tpu.memory_space<smem>>) -> (i32, i32, i32, i32) {
    %c0_i32 = arith.constant 0 : i32
    %c0_i32_0 = arith.constant 0 : i32
    %c0_i32_1 = arith.constant 0 : i32
    %c0_i32_2 = arith.constant 0 : i32
    %c0_i32_3 = arith.constant 0 : i32
    return %c0_i32, %c0_i32_0, %c0_i32_1, %c0_i32_2 : i32, i32, i32, i32
  }
  func.func @transform_7(%arg0: i32, %arg1: memref<2xi32, #tpu.memory_space<smem>>) -> (i32, i32, i32) {
    %c0_i32 = arith.constant 0 : i32
    %c0_i32_0 = arith.constant 0 : i32
    %c0_i32_1 = arith.constant 0 : i32
    %c0_i32_2 = arith.constant 0 : i32
    return %c0_i32, %c0_i32_0, %c0_i32_1 : i32, i32, i32
  }
  func.func @transform_8(%arg0: i32, %arg1: memref<2xi32, #tpu.memory_space<smem>>) -> (i32, i32, i32) {
    %c0_i32 = arith.constant 0 : i32
    %c0_i32_0 = arith.constant 0 : i32
    %c0_i32_1 = arith.constant 0 : i32
    %c0_i32_2 = arith.constant 0 : i32
    return %c0_i32, %c0_i32_0, %c0_i32_1 : i32, i32, i32
  }
  func.func @transform_9(%arg0: i32, %arg1: memref<2xi32, #tpu.memory_space<smem>>) -> (i32, i32, i32) {
    %c0_i32 = arith.constant 0 : i32
    %c0_i32_0 = arith.constant 0 : i32
    %c0_i32_1 = arith.constant 0 : i32
    %c0_i32_2 = arith.constant 0 : i32
    return %c0_i32, %c0_i32_0, %c0_i32_1 : i32, i32, i32
  }
  func.func @transform_10(%arg0: i32, %arg1: memref<2xi32, #tpu.memory_space<smem>>) -> (i32, i32, i32) {
    %c0_i32 = arith.constant 0 : i32
    %c0_i32_0 = arith.constant 0 : i32
    %c0_i32_1 = arith.constant 0 : i32
    %c0_i32_2 = arith.constant 0 : i32
    return %c0_i32, %c0_i32_0, %c0_i32_1 : i32, i32, i32
  }
  func.func @transform_11(%arg0: i32, %arg1: memref<2xi32, #tpu.memory_space<smem>>) -> (i32, i32, i32) {
    %c0_i32 = arith.constant 0 : i32
    %c0_i32_0 = arith.constant 0 : i32
    %c0_i32_1 = arith.constant 0 : i32
    %c0_i32_2 = arith.constant 0 : i32
    return %c0_i32, %c0_i32_0, %c0_i32_1 : i32, i32, i32
  }
  func.func @transform_12(%arg0: i32, %arg1: memref<2xi32, #tpu.memory_space<smem>>) -> (i32, i32, i32) {
    %c0_i32 = arith.constant 0 : i32
    %c0_i32_0 = arith.constant 0 : i32
    %c0_i32_1 = arith.constant 0 : i32
    %c0_i32_2 = arith.constant 0 : i32
    return %c0_i32, %c0_i32_0, %c0_i32_1 : i32, i32, i32
  }
  func.func @transform_13(%arg0: i32, %arg1: memref<2xi32, #tpu.memory_space<smem>>) -> (i32, i32, i32) {
    %c0_i32 = arith.constant 0 : i32
    %c0_i32_0 = arith.constant 0 : i32
    %c0_i32_1 = arith.constant 0 : i32
    %c0_i32_2 = arith.constant 0 : i32
    return %c0_i32, %c0_i32_0, %c0_i32_1 : i32, i32, i32
  }
  func.func @transform_14(%arg0: i32, %arg1: memref<2xi32, #tpu.memory_space<smem>>) -> (i32, i32) {
    %c0_i32 = arith.constant 0 : i32
    %c0_i32_0 = arith.constant 0 : i32
    %c0_i32_1 = arith.constant 0 : i32
    return %c0_i32, %c0_i32_0 : i32, i32
  }
  func.func @transform_15(%arg0: i32, %arg1: memref<2xi32, #tpu.memory_space<smem>>) -> (i32, i32) {
    %c0_i32 = arith.constant 0 : i32
    %c0_i32_0 = arith.constant 0 : i32
    %c0_i32_1 = arith.constant 0 : i32
    return %c0_i32, %c0_i32_0 : i32, i32
  }
  func.func @transform_16(%arg0: i32, %arg1: memref<2xi32, #tpu.memory_space<smem>>) -> (i32, i32) {
    %c0_i32 = arith.constant 0 : i32
    %c0_i32_0 = arith.constant 0 : i32
    %c0_i32_1 = arith.constant 0 : i32
    return %c0_i32, %c0_i32_0 : i32, i32
  }
  func.func @transform_17(%arg0: i32, %arg1: memref<2xi32, #tpu.memory_space<smem>>) -> (i32, i32) {
    %c0_i32 = arith.constant 0 : i32
    %c0_i32_0 = arith.constant 0 : i32
    %c0_i32_1 = arith.constant 0 : i32
    return %c0_i32, %c0_i32_0 : i32, i32
  }
}

</mosaic_0001>

<llo_original>
// kernel: tpu_custom_call.1
$region0: #{tpu_custom_call.1}
  #allocation0 [shape = 'u32[]', space=smem, size = 0x4, offset = 0x4, fixed_abs, tag = 'smem constant byte address 0x4 - core index']
  #allocation1 [shape = 'u32[144,128]{1,0:T(1,128)}', space=vmem, size = 0x12000, scoped, tag = 'internal scratch']
  #allocation2 [shape = 'f32[16,32]{1,0:T(8,128)}', space=vmem, size = 0x2000, scoped, tag = 'scratch operand']
  #allocation3 [shape = 's32[1]{0}', space=sflag, size = 0x4, scoped, tag = 'scoped memory for tpu_custom_call.1']
  #allocation4 [shape = 'u8[512]{0}', space=smem, size = 0x200, scoped, tag = 'prefetched SMEM operand 0']
  %s0 = inlined_call_operand.vmem [shape: s32[2], index: 0, kind: input, shape index: {}]
  %s1 = inlined_call_operand.vmem [shape: f32[16,32], index: 1, kind: input, shape index: {}]
  %s2 = inlined_call_operand.vmem [shape: f32[16,16], index: 2, kind: input, shape index: {}]
  %s3 = inlined_call_operand.vmem [shape: f32[2,1,32], index: 3, kind: input, shape index: {}]
  %s4 = inlined_call_operand.vmem [shape: f32[2,1,32], index: 4, kind: input, shape index: {}]
  %s5 = inlined_call_operand.vmem [shape: f32[2,32,96], index: 5, kind: input, shape index: {}]
  %s6 = inlined_call_operand.vmem [shape: f32[2,1,96], index: 6, kind: input, shape index: {}]
  %s7 = inlined_call_operand.vmem [shape: f32[2,4,8,32], index: 7, kind: input, shape index: {}]
  %s8 = inlined_call_operand.vmem [shape: f32[2,1,32], index: 8, kind: input, shape index: {}]
  %s9 = inlined_call_operand.vmem [shape: f32[2,1,32], index: 9, kind: input, shape index: {}]
  %s10 = inlined_call_operand.vmem [shape: f32[2,1,32], index: 10, kind: input, shape index: {}]
  %s11 = inlined_call_operand.vmem [shape: f32[2,32,128], index: 11, kind: input, shape index: {}]
  %s12 = inlined_call_operand.vmem [shape: f32[2,1,128], index: 12, kind: input, shape index: {}]
  %s13 = inlined_call_operand.vmem [shape: f32[2,128,32], index: 13, kind: input, shape index: {}]
  %s14 = inlined_call_operand.vmem [shape: f32[2,1,32], index: 14, kind: input, shape index: {}]
  %s15 = inlined_call_operand.vmem [shape: f32[1,32], index: 15, kind: input, shape index: {}]
  %s16 = inlined_call_operand.vmem [shape: f32[1,32], index: 16, kind: input, shape index: {}]
  %s17 = inlined_call_operand.vmem [shape: f32[32,32], index: 17, kind: input, shape index: {}]
  %s18 = inlined_call_operand.hbm [shape: f32[2,32], index: 18, kind: output, shape index: {}]
  %s19 = sld [smem:[#allocation0]]
  $region78: #{tpu_custom_call.1} parent=0
    _
  %s21 = ssub.s32 1, %s19
  %s22 = scalar_select 0, %s21, %s19
  %s23 = sshll.u32 %s0, 4
  %s24 = int_to_ptr.vmem [resolvable:$true] %s23
  %26 = dma.vmem_to_smem %s24, 16, [#allocation4], [#allocation3]
  %27 = dma.done [#allocation3], 16
  %28 = sfence
  $region1: #{tpu_custom_call.1} parent=0
    #allocation5 [shape = 'u8[1024]{0}', space=vmem, size = 0x400, scoped, tag = 'output window, operand 0, single buffered']
    #allocation6 [shape = 's32[1]{0}', space=sflag, size = 0x4, scoped, tag = 'scoped memory for tpu_custom_call.1']
    %29 = vsyncpa [#allocation6], 0
    // Predicated region
    $region2: #{tpu_custom_call.1} parent=1 // pred_check
      _
    $region3: #{tpu_custom_call.1} parent=1 // pred_check_branch
      %31 = sbr.rel (0) target = $region5
    $region4: #{tpu_custom_call.1} parent=1 // pred_region
      _
    $region5: #{tpu_custom_call.1} parent=1 // pred_fallthru
      _
    // Predicated region
    $region6: #{tpu_custom_call.1} parent=1 // pred_check
      _
    $region7: #{tpu_custom_call.1} parent=1 // pred_check_branch
      %33 = sbr.rel (0) target = $region9
    $region8: #{tpu_custom_call.1} parent=1 // pred_region
      _
    $region9: #{tpu_custom_call.1} parent=1 // pred_fallthru
      _
    // Predicated region
    $region10: #{tpu_custom_call.1} parent=1 // pred_check
      _
    $region11: #{tpu_custom_call.1} parent=1 // pred_check_branch
      %35 = sbr.rel (0) target = $region13
    $region12: #{tpu_custom_call.1} parent=1 // pred_region
      _
    $region13: #{tpu_custom_call.1} parent=1 // pred_fallthru
      _
    // Predicated region
    $region14: #{tpu_custom_call.1} parent=1 // pred_check
      _
    $region15: #{tpu_custom_call.1} parent=1 // pred_check_branch
      %37 = sbr.rel (0) target = $region17
    $region16: #{tpu_custom_call.1} parent=1 // pred_region
      _
    $region17: #{tpu_custom_call.1} parent=1 // pred_fallthru
      _
    // Predicated region
    $region18: #{tpu_custom_call.1} parent=1 // pred_check
      _
    $region19: #{tpu_custom_call.1} parent=1 // pred_check_branch
      %39 = sbr.rel (0) target = $region21
    $region20: #{tpu_custom_call.1} parent=1 // pred_region
      _
    $region21: #{tpu_custom_call.1} parent=1 // pred_fallthru
      _
    // Predicated region
    $region22: #{tpu_custom_call.1} parent=1 // pred_check
      _
    $region23: #{tpu_custom_call.1} parent=1 // pred_check_branch
      %41 = sbr.rel (0) target = $region25
    $region24: #{tpu_custom_call.1} parent=1 // pred_region
      _
    $region25: #{tpu_custom_call.1} parent=1 // pred_fallthru
      _
    // Predicated region
    $region26: #{tpu_custom_call.1} parent=1 // pred_check
      _
    $region27: #{tpu_custom_call.1} parent=1 // pred_check_branch
      %43 = sbr.rel (0) target = $region29
    $region28: #{tpu_custom_call.1} parent=1 // pred_region
      _
    $region29: #{tpu_custom_call.1} parent=1 // pred_fallthru
      _
    // Predicated region
    $region30: #{tpu_custom_call.1} parent=1 // pred_check
      _
    $region31: #{tpu_custom_call.1} parent=1 // pred_check_branch
      %45 = sbr.rel (0) target = $region33
    $region32: #{tpu_custom_call.1} parent=1 // pred_region
      _
    $region33: #{tpu_custom_call.1} parent=1 // pred_fallthru
      _
    // Predicated region
    $region34: #{tpu_custom_call.1} parent=1 // pred_check
      _
    $region35: #{tpu_custom_call.1} parent=1 // pred_check_branch
      %47 = sbr.rel (0) target = $region37
    $region36: #{tpu_custom_call.1} parent=1 // pred_region
      _
    $region37: #{tpu_custom_call.1} parent=1 // pred_fallthru
      _
    // Predicated region
    $region38: #{tpu_custom_call.1} parent=1 // pred_check
      _
    $region39: #{tpu_custom_call.1} parent=1 // pred_check_branch
      %49 = sbr.rel (0) target = $region41
    $region40: #{tpu_custom_call.1} parent=1 // pred_region
      _
    $region41: #{tpu_custom_call.1} parent=1 // pred_fallthru
      _
    // Predicated region
    $region42: #{tpu_custom_call.1} parent=1 // pred_check
      _
    $region43: #{tpu_custom_call.1} parent=1 // pred_check_branch
      %51 = sbr.rel (0) target = $region45
    $region44: #{tpu_custom_call.1} parent=1 // pred_region
      _
    $region45: #{tpu_custom_call.1} parent=1 // pred_fallthru
      _
    // Predicated region
    $region46: #{tpu_custom_call.1} parent=1 // pred_check
      _
    $region47: #{tpu_custom_call.1} parent=1 // pred_check_branch
      %53 = sbr.rel (0) target = $region49
    $region48: #{tpu_custom_call.1} parent=1 // pred_region
      _
    $region49: #{tpu_custom_call.1} parent=1 // pred_fallthru
      _
    // Predicated region
    $region50: #{tpu_custom_call.1} parent=1 // pred_check
      _
    $region51: #{tpu_custom_call.1} parent=1 // pred_check_branch
      %55 = sbr.rel (0) target = $region53
    $region52: #{tpu_custom_call.1} parent=1 // pred_region
      _
    $region53: #{tpu_custom_call.1} parent=1 // pred_fallthru
      _
    // Predicated region
    $region54: #{tpu_custom_call.1} parent=1 // pred_check
      _
    $region55: #{tpu_custom_call.1} parent=1 // pred_check_branch
      %57 = sbr.rel (0) target = $region57
    $region56: #{tpu_custom_call.1} parent=1 // pred_region
      _
    $region57: #{tpu_custom_call.1} parent=1 // pred_fallthru
      _
    // Predicated region
    $region58: #{tpu_custom_call.1} parent=1 // pred_check
      _
    $region59: #{tpu_custom_call.1} parent=1 // pred_check_branch
      %59 = sbr.rel (0) target = $region61
    $region60: #{tpu_custom_call.1} parent=1 // pred_region
      _
    $region61: #{tpu_custom_call.1} parent=1 // pred_fallthru
      _
    // Predicated region
    $region62: #{tpu_custom_call.1} parent=1 // pred_check
      _
    $region63: #{tpu_custom_call.1} parent=1 // pred_check_branch
      %61 = sbr.rel (0) target = $region65
    $region64: #{tpu_custom_call.1} parent=1 // pred_region
      _
    $region65: #{tpu_custom_call.1} parent=1 // pred_fallthru
      _
    // Predicated region
    $region66: #{tpu_custom_call.1} parent=1 // pred_check
      _
    $region67: #{tpu_custom_call.1} parent=1 // pred_check_branch
      %63 = sbr.rel (0) target = $region69
    $region68: #{tpu_custom_call.1} parent=1 // pred_region
      _
    $region69: #{tpu_custom_call.1} parent=1 // pred_fallthru
      _
    %v64 = vld [vmem:[%s1] sm:$0xff]
    %v65 = vld [vmem:[%s1 + $0x8] sm:$0xff]
    %v66 = vld [vmem:[%s2] sm:$0xff]
    %v67 = vld [vmem:[%s2 + $0x8] sm:$0xff]
    %v68 = vld [vmem:[%s3] sm:$0x1]
    %v69 = vld [vmem:[%s4] sm:$0x1]
    %vm70 = vcmask 261120
    %v71 = vsel %vm70, %v64, 0.0
    %72 = vadd.xlane.f32.xlu0 %v71
    %v73 = vpop.xlane.xlu0 %72
    %v74 = vsel %vm70, %v65, 0.0
    %75 = vadd.xlane.f32.xlu0 %v74
    %v76 = vpop.xlane.xlu0 %75
    %v77 = vrcp.pop 32.0
    %v78 = vmul.f32 %v73, %v77
    %v79 = vmul.f32 %v76, %v77
    %v80 = vsub.f32 %v64, %v78
    %v81 = vsub.f32 %v65, %v79
    %v82 = vmul.f32 %v80, %v80
    %v83 = vmul.f32 %v81, %v81
    %v84 = vsel %vm70, %v82, 0.0
    %85 = vadd.xlane.f32.xlu0 %v84
    %v86 = vpop.xlane.xlu0 %85
    %v87 = vsel %vm70, %v83, 0.0
    %88 = vadd.xlane.f32.xlu0 %v87
    %v89 = vpop.xlane.xlu0 %88
    %v90 = vmul.f32 %v86, %v77
    %v91 = vmul.f32 %v89, %v77
    %v92 = vadd.f32 %v90, 1e-05
    %v93 = vadd.f32 %v91, 1e-05
    %v94 = vrsqrt.pop %v92
    %v95 = vrsqrt.pop %v93
    %v96 = vmul.f32 %v80, %v94
    %v97 = vmul.f32 %v81, %v95
    %v99 = vlaneseq
    %v100 = vshrl.u32 %v99, 7
    %v101 = vsub.s32 0, %v100
    %v102 = vrot.slane %v68, %v101
    %v104 = vmul.f32 %v96, %v102
    %v105 = vmul.f32 %v97, %v102
    %v107 = vlaneseq
    %v108 = vshrl.u32 %v107, 7
    %v109 = vsub.s32 0, %v108
    %v110 = vrot.slane %v69, %v109
    %v112 = vadd.f32 %v104, %v110
    %v113 = vadd.f32 %v105, %v110
    %v114 = vld [vmem:[%s5] sm:$0xff]
    %v115 = vld [vmem:[%s5 + $0x8] sm:$0xff]
    %v116 = vld [vmem:[%s5 + $0x10] sm:$0xff]
    %v117 = vld [vmem:[%s5 + $0x18] sm:$0xff]
    %v118 = vld [vmem:[%s6] sm:$0x1]
    %v120 = vlaneseq
    %v121 = vshrl.u32 %v120, 7
    %v122 = vsub.s32 0, %v121
    %v123 = vrot.slane %v118, %v122
    %v126 = vsel %vm70, %v112, 0
    %v129 = vsel %vm70, %v113, 0
    %131 = vmatprep.subr.mxu0 0.0
    %132 = vmatpush1.msra.mxu0 %v114
    %133 = vmatprep.subr.mxu0 0.0
    %134 = vmatpush1.msra.mxu0 %v115
    %135 = vmatprep.subr.mxu0 0.0
    %136 = vmatpush1.msra.mxu0 %v116
    %137 = vmatprep.subr.mxu0 0.0
    %138 = vmatpush1.msra.mxu0 %v117
    %139 = vmatprep.subr.mxu0 0.0
    %140 = vmatpush1.msra.mxu0 0.0
    %141 = vmatprep.subr.mxu0 0.0
    %142 = vmatpush1.msra.mxu0 0.0
    %143 = vmatprep.subr.mxu0 0.0
    %144 = vmatpush1.msra.mxu0 0.0
    %145 = vmatprep.subr.mxu0 0.0
    %146 = vmatpush1.msra.mxu0 0.0
    %147 = vmatprep.subr.mxu0 0.0
    %148 = vmatpush1.msra.mxu0 0.0
    %149 = vmatprep.subr.mxu0 0.0
    %150 = vmatpush1.msra.mxu0 0.0
    %151 = vmatprep.subr.mxu0 0.0
    %152 = vmatpush1.msra.mxu0 0.0
    %153 = vmatprep.subr.mxu0 0.0
    %154 = vmatpush1.msra.mxu0 0.0
    %155 = vmatprep.subr.mxu0 0.0
    %156 = vmatpush1.msra.mxu0 0.0
    %157 = vmatprep.subr.mxu0 0.0
    %158 = vmatpush1.msra.mxu0 0.0
    %159 = vmatprep.subr.mxu0 0.0
    %160 = vmatpush1.msra.mxu0 0.0
    %161 = vmatprep.subr.mxu0 0.0
    %162 = vmatpush1.msra.mxu0 0.0
    %163 = vmatprep.subr.mxu0 0.0
    %164 = vmatpush1.msra.mxu0 0.0
    %165 = vmatprep.subr.mxu0 0.0
    %166 = vmatpush1.msra.mxu0 0.0
    %167 = vmatprep.subr.mxu0 0.0
    %168 = vmatpush1.msra.mxu0 0.0
    %169 = vmatprep.subr.mxu0 0.0
    %170 = vmatpush1.msra.mxu0 0.0
    %171 = vmatprep.subr.mxu0 0.0
    %172 = vmatpush1.msra.mxu0 0.0
    %173 = vmatprep.subr.mxu0 0.0
    %174 = vmatpush1.msra.mxu0 0.0
    %175 = vmatprep.subr.mxu0 0.0
    %176 = vmatpush1.msra.mxu0 0.0
    %177 = vmatprep.subr.mxu0 0.0
    %178 = vmatpush1.msra.mxu0 0.0
    %179 = vmatprep.subr.mxu0 0.0
    %180 = vmatpush1.msra.mxu0 0.0
    %181 = vmatprep.subr.mxu0 0.0
    %182 = vmatpush1.msra.mxu0 0.0
    %183 = vmatprep.subr.mxu0 0.0
    %184 = vmatpush1.msra.mxu0 0.0
    %185 = vmatprep.subr.mxu0 0.0
    %186 = vmatpush1.msra.mxu0 0.0
    %187 = vmatprep.subr.mxu0 0.0
    %188 = vmatpush1.msra.mxu0 0.0
    %189 = vmatprep.subr.mxu0 0.0
    %190 = vmatpush1.msra.mxu0 0.0
    %191 = vmatprep.subr.mxu0 0.0
    %192 = vmatpush1.msra.mxu0 0.0
    %193 = vmatprep.subr.mxu0 0.0
    %194 = vmatpush1.msra.mxu0 0.0
    %195 = vmatprep.mubr.f32.mxu0 0.0
    %196 = vmatmul.mubr.f32.gmra.mrb[0].mxu0 %v126
    %v197 = vpop.f32.mrb[0].mxu0
    %v198 = vadd.f32 %v123, %v197
    %v199 = vpop.f32.mrb[0].mxu0
    %200 = vmatprep.mubr.f32.mxu0 0.0
    %201 = vmatmul.mubr.f32.gmra.mrb[0].mxu0 %v129
    %v202 = vpop.f32.mrb[0].mxu0
    %v203 = vadd.f32 %v123, %v202
    %v204 = vpop.f32.mrb[0].mxu0
    %205 = vdwg.mxu0
    %208 = vrot.lane.b32.xlu0 %v198, 120
    %v209 = vpop.permute.xlu0 %208
    %210 = vrot.lane.b32.xlu0 %v203, 120
    %v211 = vpop.permute.xlu0 %210
    %214 = vrot.lane.b32.xlu0 %v198, 112
    %v215 = vpop.permute.xlu0 %214
    %216 = vrot.lane.b32.xlu0 %v203, 112
    %v217 = vpop.permute.xlu0 %216
    %220 = vrot.lane.b32.xlu0 %v198, 104
    %v221 = vpop.permute.xlu0 %220
    %222 = vrot.lane.b32.xlu0 %v203, 104
    %v223 = vpop.permute.xlu0 %222
    %v226 = vmul.f32 %v198, 0.35355338
    %v227 = vmul.f32 %v203, 0.35355338
    %v228 = vmul.f32 %v209, 0.35355338
    %v229 = vmul.f32 %v211, 0.35355338
    %v230 = vmul.f32 %v215, 0.35355338
    %v231 = vmul.f32 %v217, 0.35355338
    %v232 = vmul.f32 %v221, 0.35355338
    %v233 = vmul.f32 %v223, 0.35355338
    %234 = vrot.lane.b32.xlu0 %v198, 96
    %v235 = vpop.permute.xlu0 %234
    %236 = vrot.lane.b32.xlu0 %v203, 96
    %v237 = vpop.permute.xlu0 %236
    %vm238 = vcmask 64512
    %v240 = vsel %vm238, %v226, 0
    %v243 = vsel %vm238, %v227, 0
    %v245 = vsel %vm238, %v235, 0
    %v247 = vsel %vm238, %v237, 0
    %249 = vmatprep.subr.mxu0 0.0
    %250 = vmatpush1.xpose.msra.mxu0 %v245
    %251 = vmatprep.subr.mxu0 0.0
    %252 = vmatpush1.xpose.msra.mxu0 %v247
    %253 = vmatprep.subr.mxu0 0.0
    %254 = vmatpush1.xpose.msra.mxu0 0.0
    %255 = vmatprep.subr.mxu0 0.0
    %256 = vmatpush1.xpose.msra.mxu0 0.0
    %257 = vmatprep.subr.mxu0 0.0
    %258 = vmatpush1.xpose.msra.mxu0 0.0
    %259 = vmatprep.subr.mxu0 0.0
    %260 = vmatpush1.xpose.msra.mxu0 0.0
    %261 = vmatprep.subr.mxu0 0.0
    %262 = vmatpush1.xpose.msra.mxu0 0.0
    %263 = vmatprep.subr.mxu0 0.0
    %264 = vmatpush1.xpose.msra.mxu0 0.0
    %265 = vmatprep.subr.mxu0 0.0
    %266 = vmatpush1.xpose.msra.mxu0 0.0
    %267 = vmatprep.subr.mxu0 0.0
    %268 = vmatpush1.xpose.msra.mxu0 0.0
    %269 = vmatprep.subr.mxu0 0.0
    %270 = vmatpush1.xpose.msra.mxu0 0.0
    %271 = vmatprep.subr.mxu0 0.0
    %272 = vmatpush1.xpose.msra.mxu0 0.0
    %273 = vmatprep.subr.mxu0 0.0
    %274 = vmatpush1.xpose.msra.mxu0 0.0
    %275 = vmatprep.subr.mxu0 0.0
    %276 = vmatpush1.xpose.msra.mxu0 0.0
    %277 = vmatprep.subr.mxu0 0.0
    %278 = vmatpush1.xpose.msra.mxu0 0.0
    %279 = vmatprep.subr.mxu0 0.0
    %280 = vmatpush1.xpose.msra.mxu0 0.0
    %281 = vmatprep.subr.mxu0 0.0
    %282 = vmatpush1.xpose.msra.mxu0 0.0
    %283 = vmatprep.subr.mxu0 0.0
    %284 = vmatpush1.xpose.msra.mxu0 0.0
    %285 = vmatprep.subr.mxu0 0.0
    %286 = vmatpush1.xpose.msra.mxu0 0.0
    %287 = vmatprep.subr.mxu0 0.0
    %288 = vmatpush1.xpose.msra.mxu0 0.0
    %289 = vmatprep.subr.mxu0 0.0
    %290 = vmatpush1.xpose.msra.mxu0 0.0
    %291 = vmatprep.subr.mxu0 0.0
    %292 = vmatpush1.xpose.msra.mxu0 0.0
    %293 = vmatprep.subr.mxu0 0.0
    %294 = vmatpush1.xpose.msra.mxu0 0.0
    %295 = vmatprep.subr.mxu0 0.0
    %296 = vmatpush1.xpose.msra.mxu0 0.0
    %297 = vmatprep.subr.mxu0 0.0
    %298 = vmatpush1.xpose.msra.mxu0 0.0
    %299 = vmatprep.subr.mxu0 0.0
    %300 = vmatpush1.xpose.msra.mxu0 0.0
    %301 = vmatprep.subr.mxu0 0.0
    %302 = vmatpush1.xpose.msra.mxu0 0.0
    %303 = vmatprep.subr.mxu0 0.0
    %304 = vmatpush1.xpose.msra.mxu0 0.0
    %305 = vmatprep.subr.mxu0 0.0
    %306 = vmatpush1.xpose.msra.mxu0 0.0
    %307 = vmatprep.subr.mxu0 0.0
    %308 = vmatpush1.xpose.msra.mxu0 0.0
    %309 = vmatprep.subr.mxu0 0.0
    %310 = vmatpush1.xpose.msra.mxu0 0.0
    %311 = vmatprep.subr.mxu0 0.0
    %312 = vmatpush1.xpose.msra.mxu0 0.0
    %313 = vmatprep.mubr.f32.mxu0 0.0
    %314 = vmatmul.mubr.f32.gmra.mrb[0].mxu0 %v240
    %v315 = vpop.f32.mrb[0].mxu0
    %v316 = vadd.f32 %v66, %v315
    %v317 = vpop.f32.mrb[0].mxu0
    %318 = vmatprep.mubr.f32.mxu0 0.0
    %319 = vmatmul.mubr.f32.gmra.mrb[0].mxu0 %v243
    %v320 = vpop.f32.mrb[0].mxu0
    %v321 = vadd.f32 %v67, %v320
    %v322 = vpop.f32.mrb[0].mxu0
    %323 = vdwg.mxu0
    %324 = vrot.lane.b32.xlu0 %v209, 96
    %v325 = vpop.permute.xlu0 %324
    %326 = vrot.lane.b32.xlu0 %v211, 96
    %v327 = vpop.permute.xlu0 %326
    %v329 = vsel %vm238, %v228, 0
    %v332 = vsel %vm238, %v229, 0
    %v334 = vsel %vm238, %v325, 0
    %v336 = vsel %vm238, %v327, 0
    %338 = vmatprep.subr.mxu0 0.0
    %339 = vmatpush1.xpose.msra.mxu0 %v334
    %340 = vmatprep.subr.mxu0 0.0
    %341 = vmatpush1.xpose.msra.mxu0 %v336
    %342 = vmatprep.subr.mxu0 0.0
    %343 = vmatpush1.xpose.msra.mxu0 0.0
    %344 = vmatprep.subr.mxu0 0.0
    %345 = vmatpush1.xpose.msra.mxu0 0.0
    %346 = vmatprep.subr.mxu0 0.0
    %347 = vmatpush1.xpose.msra.mxu0 0.0
    %348 = vmatprep.subr.mxu0 0.0
    %349 = vmatpush1.xpose.msra.mxu0 0.0
    %350 = vmatprep.subr.mxu0 0.0
    %351 = vmatpush1.xpose.msra.mxu0 0.0
    %352 = vmatprep.subr.mxu0 0.0
    %353 = vmatpush1.xpose.msra.mxu0 0.0
    %354 = vmatprep.subr.mxu0 0.0
    %355 = vmatpush1.xpose.msra.mxu0 0.0
    %356 = vmatprep.subr.mxu0 0.0
    %357 = vmatpush1.xpose.msra.mxu0 0.0
    %358 = vmatprep.subr.mxu0 0.0
    %359 = vmatpush1.xpose.msra.mxu0 0.0
    %360 = vmatprep.subr.mxu0 0.0
    %361 = vmatpush1.xpose.msra.mxu0 0.0
    %362 = vmatprep.subr.mxu0 0.0
    %363 = vmatpush1.xpose.msra.mxu0 0.0
    %364 = vmatprep.subr.mxu0 0.0
    %365 = vmatpush1.xpose.msra.mxu0 0.0
    %366 = vmatprep.subr.mxu0 0.0
    %367 = vmatpush1.xpose.msra.mxu0 0.0
    %368 = vmatprep.subr.mxu0 0.0
    %369 = vmatpush1.xpose.msra.mxu0 0.0
    %370 = vmatprep.subr.mxu0 0.0
    %371 = vmatpush1.xpose.msra.mxu0 0.0
    %372 = vmatprep.subr.mxu0 0.0
    %373 = vmatpush1.xpose.msra.mxu0 0.0
    %374 = vmatprep.subr.mxu0 0.0
    %375 = vmatpush1.xpose.msra.mxu0 0.0
    %376 = vmatprep.subr.mxu0 0.0
    %377 = vmatpush1.xpose.msra.mxu0 0.0
    %378 = vmatprep.subr.mxu0 0.0
    %379 = vmatpush1.xpose.msra.mxu0 0.0
    %380 = vmatprep.subr.mxu0 0.0
    %381 = vmatpush1.xpose.msra.mxu0 0.0
    %382 = vmatprep.subr.mxu0 0.0
    %383 = vmatpush1.xpose.msra.mxu0 0.0
    %384 = vmatprep.subr.mxu0 0.0
    %385 = vmatpush1.xpose.msra.mxu0 0.0
    %386 = vmatprep.subr.mxu0 0.0
    %387 = vmatpush1.xpose.msra.mxu0 0.0
    %388 = vmatprep.subr.mxu0 0.0
    %389 = vmatpush1.xpose.msra.mxu0 0.0
    %390 = vmatprep.subr.mxu0 0.0
    %391 = vmatpush1.xpose.msra.mxu0 0.0
    %392 = vmatprep.subr.mxu0 0.0
    %393 = vmatpush1.xpose.msra.mxu0 0.0
    %394 = vmatprep.subr.mxu0 0.0
    %395 = vmatpush1.xpose.msra.mxu0 0.0
    %396 = vmatprep.subr.mxu0 0.0
    %397 = vmatpush1.xpose.msra.mxu0 0.0
    %398 = vmatprep.subr.mxu0 0.0
    %399 = vmatpush1.xpose.msra.mxu0 0.0
    %400 = vmatprep.subr.mxu0 0.0
    %401 = vmatpush1.xpose.msra.mxu0 0.0
    %402 = vmatprep.mubr.f32.mxu0 0.0
    %403 = vmatmul.mubr.f32.gmra.mrb[0].mxu0 %v329
    %v404 = vpop.f32.mrb[0].mxu0
    %v405 = vadd.f32 %v66, %v404
    %v406 = vpop.f32.mrb[0].mxu0
    %407 = vmatprep.mubr.f32.mxu0 0.0
    %408 = vmatmul.mubr.f32.gmra.mrb[0].mxu0 %v332
    %v409 = vpop.f32.mrb[0].mxu0
    %v410 = vadd.f32 %v67, %v409
    %v411 = vpop.f32.mrb[0].mxu0
    %412 = vdwg.mxu0
    %413 = vrot.lane.b32.xlu0 %v215, 96
    %v414 = vpop.permute.xlu0 %413
    %415 = vrot.lane.b32.xlu0 %v217, 96
    %v416 = vpop.permute.xlu0 %415
    %v418 = vsel %vm238, %v230, 0
    %v421 = vsel %vm238, %v231, 0
    %v423 = vsel %vm238, %v414, 0
    %v425 = vsel %vm238, %v416, 0
    %427 = vmatprep.subr.mxu0 0.0
    %428 = vmatpush1.xpose.msra.mxu0 %v423
    %429 = vmatprep.subr.mxu0 0.0
    %430 = vmatpush1.xpose.msra.mxu0 %v425
    %431 = vmatprep.subr.mxu0 0.0
    %432 = vmatpush1.xpose.msra.mxu0 0.0
    %433 = vmatprep.subr.mxu0 0.0
    %434 = vmatpush1.xpose.msra.mxu0 0.0
    %435 = vmatprep.subr.mxu0 0.0
    %436 = vmatpush1.xpose.msra.mxu0 0.0
    %437 = vmatprep.subr.mxu0 0.0
    %438 = vmatpush1.xpose.msra.mxu0 0.0
    %439 = vmatprep.subr.mxu0 0.0
    %440 = vmatpush1.xpose.msra.mxu0 0.0
    %441 = vmatprep.subr.mxu0 0.0
    %442 = vmatpush1.xpose.msra.mxu0 0.0
    %443 = vmatprep.subr.mxu0 0.0
    %444 = vmatpush1.xpose.msra.mxu0 0.0
    %445 = vmatprep.subr.mxu0 0.0
    %446 = vmatpush1.xpose.msra.mxu0 0.0
    %447 = vmatprep.subr.mxu0 0.0
    %448 = vmatpush1.xpose.msra.mxu0 0.0
    %449 = vmatprep.subr.mxu0 0.0
    %450 = vmatpush1.xpose.msra.mxu0 0.0
    %451 = vmatprep.subr.mxu0 0.0
    %452 = vmatpush1.xpose.msra.mxu0 0.0
    %453 = vmatprep.subr.mxu0 0.0
    %454 = vmatpush1.xpose.msra.mxu0 0.0
    %455 = vmatprep.subr.mxu0 0.0
    %456 = vmatpush1.xpose.msra.mxu0 0.0
    %457 = vmatprep.subr.mxu0 0.0
    %458 = vmatpush1.xpose.msra.mxu0 0.0
    %459 = vmatprep.subr.mxu0 0.0
    %460 = vmatpush1.xpose.msra.mxu0 0.0
    %461 = vmatprep.subr.mxu0 0.0
    %462 = vmatpush1.xpose.msra.mxu0 0.0
    %463 = vmatprep.subr.mxu0 0.0
    %464 = vmatpush1.xpose.msra.mxu0 0.0
    %465 = vmatprep.subr.mxu0 0.0
    %466 = vmatpush1.xpose.msra.mxu0 0.0
    %467 = vmatprep.subr.mxu0 0.0
    %468 = vmatpush1.xpose.msra.mxu0 0.0
    %469 = vmatprep.subr.mxu0 0.0
    %470 = vmatpush1.xpose.msra.mxu0 0.0
    %471 = vmatprep.subr.mxu0 0.0
    %472 = vmatpush1.xpose.msra.mxu0 0.0
    %473 = vmatprep.subr.mxu0 0.0
    %474 = vmatpush1.xpose.msra.mxu0 0.0
    %475 = vmatprep.subr.mxu0 0.0
    %476 = vmatpush1.xpose.msra.mxu0 0.0
    %477 = vmatprep.subr.mxu0 0.0
    %478 = vmatpush1.xpose.msra.mxu0 0.0
    %479 = vmatprep.subr.mxu0 0.0
    %480 = vmatpush1.xpose.msra.mxu0 0.0
    %481 = vmatprep.subr.mxu0 0.0
    %482 = vmatpush1.xpose.msra.mxu0 0.0
    %483 = vmatprep.subr.mxu0 0.0
    %484 = vmatpush1.xpose.msra.mxu0 0.0
    %485 = vmatprep.subr.mxu0 0.0
    %486 = vmatpush1.xpose.msra.mxu0 0.0
    %487 = vmatprep.subr.mxu0 0.0
    %488 = vmatpush1.xpose.msra.mxu0 0.0
    %489 = vmatprep.subr.mxu0 0.0
    %490 = vmatpush1.xpose.msra.mxu0 0.0
    %491 = vmatprep.mubr.f32.mxu0 0.0
    %492 = vmatmul.mubr.f32.gmra.mrb[0].mxu0 %v418
    %v493 = vpop.f32.mrb[0].mxu0
    %v494 = vadd.f32 %v66, %v493
    %v495 = vpop.f32.mrb[0].mxu0
    %496 = vmatprep.mubr.f32.mxu0 0.0
    %497 = vmatmul.mubr.f32.gmra.mrb[0].mxu0 %v421
    %v498 = vpop.f32.mrb[0].mxu0
    %v499 = vadd.f32 %v67, %v498
    %v500 = vpop.f32.mrb[0].mxu0
    %501 = vdwg.mxu0
    %502 = vrot.lane.b32.xlu0 %v221, 96
    %v503 = vpop.permute.xlu0 %502
    %504 = vrot.lane.b32.xlu0 %v223, 96
    %v505 = vpop.permute.xlu0 %504
    %v507 = vsel %vm238, %v232, 0
    %v510 = vsel %vm238, %v233, 0
    %v512 = vsel %vm238, %v503, 0
    %v514 = vsel %vm238, %v505, 0
    %516 = vmatprep.subr.mxu0 0.0
    %517 = vmatpush1.xpose.msra.mxu0 %v512
    %518 = vmatprep.subr.mxu0 0.0
    %519 = vmatpush1.xpose.msra.mxu0 %v514
    %520 = vmatprep.subr.mxu0 0.0
    %521 = vmatpush1.xpose.msra.mxu0 0.0
    %522 = vmatprep.subr.mxu0 0.0
    %523 = vmatpush1.xpose.msra.mxu0 0.0
    %524 = vmatprep.subr.mxu0 0.0
    %525 = vmatpush1.xpose.msra.mxu0 0.0
    %526 = vmatprep.subr.mxu0 0.0
    %527 = vmatpush1.xpose.msra.mxu0 0.0
    %528 = vmatprep.subr.mxu0 0.0
    %529 = vmatpush1.xpose.msra.mxu0 0.0
    %530 = vmatprep.subr.mxu0 0.0
    %531 = vmatpush1.xpose.msra.mxu0 0.0
    %532 = vmatprep.subr.mxu0 0.0
    %533 = vmatpush1.xpose.msra.mxu0 0.0
    %534 = vmatprep.subr.mxu0 0.0
    %535 = vmatpush1.xpose.msra.mxu0 0.0
    %536 = vmatprep.subr.mxu0 0.0
    %537 = vmatpush1.xpose.msra.mxu0 0.0
    %538 = vmatprep.subr.mxu0 0.0
    %539 = vmatpush1.xpose.msra.mxu0 0.0
    %540 = vmatprep.subr.mxu0 0.0
    %541 = vmatpush1.xpose.msra.mxu0 0.0
    %542 = vmatprep.subr.mxu0 0.0
    %543 = vmatpush1.xpose.msra.mxu0 0.0
    %544 = vmatprep.subr.mxu0 0.0
    %545 = vmatpush1.xpose.msra.mxu0 0.0
    %546 = vmatprep.subr.mxu0 0.0
    %547 = vmatpush1.xpose.msra.mxu0 0.0
    %548 = vmatprep.subr.mxu0 0.0
    %549 = vmatpush1.xpose.msra.mxu0 0.0
    %550 = vmatprep.subr.mxu0 0.0
    %551 = vmatpush1.xpose.msra.mxu0 0.0
    %552 = vmatprep.subr.mxu0 0.0
    %553 = vmatpush1.xpose.msra.mxu0 0.0
    %554 = vmatprep.subr.mxu0 0.0
    %555 = vmatpush1.xpose.msra.mxu0 0.0
    %556 = vmatprep.subr.mxu0 0.0
    %557 = vmatpush1.xpose.msra.mxu0 0.0
    %558 = vmatprep.subr.mxu0 0.0
    %559 = vmatpush1.xpose.msra.mxu0 0.0
    %560 = vmatprep.subr.mxu0 0.0
    %561 = vmatpush1.xpose.msra.mxu0 0.0
    %562 = vmatprep.subr.mxu0 0.0
    %563 = vmatpush1.xpose.msra.mxu0 0.0
    %564 = vmatprep.subr.mxu0 0.0
    %565 = vmatpush1.xpose.msra.mxu0 0.0
    %566 = vmatprep.subr.mxu0 0.0
    %567 = vmatpush1.xpose.msra.mxu0 0.0
    %568 = vmatprep.subr.mxu0 0.0
    %569 = vmatpush1.xpose.msra.mxu0 0.0
    %570 = vmatprep.subr.mxu0 0.0
    %571 = vmatpush1.xpose.msra.mxu0 0.0
    %572 = vmatprep.subr.mxu0 0.0
    %573 = vmatpush1.xpose.msra.mxu0 0.0
    %574 = vmatprep.subr.mxu0 0.0
    %575 = vmatpush1.xpose.msra.mxu0 0.0
    %576 = vmatprep.subr.mxu0 0.0
    %577 = vmatpush1.xpose.msra.mxu0 0.0
    %578 = vmatprep.subr.mxu0 0.0
    %579 = vmatpush1.xpose.msra.mxu0 0.0
    %580 = vmatprep.mubr.f32.mxu0 0.0
    %581 = vmatmul.mubr.f32.gmra.mrb[0].mxu0 %v507
    %v582 = vpop.f32.mrb[0].mxu0
    %v583 = vadd.f32 %v66, %v582
    %v584 = vpop.f32.mrb[0].mxu0
    %585 = vmatprep.mubr.f32.mxu0 0.0
    %586 = vmatmul.mubr.f32.gmra.mrb[0].mxu0 %v510
    %v587 = vpop.f32.mrb[0].mxu0
    %v588 = vadd.f32 %v67, %v587
    %v589 = vpop.f32.mrb[0].mxu0
    %590 = vdwg.mxu0
    %vm591 = vcmask 130048
    %v592 = vsel %vm591, %v316, -inf
    %593 = vmax.xlane.f32.xlu0 %v592
    %v594 = vpop.xlane.xlu0 %593
    %v595 = vsel %vm591, %v321, -inf
    %596 = vmax.xlane.f32.xlu0 %v595
    %v597 = vpop.xlane.xlu0 %596
    %v598 = vsel %vm591, %v405, -inf
    %599 = vmax.xlane.f32.xlu0 %v598
    %v600 = vpop.xlane.xlu0 %599
    %v601 = vsel %vm591, %v410, -inf
    %602 = vmax.xlane.f32.xlu0 %v601
    %v603 = vpop.xlane.xlu0 %602
    %v604 = vsel %vm591, %v494, -inf
    %605 = vmax.xlane.f32.xlu0 %v604
    %v606 = vpop.xlane.xlu0 %605
    %v607 = vsel %vm591, %v499, -inf
    %608 = vmax.xlane.f32.xlu0 %v607
    %v609 = vpop.xlane.xlu0 %608
    %v610 = vsel %vm591, %v583, -inf
    %611 = vmax.xlane.f32.xlu0 %v610
    %v612 = vpop.xlane.xlu0 %611
    %v613 = vsel %vm591, %v588, -inf
    %614 = vmax.xlane.f32.xlu0 %v613
    %v615 = vpop.xlane.xlu0 %614
    %v616 = vsub.f32 %v316, %v594
    %v617 = vsub.f32 %v321, %v597
    %v618 = vsub.f32 %v405, %v600
    %v619 = vsub.f32 %v410, %v603
    %v620 = vsub.f32 %v494, %v606
    %v621 = vsub.f32 %v499, %v609
    %v622 = vsub.f32 %v583, %v612
    %v623 = vsub.f32 %v588, %v615
    %v624 = vmul.f32 %v616, 1.442695
    %v625 = vpow.pop %v624
    %v626 = vmul.f32 %v617, 1.442695
    %v627 = vpow.pop %v626
    %v628 = vmul.f32 %v618, 1.442695
    %v629 = vpow.pop %v628
    %v630 = vmul.f32 %v619, 1.442695
    %v631 = vpow.pop %v630
    %v632 = vmul.f32 %v620, 1.442695
    %v633 = vpow.pop %v632
    %v634 = vmul.f32 %v621, 1.442695
    %v635 = vpow.pop %v634
    %v636 = vmul.f32 %v622, 1.442695
    %v637 = vpow.pop %v636
    %v638 = vmul.f32 %v623, 1.442695
    %v639 = vpow.pop %v638
    %v640 = vsel %vm591, %v625, 0.0
    %641 = vadd.xlane.f32.xlu0 %v640
    %v642 = vpop.xlane.xlu0 %641
    %v643 = vsel %vm591, %v627, 0.0
    %644 = vadd.xlane.f32.xlu0 %v643
    %v645 = vpop.xlane.xlu0 %644
    %v646 = vsel %vm591, %v629, 0.0
    %647 = vadd.xlane.f32.xlu0 %v646
    %v648 = vpop.xlane.xlu0 %647
    %v649 = vsel %vm591, %v631, 0.0
    %650 = vadd.xlane.f32.xlu0 %v649
    %v651 = vpop.xlane.xlu0 %650
    %v652 = vsel %vm591, %v633, 0.0
    %653 = vadd.xlane.f32.xlu0 %v652
    %v654 = vpop.xlane.xlu0 %653
    %v655 = vsel %vm591, %v635, 0.0
    %656 = vadd.xlane.f32.xlu0 %v655
    %v657 = vpop.xlane.xlu0 %656
    %v658 = vsel %vm591, %v637, 0.0
    %659 = vadd.xlane.f32.xlu0 %v658
    %v660 = vpop.xlane.xlu0 %659
    %v661 = vsel %vm591, %v639, 0.0
    %662 = vadd.xlane.f32.xlu0 %v661
    %v663 = vpop.xlane.xlu0 %662
    %v664 = vrcp.pop %v642
    %v665 = vrcp.pop %v645
    %v666 = vrcp.pop %v648
    %v667 = vrcp.pop %v651
    %v668 = vrcp.pop %v654
    %v669 = vrcp.pop %v657
    %v670 = vrcp.pop %v660
    %v671 = vrcp.pop %v663
    %v672 = vmul.f32 %v625, %v664
    %v673 = vmul.f32 %v627, %v665
    %v674 = vmul.f32 %v629, %v666
    %v675 = vmul.f32 %v631, %v667
    %v676 = vmul.f32 %v633, %v668
    %v677 = vmul.f32 %v635, %v669
    %v678 = vmul.f32 %v637, %v670
    %v679 = vmul.f32 %v639, %v671
    %680 = vrot.lane.b32.xlu0 %v198, 64
    %v681 = vpop.permute.xlu0 %680
    %682 = vrot.lane.b32.xlu0 %v203, 64
    %v683 = vpop.permute.xlu0 %682
    %v687 = vsel %vm591, %v672, 0
    %v690 = vsel %vm591, %v673, 0
    %692 = vmatprep.subr.mxu0 0.0
    %693 = vmatpush1.msra.mxu0 %v681
    %694 = vmatprep.subr.mxu0 0.0
    %695 = vmatpush1.msra.mxu0 %v683
    %696 = vmatprep.subr.mxu0 0.0
    %697 = vmatpush1.msra.mxu0 0.0
    %698 = vmatprep.subr.mxu0 0.0
    %699 = vmatpush1.msra.mxu0 0.0
    %700 = vmatprep.subr.mxu0 0.0
    %701 = vmatpush1.msra.mxu0 0.0
    %702 = vmatprep.subr.mxu0 0.0
    %703 = vmatpush1.msra.mxu0 0.0
    %704 = vmatprep.subr.mxu0 0.0
    %705 = vmatpush1.msra.mxu0 0.0
    %706 = vmatprep.subr.mxu0 0.0
    %707 = vmatpush1.msra.mxu0 0.0
    %708 = vmatprep.subr.mxu0 0.0
    %709 = vmatpush1.msra.mxu0 0.0
    %710 = vmatprep.subr.mxu0 0.0
    %711 = vmatpush1.msra.mxu0 0.0
    %712 = vmatprep.subr.mxu0 0.0
    %713 = vmatpush1.msra.mxu0 0.0
    %714 = vmatprep.subr.mxu0 0.0
    %715 = vmatpush1.msra.mxu0 0.0
    %716 = vmatprep.subr.mxu0 0.0
    %717 = vmatpush1.msra.mxu0 0.0
    %718 = vmatprep.subr.mxu0 0.0
    %719 = vmatpush1.msra.mxu0 0.0
    %720 = vmatprep.subr.mxu0 0.0
    %721 = vmatpush1.msra.mxu0 0.0
    %722 = vmatprep.subr.mxu0 0.0
    %723 = vmatpush1.msra.mxu0 0.0
    %724 = vmatprep.subr.mxu0 0.0
    %725 = vmatpush1.msra.mxu0 0.0
    %726 = vmatprep.subr.mxu0 0.0
    %727 = vmatpush1.msra.mxu0 0.0
    %728 = vmatprep.subr.mxu0 0.0
    %729 = vmatpush1.msra.mxu0 0.0
    %730 = vmatprep.subr.mxu0 0.0
    %731 = vmatpush1.msra.mxu0 0.0
    %732 = vmatprep.subr.mxu0 0.0
    %733 = vmatpush1.msra.mxu0 0.0
    %734 = vmatprep.subr.mxu0 0.0
    %735 = vmatpush1.msra.mxu0 0.0
    %736 = vmatprep.subr.mxu0 0.0
    %737 = vmatpush1.msra.mxu0 0.0
    %738 = vmatprep.subr.mxu0 0.0
    %739 = vmatpush1.msra.mxu0 0.0
    %740 = vmatprep.subr.mxu0 0.0
    %741 = vmatpush1.msra.mxu0 0.0
    %742 = vmatprep.subr.mxu0 0.0
    %743 = vmatpush1.msra.mxu0 0.0
    %744 = vmatprep.subr.mxu0 0.0
    %745 = vmatpush1.msra.mxu0 0.0
    %746 = vmatprep.subr.mxu0 0.0
    %747 = vmatpush1.msra.mxu0 0.0
    %748 = vmatprep.subr.mxu0 0.0
    %749 = vmatpush1.msra.mxu0 0.0
    %750 = vmatprep.subr.mxu0 0.0
    %751 = vmatpush1.msra.mxu0 0.0
    %752 = vmatprep.subr.mxu0 0.0
    %753 = vmatpush1.msra.mxu0 0.0
    %754 = vmatprep.subr.mxu0 0.0
    %755 = vmatpush1.msra.mxu0 0.0
    %756 = vmatprep.mubr.f32.mxu0 0.0
    %757 = vmatmul.mubr.f32.gmra.mrb[0].mxu0 %v687
    %v758 = vpop.f32.mrb[0].mxu0
    %v759 = vadd.f32 0.0, %v758
    %v760 = vpop.f32.mrb[0].mxu0
    %761 = vmatprep.mubr.f32.mxu0 0.0
    %762 = vmatmul.mubr.f32.gmra.mrb[0].mxu0 %v690
    %v763 = vpop.f32.mrb[0].mxu0
    %v764 = vadd.f32 0.0, %v763
    %v765 = vpop.f32.mrb[0].mxu0
    %766 = vdwg.mxu0
    %767 = vrot.lane.b32.xlu0 %v209, 64
    %v768 = vpop.permute.xlu0 %767
    %769 = vrot.lane.b32.xlu0 %v211, 64
    %v770 = vpop.permute.xlu0 %769
    %v774 = vsel %vm591, %v674, 0
    %v777 = vsel %vm591, %v675, 0
    %779 = vmatprep.subr.mxu0 0.0
    %780 = vmatpush1.msra.mxu0 %v768
    %781 = vmatprep.subr.mxu0 0.0
    %782 = vmatpush1.msra.mxu0 %v770
    %783 = vmatprep.subr.mxu0 0.0
    %784 = vmatpush1.msra.mxu0 0.0
    %785 = vmatprep.subr.mxu0 0.0
    %786 = vmatpush1.msra.mxu0 0.0
    %787 = vmatprep.subr.mxu0 0.0
    %788 = vmatpush1.msra.mxu0 0.0
    %789 = vmatprep.subr.mxu0 0.0
    %790 = vmatpush1.msra.mxu0 0.0
    %791 = vmatprep.subr.mxu0 0.0
    %792 = vmatpush1.msra.mxu0 0.0
    %793 = vmatprep.subr.mxu0 0.0
    %794 = vmatpush1.msra.mxu0 0.0
    %795 = vmatprep.subr.mxu0 0.0
    %796 = vmatpush1.msra.mxu0 0.0
    %797 = vmatprep.subr.mxu0 0.0
    %798 = vmatpush1.msra.mxu0 0.0
    %799 = vmatprep.subr.mxu0 0.0
    %800 = vmatpush1.msra.mxu0 0.0
    %801 = vmatprep.subr.mxu0 0.0
    %802 = vmatpush1.msra.mxu0 0.0
    %803 = vmatprep.subr.mxu0 0.0
    %804 = vmatpush1.msra.mxu0 0.0
    %805 = vmatprep.subr.mxu0 0.0
    %806 = vmatpush1.msra.mxu0 0.0
    %807 = vmatprep.subr.mxu0 0.0
    %808 = vmatpush1.msra.mxu0 0.0
    %809 = vmatprep.subr.mxu0 0.0
    %810 = vmatpush1.msra.mxu0 0.0
    %811 = vmatprep.subr.mxu0 0.0
    %812 = vmatpush1.msra.mxu0 0.0
    %813 = vmatprep.subr.mxu0 0.0
    %814 = vmatpush1.msra.mxu0 0.0
    %815 = vmatprep.subr.mxu0 0.0
    %816 = vmatpush1.msra.mxu0 0.0
    %817 = vmatprep.subr.mxu0 0.0
    %818 = vmatpush1.msra.mxu0 0.0
    %819 = vmatprep.subr.mxu0 0.0
    %820 = vmatpush1.msra.mxu0 0.0
    %821 = vmatprep.subr.mxu0 0.0
    %822 = vmatpush1.msra.mxu0 0.0
    %823 = vmatprep.subr.mxu0 0.0
    %824 = vmatpush1.msra.mxu0 0.0
    %825 = vmatprep.subr.mxu0 0.0
    %826 = vmatpush1.msra.mxu0 0.0
    %827 = vmatprep.subr.mxu0 0.0
    %828 = vmatpush1.msra.mxu0 0.0
    %829 = vmatprep.subr.mxu0 0.0
    %830 = vmatpush1.msra.mxu0 0.0
    %831 = vmatprep.subr.mxu0 0.0
    %832 = vmatpush1.msra.mxu0 0.0
    %833 = vmatprep.subr.mxu0 0.0
    %834 = vmatpush1.msra.mxu0 0.0
    %835 = vmatprep.subr.mxu0 0.0
    %836 = vmatpush1.msra.mxu0 0.0
    %837 = vmatprep.subr.mxu0 0.0
    %838 = vmatpush1.msra.mxu0 0.0
    %839 = vmatprep.subr.mxu0 0.0
    %840 = vmatpush1.msra.mxu0 0.0
    %841 = vmatprep.subr.mxu0 0.0
    %842 = vmatpush1.msra.mxu0 0.0
    %843 = vmatprep.mubr.f32.mxu0 0.0
    %844 = vmatmul.mubr.f32.gmra.mrb[0].mxu0 %v774
    %v845 = vpop.f32.mrb[0].mxu0
    %v846 = vadd.f32 0.0, %v845
    %v847 = vpop.f32.mrb[0].mxu0
    %848 = vmatprep.mubr.f32.mxu0 0.0
    %849 = vmatmul.mubr.f32.gmra.mrb[0].mxu0 %v777
    %v850 = vpop.f32.mrb[0].mxu0
    %v851 = vadd.f32 0.0, %v850
    %v852 = vpop.f32.mrb[0].mxu0
    %853 = vdwg.mxu0
    %854 = vrot.lane.b32.xlu0 %v215, 64
    %v855 = vpop.permute.xlu0 %854
    %856 = vrot.lane.b32.xlu0 %v217, 64
    %v857 = vpop.permute.xlu0 %856
    %v861 = vsel %vm591, %v676, 0
    %v864 = vsel %vm591, %v677, 0
    %866 = vmatprep.subr.mxu0 0.0
    %867 = vmatpush1.msra.mxu0 %v855
    %868 = vmatprep.subr.mxu0 0.0
    %869 = vmatpush1.msra.mxu0 %v857
    %870 = vmatprep.subr.mxu0 0.0
    %871 = vmatpush1.msra.mxu0 0.0
    %872 = vmatprep.subr.mxu0 0.0
    %873 = vmatpush1.msra.mxu0 0.0
    %874 = vmatprep.subr.mxu0 0.0
    %875 = vmatpush1.msra.mxu0 0.0
    %876 = vmatprep.subr.mxu0 0.0
    %877 = vmatpush1.msra.mxu0 0.0
    %878 = vmatprep.subr.mxu0 0.0
    %879 = vmatpush1.msra.mxu0 0.0
    %880 = vmatprep.subr.mxu0 0.0
    %881 = vmatpush1.msra.mxu0 0.0
    %882 = vmatprep.subr.mxu0 0.0
    %883 = vmatpush1.msra.mxu0 0.0
    %884 = vmatprep.subr.mxu0 0.0
    %885 = vmatpush1.msra.mxu0 0.0
    %886 = vmatprep.subr.mxu0 0.0
    %887 = vmatpush1.msra.mxu0 0.0
    %888 = vmatprep.subr.mxu0 0.0
    %889 = vmatpush1.msra.mxu0 0.0
    %890 = vmatprep.subr.mxu0 0.0
    %891 = vmatpush1.msra.mxu0 0.0
    %892 = vmatprep.subr.mxu0 0.0
    %893 = vmatpush1.msra.mxu0 0.0
    %894 = vmatprep.subr.mxu0 0.0
    %895 = vmatpush1.msra.mxu0 0.0
    %896 = vmatprep.subr.mxu0 0.0
    %897 = vmatpush1.msra.mxu0 0.0
    %898 = vmatprep.subr.mxu0 0.0
    %899 = vmatpush1.msra.mxu0 0.0
    %900 = vmatprep.subr.mxu0 0.0
    %901 = vmatpush1.msra.mxu0 0.0
    %902 = vmatprep.subr.mxu0 0.0
    %903 = vmatpush1.msra.mxu0 0.0
    %904 = vmatprep.subr.mxu0 0.0
    %905 = vmatpush1.msra.mxu0 0.0
    %906 = vmatprep.subr.mxu0 0.0
    %907 = vmatpush1.msra.mxu0 0.0
    %908 = vmatprep.subr.mxu0 0.0
    %909 = vmatpush1.msra.mxu0 0.0
    %910 = vmatprep.subr.mxu0 0.0
    %911 = vmatpush1.msra.mxu0 0.0
    %912 = vmatprep.subr.mxu0 0.0
    %913 = vmatpush1.msra.mxu0 0.0
    %914 = vmatprep.subr.mxu0 0.0
    %915 = vmatpush1.msra.mxu0 0.0
    %916 = vmatprep.subr.mxu0 0.0
    %917 = vmatpush1.msra.mxu0 0.0
    %918 = vmatprep.subr.mxu0 0.0
    %919 = vmatpush1.msra.mxu0 0.0
    %920 = vmatprep.subr.mxu0 0.0
    %921 = vmatpush1.msra.mxu0 0.0
    %922 = vmatprep.subr.mxu0 0.0
    %923 = vmatpush1.msra.mxu0 0.0
    %924 = vmatprep.subr.mxu0 0.0
    %925 = vmatpush1.msra.mxu0 0.0
    %926 = vmatprep.subr.mxu0 0.0
    %927 = vmatpush1.msra.mxu0 0.0
    %928 = vmatprep.subr.mxu0 0.0
    %929 = vmatpush1.msra.mxu0 0.0
    %930 = vmatprep.mubr.f32.mxu0 0.0
    %931 = vmatmul.mubr.f32.gmra.mrb[0].mxu0 %v861
    %v932 = vpop.f32.mrb[0].mxu0
    %v933 = vadd.f32 0.0, %v932
    %v934 = vpop.f32.mrb[0].mxu0
    %935 = vmatprep.mubr.f32.mxu0 0.0
    %936 = vmatmul.mubr.f32.gmra.mrb[0].mxu0 %v864
    %v937 = vpop.f32.mrb[0].mxu0
    %v938 = vadd.f32 0.0, %v937
    %v939 = vpop.f32.mrb[0].mxu0
    %940 = vdwg.mxu0
    %941 = vrot.lane.b32.xlu0 %v221, 64
    %v942 = vpop.permute.xlu0 %941
    %943 = vrot.lane.b32.xlu0 %v223, 64
    %v944 = vpop.permute.xlu0 %943
    %v948 = vsel %vm591, %v678, 0
    %v951 = vsel %vm591, %v679, 0
    %953 = vmatprep.subr.mxu0 0.0
    %954 = vmatpush1.msra.mxu0 %v942
    %955 = vmatprep.subr.mxu0 0.0
    %956 = vmatpush1.msra.mxu0 %v944
    %957 = vmatprep.subr.mxu0 0.0
    %958 = vmatpush1.msra.mxu0 0.0
    %959 = vmatprep.subr.mxu0 0.0
    %960 = vmatpush1.msra.mxu0 0.0
    %961 = vmatprep.subr.mxu0 0.0
    %962 = vmatpush1.msra.mxu0 0.0
    %963 = vmatprep.subr.mxu0 0.0
    %964 = vmatpush1.msra.mxu0 0.0
    %965 = vmatprep.subr.mxu0 0.0
    %966 = vmatpush1.msra.mxu0 0.0
    %967 = vmatprep.subr.mxu0 0.0
    %968 = vmatpush1.msra.mxu0 0.0
    %969 = vmatprep.subr.mxu0 0.0
    %970 = vmatpush1.msra.mxu0 0.0
    %971 = vmatprep.subr.mxu0 0.0
    %972 = vmatpush1.msra.mxu0 0.0
    %973 = vmatprep.subr.mxu0 0.0
    %974 = vmatpush1.msra.mxu0 0.0
    %975 = vmatprep.subr.mxu0 0.0
    %976 = vmatpush1.msra.mxu0 0.0
    %977 = vmatprep.subr.mxu0 0.0
    %978 = vmatpush1.msra.mxu0 0.0
    %979 = vmatprep.subr.mxu0 0.0
    %980 = vmatpush1.msra.mxu0 0.0
    %981 = vmatprep.subr.mxu0 0.0
    %982 = vmatpush1.msra.mxu0 0.0
    %983 = vmatprep.subr.mxu0 0.0
    %984 = vmatpush1.msra.mxu0 0.0
    %985 = vmatprep.subr.mxu0 0.0
    %986 = vmatpush1.msra.mxu0 0.0
    %987 = vmatprep.subr.mxu0 0.0
    %988 = vmatpush1.msra.mxu0 0.0
    %989 = vmatprep.subr.mxu0 0.0
    %990 = vmatpush1.msra.mxu0 0.0
    %991 = vmatprep.subr.mxu0 0.0
    %992 = vmatpush1.msra.mxu0 0.0
    %993 = vmatprep.subr.mxu0 0.0
    %994 = vmatpush1.msra.mxu0 0.0
    %995 = vmatprep.subr.mxu0 0.0
    %996 = vmatpush1.msra.mxu0 0.0
    %997 = vmatprep.subr.mxu0 0.0
    %998 = vmatpush1.msra.mxu0 0.0
    %999 = vmatprep.subr.mxu0 0.0
    %1000 = vmatpush1.msra.mxu0 0.0
    %1001 = vmatprep.subr.mxu0 0.0
    %1002 = vmatpush1.msra.mxu0 0.0
    %1003 = vmatprep.subr.mxu0 0.0
    %1004 = vmatpush1.msra.mxu0 0.0
    %1005 = vmatprep.subr.mxu0 0.0
    %1006 = vmatpush1.msra.mxu0 0.0
    %1007 = vmatprep.subr.mxu0 0.0
    %1008 = vmatpush1.msra.mxu0 0.0
    %1009 = vmatprep.subr.mxu0 0.0
    %1010 = vmatpush1.msra.mxu0 0.0
    %1011 = vmatprep.subr.mxu0 0.0
    %1012 = vmatpush1.msra.mxu0 0.0
    %1013 = vmatprep.subr.mxu0 0.0
    %1014 = vmatpush1.msra.mxu0 0.0
    %1015 = vmatprep.subr.mxu0 0.0
    %1016 = vmatpush1.msra.mxu0 0.0
    %1017 = vmatprep.mubr.f32.mxu0 0.0
    %1018 = vmatmul.mubr.f32.gmra.mrb[0].mxu0 %v948
    %v1019 = vpop.f32.mrb[0].mxu0
    %v1020 = vadd.f32 0.0, %v1019
    %v1021 = vpop.f32.mrb[0].mxu0
    %1022 = vmatprep.mubr.f32.mxu0 0.0
    %1023 = vmatmul.mubr.f32.gmra.mrb[0].mxu0 %v951
    %v1024 = vpop.f32.mrb[0].mxu0
    %v1025 = vadd.f32 0.0, %v1024
    %v1026 = vpop.f32.mrb[0].mxu0
    %1027 = vdwg.mxu0
    %v1028 = vld [vmem:[%s7] sm:$0xff]
    %v1029 = vld [vmem:[%s7 + $0x8] sm:$0xff]
    %v1030 = vld [vmem:[%s7 + $0x10] sm:$0xff]
    %v1031 = vld [vmem:[%s7 + $0x18] sm:$0xff]
    %v1033 = vsel %vm238, %v759, 0
    %v1036 = vsel %vm238, %v764, 0
    %1038 = vmatprep.subr.mxu0 0.0
    %1039 = vmatpush1.msra.mxu0 %v1028
    %1040 = vmatprep.subr.mxu0 0.0
    %1041 = vmatpush1.msra.mxu0 0.0
    %1042 = vmatprep.subr.mxu0 0.0
    %1043 = vmatpush1.msra.mxu0 0.0
    %1044 = vmatprep.subr.mxu0 0.0
    %1045 = vmatpush1.msra.mxu0 0.0
    %1046 = vmatprep.subr.mxu0 0.0
    %1047 = vmatpush1.msra.mxu0 0.0
    %1048 = vmatprep.subr.mxu0 0.0
    %1049 = vmatpush1.msra.mxu0 0.0
    %1050 = vmatprep.subr.mxu0 0.0
    %1051 = vmatpush1.msra.mxu0 0.0
    %1052 = vmatprep.subr.mxu0 0.0
    %1053 = vmatpush1.msra.mxu0 0.0
    %1054 = vmatprep.subr.mxu0 0.0
    %1055 = vmatpush1.msra.mxu0 0.0
    %1056 = vmatprep.subr.mxu0 0.0
    %1057 = vmatpush1.msra.mxu0 0.0
    %1058 = vmatprep.subr.mxu0 0.0
    %1059 = vmatpush1.msra.mxu0 0.0
    %1060 = vmatprep.subr.mxu0 0.0
    %1061 = vmatpush1.msra.mxu0 0.0
    %1062 = vmatprep.subr.mxu0 0.0
    %1063 = vmatpush1.msra.mxu0 0.0
    %1064 = vmatprep.subr.mxu0 0.0
    %1065 = vmatpush1.msra.mxu0 0.0
    %1066 = vmatprep.subr.mxu0 0.0
    %1067 = vmatpush1.msra.mxu0 0.0
    %1068 = vmatprep.subr.mxu0 0.0
    %1069 = vmatpush1.msra.mxu0 0.0
    %1070 = vmatprep.subr.mxu0 0.0
    %1071 = vmatpush1.msra.mxu0 0.0
    %1072 = vmatprep.subr.mxu0 0.0
    %1073 = vmatpush1.msra.mxu0 0.0
    %1074 = vmatprep.subr.mxu0 0.0
    %1075 = vmatpush1.msra.mxu0 0.0
    %1076 = vmatprep.subr.mxu0 0.0
    %1077 = vmatpush1.msra.mxu0 0.0
    %1078 = vmatprep.subr.mxu0 0.0
    %1079 = vmatpush1.msra.mxu0 0.0
    %1080 = vmatprep.subr.mxu0 0.0
    %1081 = vmatpush1.msra.mxu0 0.0
    %1082 = vmatprep.subr.mxu0 0.0
    %1083 = vmatpush1.msra.mxu0 0.0
    %1084 = vmatprep.subr.mxu0 0.0
    %1085 = vmatpush1.msra.mxu0 0.0
    %1086 = vmatprep.subr.mxu0 0.0
    %1087 = vmatpush1.msra.mxu0 0.0
    %1088 = vmatprep.subr.mxu0 0.0
    %1089 = vmatpush1.msra.mxu0 0.0
    %1090 = vmatprep.subr.mxu0 0.0
    %1091 = vmatpush1.msra.mxu0 0.0
    %1092 = vmatprep.subr.mxu0 0.0
    %1093 = vmatpush1.msra.mxu0 0.0
    %1094 = vmatprep.subr.mxu0 0.0
    %1095 = vmatpush1.msra.mxu0 0.0
    %1096 = vmatprep.subr.mxu0 0.0
    %1097 = vmatpush1.msra.mxu0 0.0
    %1098 = vmatprep.subr.mxu0 0.0
    %1099 = vmatpush1.msra.mxu0 0.0
    %1100 = vmatprep.subr.mxu0 0.0
    %1101 = vmatpush1.msra.mxu0 0.0
    %1102 = vmatprep.mubr.f32.mxu0 0.0
    %1103 = vmatmul.mubr.f32.gmra.mrb[0].mxu0 %v1033
    %v1104 = vpop.f32.mrb[0].mxu0
    %v1105 = vadd.f32 0.0, %v1104
    %v1106 = vpop.f32.mrb[0].mxu0
    %1107 = vmatprep.mubr.f32.mxu0 0.0
    %1108 = vmatmul.mubr.f32.gmra.mrb[0].mxu0 %v1036
    %v1109 = vpop.f32.mrb[0].mxu0
    %v1110 = vadd.f32 0.0, %v1109
    %v1111 = vpop.f32.mrb[0].mxu0
    %1112 = vdwg.mxu0
    %v1114 = vsel %vm238, %v846, 0
    %v1117 = vsel %vm238, %v851, 0
    %1119 = vmatprep.subr.mxu0 0.0
    %1120 = vmatpush1.msra.mxu0 %v1029
    %1121 = vmatprep.subr.mxu0 0.0
    %1122 = vmatpush1.msra.mxu0 0.0
    %1123 = vmatprep.subr.mxu0 0.0
    %1124 = vmatpush1.msra.mxu0 0.0
    %1125 = vmatprep.subr.mxu0 0.0
    %1126 = vmatpush1.msra.mxu0 0.0
    %1127 = vmatprep.subr.mxu0 0.0
    %1128 = vmatpush1.msra.mxu0 0.0
    %1129 = vmatprep.subr.mxu0 0.0
    %1130 = vmatpush1.msra.mxu0 0.0
    %1131 = vmatprep.subr.mxu0 0.0
    %1132 = vmatpush1.msra.mxu0 0.0
    %1133 = vmatprep.subr.mxu0 0.0
    %1134 = vmatpush1.msra.mxu0 0.0
    %1135 = vmatprep.subr.mxu0 0.0
    %1136 = vmatpush1.msra.mxu0 0.0
    %1137 = vmatprep.subr.mxu0 0.0
    %1138 = vmatpush1.msra.mxu0 0.0
    %1139 = vmatprep.subr.mxu0 0.0
    %1140 = vmatpush1.msra.mxu0 0.0
    %1141 = vmatprep.subr.mxu0 0.0
    %1142 = vmatpush1.msra.mxu0 0.0
    %1143 = vmatprep.subr.mxu0 0.0
    %1144 = vmatpush1.msra.mxu0 0.0
    %1145 = vmatprep.subr.mxu0 0.0
    %1146 = vmatpush1.msra.mxu0 0.0
    %1147 = vmatprep.subr.mxu0 0.0
    %1148 = vmatpush1.msra.mxu0 0.0
    %1149 = vmatprep.subr.mxu0 0.0
    %1150 = vmatpush1.msra.mxu0 0.0
    %1151 = vmatprep.subr.mxu0 0.0
    %1152 = vmatpush1.msra.mxu0 0.0
    %1153 = vmatprep.subr.mxu0 0.0
    %1154 = vmatpush1.msra.mxu0 0.0
    %1155 = vmatprep.subr.mxu0 0.0
    %1156 = vmatpush1.msra.mxu0 0.0
    %1157 = vmatprep.subr.mxu0 0.0
    %1158 = vmatpush1.msra.mxu0 0.0
    %1159 = vmatprep.subr.mxu0 0.0
    %1160 = vmatpush1.msra.mxu0 0.0
    %1161 = vmatprep.subr.mxu0 0.0
    %1162 = vmatpush1.msra.mxu0 0.0
    %1163 = vmatprep.subr.mxu0 0.0
    %1164 = vmatpush1.msra.mxu0 0.0
    %1165 = vmatprep.subr.mxu0 0.0
    %1166 = vmatpush1.msra.mxu0 0.0
    %1167 = vmatprep.subr.mxu0 0.0
    %1168 = vmatpush1.msra.mxu0 0.0
    %1169 = vmatprep.subr.mxu0 0.0
    %1170 = vmatpush1.msra.mxu0 0.0
    %1171 = vmatprep.subr.mxu0 0.0
    %1172 = vmatpush1.msra.mxu0 0.0
    %1173 = vmatprep.subr.mxu0 0.0
    %1174 = vmatpush1.msra.mxu0 0.0
    %1175 = vmatprep.subr.mxu0 0.0
    %1176 = vmatpush1.msra.mxu0 0.0
    %1177 = vmatprep.subr.mxu0 0.0
    %1178 = vmatpush1.msra.mxu0 0.0
    %1179 = vmatprep.subr.mxu0 0.0
    %1180 = vmatpush1.msra.mxu0 0.0
    %1181 = vmatprep.subr.mxu0 0.0
    %1182 = vmatpush1.msra.mxu0 0.0
    %1183 = vmatprep.mubr.f32.mxu0 0.0
    %1184 = vmatmul.mubr.f32.gmra.mrb[0].mxu0 %v1114
    %v1185 = vpop.f32.mrb[0].mxu0
    %v1186 = vadd.f32 0.0, %v1185
    %v1187 = vpop.f32.mrb[0].mxu0
    %1188 = vmatprep.mubr.f32.mxu0 0.0
    %1189 = vmatmul.mubr.f32.gmra.mrb[0].mxu0 %v1117
    %v1190 = vpop.f32.mrb[0].mxu0
    %v1191 = vadd.f32 0.0, %v1190
    %v1192 = vpop.f32.mrb[0].mxu0
    %1193 = vdwg.mxu0
    %v1195 = vsel %vm238, %v933, 0
    %v1198 = vsel %vm238, %v938, 0
    %1200 = vmatprep.subr.mxu0 0.0
    %1201 = vmatpush1.msra.mxu0 %v1030
    %1202 = vmatprep.subr.mxu0 0.0
    %1203 = vmatpush1.msra.mxu0 0.0
    %1204 = vmatprep.subr.mxu0 0.0
    %1205 = vmatpush1.msra.mxu0 0.0
    %1206 = vmatprep.subr.mxu0 0.0
    %1207 = vmatpush1.msra.mxu0 0.0
    %1208 = vmatprep.subr.mxu0 0.0
    %1209 = vmatpush1.msra.mxu0 0.0
    %1210 = vmatprep.subr.mxu0 0.0
    %1211 = vmatpush1.msra.mxu0 0.0
    %1212 = vmatprep.subr.mxu0 0.0
    %1213 = vmatpush1.msra.mxu0 0.0
    %1214 = vmatprep.subr.mxu0 0.0
    %1215 = vmatpush1.msra.mxu0 0.0
    %1216 = vmatprep.subr.mxu0 0.0
    %1217 = vmatpush1.msra.mxu0 0.0
    %1218 = vmatprep.subr.mxu0 0.0
    %1219 = vmatpush1.msra.mxu0 0.0
    %1220 = vmatprep.subr.mxu0 0.0
    %1221 = vmatpush1.msra.mxu0 0.0
    %1222 = vmatprep.subr.mxu0 0.0
    %1223 = vmatpush1.msra.mxu0 0.0
    %1224 = vmatprep.subr.mxu0 0.0
    %1225 = vmatpush1.msra.mxu0 0.0
    %1226 = vmatprep.subr.mxu0 0.0
    %1227 = vmatpush1.msra.mxu0 0.0
    %1228 = vmatprep.subr.mxu0 0.0
    %1229 = vmatpush1.msra.mxu0 0.0
    %1230 = vmatprep.subr.mxu0 0.0
    %1231 = vmatpush1.msra.mxu0 0.0
    %1232 = vmatprep.subr.mxu0 0.0
    %1233 = vmatpush1.msra.mxu0 0.0
    %1234 = vmatprep.subr.mxu0 0.0
    %1235 = vmatpush1.msra.mxu0 0.0
    %1236 = vmatprep.subr.mxu0 0.0
    %1237 = vmatpush1.msra.mxu0 0.0
    %1238 = vmatprep.subr.mxu0 0.0
    %1239 = vmatpush1.msra.mxu0 0.0
    %1240 = vmatprep.subr.mxu0 0.0
    %1241 = vmatpush1.msra.mxu0 0.0
    %1242 = vmatprep.subr.mxu0 0.0
    %1243 = vmatpush1.msra.mxu0 0.0
    %1244 = vmatprep.subr.mxu0 0.0
    %1245 = vmatpush1.msra.mxu0 0.0
    %1246 = vmatprep.subr.mxu0 0.0
    %1247 = vmatpush1.msra.mxu0 0.0
    %1248 = vmatprep.subr.mxu0 0.0
    %1249 = vmatpush1.msra.mxu0 0.0
    %1250 = vmatprep.subr.mxu0 0.0
    %1251 = vmatpush1.msra.mxu0 0.0
    %1252 = vmatprep.subr.mxu0 0.0
    %1253 = vmatpush1.msra.mxu0 0.0
    %1254 = vmatprep.subr.mxu0 0.0
    %1255 = vmatpush1.msra.mxu0 0.0
    %1256 = vmatprep.subr.mxu0 0.0
    %1257 = vmatpush1.msra.mxu0 0.0
    %1258 = vmatprep.subr.mxu0 0.0
    %1259 = vmatpush1.msra.mxu0 0.0
    %1260 = vmatprep.subr.mxu0 0.0
    %1261 = vmatpush1.msra.mxu0 0.0
    %1262 = vmatprep.subr.mxu0 0.0
    %1263 = vmatpush1.msra.mxu0 0.0
    %1264 = vmatprep.mubr.f32.mxu0 0.0
    %1265 = vmatmul.mubr.f32.gmra.mrb[0].mxu0 %v1195
    %v1266 = vpop.f32.mrb[0].mxu0
    %v1267 = vadd.f32 0.0, %v1266
    %v1268 = vpop.f32.mrb[0].mxu0
    %1269 = vmatprep.mubr.f32.mxu0 0.0
    %1270 = vmatmul.mubr.f32.gmra.mrb[0].mxu0 %v1198
    %v1271 = vpop.f32.mrb[0].mxu0
    %v1272 = vadd.f32 0.0, %v1271
    %v1273 = vpop.f32.mrb[0].mxu0
    %1274 = vdwg.mxu0
    %v1276 = vsel %vm238, %v1020, 0
    %v1279 = vsel %vm238, %v1025, 0
    %1281 = vmatprep.subr.mxu0 0.0
    %1282 = vmatpush1.msra.mxu0 %v1031
    %1283 = vmatprep.subr.mxu0 0.0
    %1284 = vmatpush1.msra.mxu0 0.0
    %1285 = vmatprep.subr.mxu0 0.0
    %1286 = vmatpush1.msra.mxu0 0.0
    %1287 = vmatprep.subr.mxu0 0.0
    %1288 = vmatpush1.msra.mxu0 0.0
    %1289 = vmatprep.subr.mxu0 0.0
    %1290 = vmatpush1.msra.mxu0 0.0
    %1291 = vmatprep.subr.mxu0 0.0
    %1292 = vmatpush1.msra.mxu0 0.0
    %1293 = vmatprep.subr.mxu0 0.0
    %1294 = vmatpush1.msra.mxu0 0.0
    %1295 = vmatprep.subr.mxu0 0.0
    %1296 = vmatpush1.msra.mxu0 0.0
    %1297 = vmatprep.subr.mxu0 0.0
    %1298 = vmatpush1.msra.mxu0 0.0
    %1299 = vmatprep.subr.mxu0 0.0
    %1300 = vmatpush1.msra.mxu0 0.0
    %1301 = vmatprep.subr.mxu0 0.0
    %1302 = vmatpush1.msra.mxu0 0.0
    %1303 = vmatprep.subr.mxu0 0.0
    %1304 = vmatpush1.msra.mxu0 0.0
    %1305 = vmatprep.subr.mxu0 0.0
    %1306 = vmatpush1.msra.mxu0 0.0
    %1307 = vmatprep.subr.mxu0 0.0
    %1308 = vmatpush1.msra.mxu0 0.0
    %1309 = vmatprep.subr.mxu0 0.0
    %1310 = vmatpush1.msra.mxu0 0.0
    %1311 = vmatprep.subr.mxu0 0.0
    %1312 = vmatpush1.msra.mxu0 0.0
    %1313 = vmatprep.subr.mxu0 0.0
    %1314 = vmatpush1.msra.mxu0 0.0
    %1315 = vmatprep.subr.mxu0 0.0
    %1316 = vmatpush1.msra.mxu0 0.0
    %1317 = vmatprep.subr.mxu0 0.0
    %1318 = vmatpush1.msra.mxu0 0.0
    %1319 = vmatprep.subr.mxu0 0.0
    %1320 = vmatpush1.msra.mxu0 0.0
    %1321 = vmatprep.subr.mxu0 0.0
    %1322 = vmatpush1.msra.mxu0 0.0
    %1323 = vmatprep.subr.mxu0 0.0
    %1324 = vmatpush1.msra.mxu0 0.0
    %1325 = vmatprep.subr.mxu0 0.0
    %1326 = vmatpush1.msra.mxu0 0.0
    %1327 = vmatprep.subr.mxu0 0.0
    %1328 = vmatpush1.msra.mxu0 0.0
    %1329 = vmatprep.subr.mxu0 0.0
    %1330 = vmatpush1.msra.mxu0 0.0
    %1331 = vmatprep.subr.mxu0 0.0
    %1332 = vmatpush1.msra.mxu0 0.0
    %1333 = vmatprep.subr.mxu0 0.0
    %1334 = vmatpush1.msra.mxu0 0.0
    %1335 = vmatprep.subr.mxu0 0.0
    %1336 = vmatpush1.msra.mxu0 0.0
    %1337 = vmatprep.subr.mxu0 0.0
    %1338 = vmatpush1.msra.mxu0 0.0
    %1339 = vmatprep.subr.mxu0 0.0
    %1340 = vmatpush1.msra.mxu0 0.0
    %1341 = vmatprep.subr.mxu0 0.0
    %1342 = vmatpush1.msra.mxu0 0.0
    %1343 = vmatprep.subr.mxu0 0.0
    %1344 = vmatpush1.msra.mxu0 0.0
    %1345 = vmatprep.mubr.f32.mxu0 0.0
    %1346 = vmatmul.mubr.f32.gmra.mrb[0].mxu0 %v1276
    %v1347 = vpop.f32.mrb[0].mxu0
    %v1348 = vadd.f32 0.0, %v1347
    %v1349 = vpop.f32.mrb[0].mxu0
    %1350 = vmatprep.mubr.f32.mxu0 0.0
    %1351 = vmatmul.mubr.f32.gmra.mrb[0].mxu0 %v1279
    %v1352 = vpop.f32.mrb[0].mxu0
    %v1353 = vadd.f32 0.0, %v1352
    %v1354 = vpop.f32.mrb[0].mxu0
    %1355 = vdwg.mxu0
    %v1356 = vsel %vm70, %v1105, 0.0
    %v1357 = vsel %vm70, %v1186, 0.0
    %v1358 = vadd.f32 %v1356, %v1357
    %v1359 = vsel %vm70, %v1267, 0.0
    %v1360 = vadd.f32 %v1358, %v1359
    %v1361 = vsel %vm70, %v1348, 0.0
    %v1362 = vadd.f32 %v1360, %v1361
    %v1363 = vsel %vm70, %v1110, 0.0
    %v1364 = vsel %vm70, %v1191, 0.0
    %v1365 = vadd.f32 %v1363, %v1364
    %v1366 = vsel %vm70, %v1272, 0.0
    %v1367 = vadd.f32 %v1365, %v1366
    %v1368 = vsel %vm70, %v1353, 0.0
    %v1369 = vadd.f32 %v1367, %v1368
    %v1370 = vadd.f32 %v64, %v1362
    %v1371 = vadd.f32 %v65, %v1369
    %v1372 = vld [vmem:[%s8] sm:$0x1]
    %v1374 = vlaneseq
    %v1375 = vshrl.u32 %v1374, 7
    %v1376 = vsub.s32 0, %v1375
    %v1377 = vrot.slane %v1372, %v1376
    %v1379 = vadd.f32 %v1370, %v1377
    %v1380 = vadd.f32 %v1371, %v1377
    %v1381 = vld [vmem:[%s9] sm:$0x1]
    %v1382 = vld [vmem:[%s10] sm:$0x1]
    %v1383 = vsel %vm70, %v1379, 0.0
    %1384 = vadd.xlane.f32.xlu0 %v1383
    %v1385 = vpop.xlane.xlu0 %1384
    %v1386 = vsel %vm70, %v1380, 0.0
    %1387 = vadd.xlane.f32.xlu0 %v1386
    %v1388 = vpop.xlane.xlu0 %1387
    %v1389 = vmul.f32 %v1385, %v77
    %v1390 = vmul.f32 %v1388, %v77
    %v1391 = vsub.f32 %v1379, %v1389
    %v1392 = vsub.f32 %v1380, %v1390
    %v1393 = vmul.f32 %v1391, %v1391
    %v1394 = vmul.f32 %v1392, %v1392
    %v1395 = vsel %vm70, %v1393, 0.0
    %1396 = vadd.xlane.f32.xlu0 %v1395
    %v1397 = vpop.xlane.xlu0 %1396
    %v1398 = vsel %vm70, %v1394, 0.0
    %1399 = vadd.xlane.f32.xlu0 %v1398
    %v1400 = vpop.xlane.xlu0 %1399
    %v1401 = vmul.f32 %v1397, %v77
    %v1402 = vmul.f32 %v1400, %v77
    %v1403 = vadd.f32 %v1401, 1e-05
    %v1404 = vadd.f32 %v1402, 1e-05
    %v1405 = vrsqrt.pop %v1403
    %v1406 = vrsqrt.pop %v1404
    %v1407 = vmul.f32 %v1391, %v1405
    %v1408 = vmul.f32 %v1392, %v1406
    %v1410 = vlaneseq
    %v1411 = vshrl.u32 %v1410, 7
    %v1412 = vsub.s32 0, %v1411
    %v1413 = vrot.slane %v1381, %v1412
    %v1415 = vmul.f32 %v1407, %v1413
    %v1416 = vmul.f32 %v1408, %v1413
    %v1418 = vlaneseq
    %v1419 = vshrl.u32 %v1418, 7
    %v1420 = vsub.s32 0, %v1419
    %v1421 = vrot.slane %v1382, %v1420
    %v1423 = vadd.f32 %v1415, %v1421
    %v1424 = vadd.f32 %v1416, %v1421
    %v1425 = vld [vmem:[%s11] sm:$0xff]
    %v1426 = vld [vmem:[%s11 + $0x8] sm:$0xff]
    %v1427 = vld [vmem:[%s11 + $0x10] sm:$0xff]
    %v1428 = vld [vmem:[%s11 + $0x18] sm:$0xff]
    %v1429 = vld [vmem:[%s12] sm:$0x1]
    %v1431 = vlaneseq
    %v1432 = vshrl.u32 %v1431, 7
    %v1433 = vsub.s32 0, %v1432
    %v1434 = vrot.slane %v1429, %v1433
    %v1437 = vsel %vm70, %v1423, 0
    %v1440 = vsel %vm70, %v1424, 0
    %1442 = vmatprep.subr.mxu0 0.0
    %1443 = vmatpush1.msra.mxu0 %v1425
    %1444 = vmatprep.subr.mxu0 0.0
    %1445 = vmatpush1.msra.mxu0 %v1426
    %1446 = vmatprep.subr.mxu0 0.0
    %1447 = vmatpush1.msra.mxu0 %v1427
    %1448 = vmatprep.subr.mxu0 0.0
    %1449 = vmatpush1.msra.mxu0 %v1428
    %1450 = vmatprep.subr.mxu0 0.0
    %1451 = vmatpush1.msra.mxu0 0.0
    %1452 = vmatprep.subr.mxu0 0.0
    %1453 = vmatpush1.msra.mxu0 0.0
    %1454 = vmatprep.subr.mxu0 0.0
    %1455 = vmatpush1.msra.mxu0 0.0
    %1456 = vmatprep.subr.mxu0 0.0
    %1457 = vmatpush1.msra.mxu0 0.0
    %1458 = vmatprep.subr.mxu0 0.0
    %1459 = vmatpush1.msra.mxu0 0.0
    %1460 = vmatprep.subr.mxu0 0.0
    %1461 = vmatpush1.msra.mxu0 0.0
    %1462 = vmatprep.subr.mxu0 0.0
    %1463 = vmatpush1.msra.mxu0 0.0
    %1464 = vmatprep.subr.mxu0 0.0
    %1465 = vmatpush1.msra.mxu0 0.0
    %1466 = vmatprep.subr.mxu0 0.0
    %1467 = vmatpush1.msra.mxu0 0.0
    %1468 = vmatprep.subr.mxu0 0.0
    %1469 = vmatpush1.msra.mxu0 0.0
    %1470 = vmatprep.subr.mxu0 0.0
    %1471 = vmatpush1.msra.mxu0 0.0
    %1472 = vmatprep.subr.mxu0 0.0
    %1473 = vmatpush1.msra.mxu0 0.0
    %1474 = vmatprep.subr.mxu0 0.0
    %1475 = vmatpush1.msra.mxu0 0.0
    %1476 = vmatprep.subr.mxu0 0.0
    %1477 = vmatpush1.msra.mxu0 0.0
    %1478 = vmatprep.subr.mxu0 0.0
    %1479 = vmatpush1.msra.mxu0 0.0
    %1480 = vmatprep.subr.mxu0 0.0
    %1481 = vmatpush1.msra.mxu0 0.0
    %1482 = vmatprep.subr.mxu0 0.0
    %1483 = vmatpush1.msra.mxu0 0.0
    %1484 = vmatprep.subr.mxu0 0.0
    %1485 = vmatpush1.msra.mxu0 0.0
    %1486 = vmatprep.subr.mxu0 0.0
    %1487 = vmatpush1.msra.mxu0 0.0
    %1488 = vmatprep.subr.mxu0 0.0
    %1489 = vmatpush1.msra.mxu0 0.0
    %1490 = vmatprep.subr.mxu0 0.0
    %1491 = vmatpush1.msra.mxu0 0.0
    %1492 = vmatprep.subr.mxu0 0.0
    %1493 = vmatpush1.msra.mxu0 0.0
    %1494 = vmatprep.subr.mxu0 0.0
    %1495 = vmatpush1.msra.mxu0 0.0
    %1496 = vmatprep.subr.mxu0 0.0
    %1497 = vmatpush1.msra.mxu0 0.0
    %1498 = vmatprep.subr.mxu0 0.0
    %1499 = vmatpush1.msra.mxu0 0.0
    %1500 = vmatprep.subr.mxu0 0.0
    %1501 = vmatpush1.msra.mxu0 0.0
    %1502 = vmatprep.subr.mxu0 0.0
    %1503 = vmatpush1.msra.mxu0 0.0
    %1504 = vmatprep.subr.mxu0 0.0
    %1505 = vmatpush1.msra.mxu0 0.0
    %1506 = vmatprep.mubr.f32.mxu0 0.0
    %1507 = vmatmul.mubr.f32.gmra.mrb[0].mxu0 %v1437
    %v1508 = vpop.f32.mrb[0].mxu0
    %v1509 = vadd.f32 %v1434, %v1508
    %v1510 = vpop.f32.mrb[0].mxu0
    %1511 = vmatprep.mubr.f32.mxu0 0.0
    %1512 = vmatmul.mubr.f32.gmra.mrb[0].mxu0 %v1440
    %v1513 = vpop.f32.mrb[0].mxu0
    %v1514 = vadd.f32 %v1434, %v1513
    %v1515 = vpop.f32.mrb[0].mxu0
    %1516 = vdwg.mxu0
    %v1517 = vmul.f32 %v1509, 1.702
    %v1518 = vmul.f32 %v1514, 1.702
    %v1519 = vxor.u32 %v1517, 2147483648
    %v1520 = vxor.u32 %v1518, 2147483648
    %v1521 = vmul.f32 %v1519, 1.442695
    %v1522 = vpow.pop %v1521
    %v1523 = vmul.f32 %v1520, 1.442695
    %v1524 = vpow.pop %v1523
    %v1525 = vadd.f32 %v1522, 1.0
    %v1526 = vadd.f32 %v1524, 1.0
    %v1527 = vrcp.pop %v1525
    %v1528 = vmul.f32 1.0, %v1527
    %v1529 = vrcp.pop %v1526
    %v1530 = vmul.f32 1.0, %v1529
    %v1531 = vmul.f32 %v1509, %v1528
    %v1532 = vmul.f32 %v1514, %v1530
    %v1533 = vld [vmem:[%s13] sm:$0xff]
    %v1534 = vld [vmem:[%s13 + $0x8] sm:$0xff]
    %v1535 = vld [vmem:[%s13 + $0x10] sm:$0xff]
    %v1536 = vld [vmem:[%s13 + $0x18] sm:$0xff]
    %v1537 = vld [vmem:[%s13 + $0x20] sm:$0xff]
    %v1538 = vld [vmem:[%s13 + $0x28] sm:$0xff]
    %v1539 = vld [vmem:[%s13 + $0x30] sm:$0xff]
    %v1540 = vld [vmem:[%s13 + $0x38] sm:$0xff]
    %v1541 = vld [vmem:[%s13 + $0x40] sm:$0xff]
    %v1542 = vld [vmem:[%s13 + $0x48] sm:$0xff]
    %v1543 = vld [vmem:[%s13 + $0x50] sm:$0xff]
    %v1544 = vld [vmem:[%s13 + $0x58] sm:$0xff]
    %v1545 = vld [vmem:[%s13 + $0x60] sm:$0xff]
    %v1546 = vld [vmem:[%s13 + $0x68] sm:$0xff]
    %v1547 = vld [vmem:[%s13 + $0x70] sm:$0xff]
    %v1548 = vld [vmem:[%s13 + $0x78] sm:$0xff]
    %1549 = vmatprep.subr.mxu0 0.0
    %1550 = vmatpush1.msra.mxu0 %v1533
    %1551 = vmatprep.subr.mxu0 0.0
    %1552 = vmatpush1.msra.mxu0 %v1534
    %1553 = vmatprep.subr.mxu0 0.0
    %1554 = vmatpush1.msra.mxu0 %v1535
    %1555 = vmatprep.subr.mxu0 0.0
    %1556 = vmatpush1.msra.mxu0 %v1536
    %1557 = vmatprep.subr.mxu0 0.0
    %1558 = vmatpush1.msra.mxu0 %v1537
    %1559 = vmatprep.subr.mxu0 0.0
    %1560 = vmatpush1.msra.mxu0 %v1538
    %1561 = vmatprep.subr.mxu0 0.0
    %1562 = vmatpush1.msra.mxu0 %v1539
    %1563 = vmatprep.subr.mxu0 0.0
    %1564 = vmatpush1.msra.mxu0 %v1540
    %1565 = vmatprep.subr.mxu0 0.0
    %1566 = vmatpush1.msra.mxu0 %v1541
    %1567 = vmatprep.subr.mxu0 0.0
    %1568 = vmatpush1.msra.mxu0 %v1542
    %1569 = vmatprep.subr.mxu0 0.0
    %1570 = vmatpush1.msra.mxu0 %v1543
    %1571 = vmatprep.subr.mxu0 0.0
    %1572 = vmatpush1.msra.mxu0 %v1544
    %1573 = vmatprep.subr.mxu0 0.0
    %1574 = vmatpush1.msra.mxu0 %v1545
    %1575 = vmatprep.subr.mxu0 0.0
    %1576 = vmatpush1.msra.mxu0 %v1546
    %1577 = vmatprep.subr.mxu0 0.0
    %1578 = vmatpush1.msra.mxu0 %v1547
    %1579 = vmatprep.subr.mxu0 0.0
    %1580 = vmatpush1.msra.mxu0 %v1548
    %1581 = vmatprep.subr.mxu0 0.0
    %1582 = vmatpush1.msra.mxu0 0.0
    %1583 = vmatprep.subr.mxu0 0.0
    %1584 = vmatpush1.msra.mxu0 0.0
    %1585 = vmatprep.subr.mxu0 0.0
    %1586 = vmatpush1.msra.mxu0 0.0
    %1587 = vmatprep.subr.mxu0 0.0
    %1588 = vmatpush1.msra.mxu0 0.0
    %1589 = vmatprep.subr.mxu0 0.0
    %1590 = vmatpush1.msra.mxu0 0.0
    %1591 = vmatprep.subr.mxu0 0.0
    %1592 = vmatpush1.msra.mxu0 0.0
    %1593 = vmatprep.subr.mxu0 0.0
    %1594 = vmatpush1.msra.mxu0 0.0
    %1595 = vmatprep.subr.mxu0 0.0
    %1596 = vmatpush1.msra.mxu0 0.0
    %1597 = vmatprep.subr.mxu0 0.0
    %1598 = vmatpush1.msra.mxu0 0.0
    %1599 = vmatprep.subr.mxu0 0.0
    %1600 = vmatpush1.msra.mxu0 0.0
    %1601 = vmatprep.subr.mxu0 0.0
    %1602 = vmatpush1.msra.mxu0 0.0
    %1603 = vmatprep.subr.mxu0 0.0
    %1604 = vmatpush1.msra.mxu0 0.0
    %1605 = vmatprep.subr.mxu0 0.0
    %1606 = vmatpush1.msra.mxu0 0.0
    %1607 = vmatprep.subr.mxu0 0.0
    %1608 = vmatpush1.msra.mxu0 0.0
    %1609 = vmatprep.subr.mxu0 0.0
    %1610 = vmatpush1.msra.mxu0 0.0
    %1611 = vmatprep.subr.mxu0 0.0
    %1612 = vmatpush1.msra.mxu0 0.0
    %1613 = vmatprep.mubr.f32.mxu0 0.0
    %1614 = vmatmul.mubr.f32.gmra.mrb[0].mxu0 %v1531
    %v1615 = vpop.f32.mrb[0].mxu0
    %v1616 = vadd.f32 0.0, %v1615
    %v1617 = vpop.f32.mrb[0].mxu0
    %1618 = vmatprep.mubr.f32.mxu0 0.0
    %1619 = vmatmul.mubr.f32.gmra.mrb[0].mxu0 %v1532
    %v1620 = vpop.f32.mrb[0].mxu0
    %v1621 = vadd.f32 0.0, %v1620
    %v1622 = vpop.f32.mrb[0].mxu0
    %1623 = vdwg.mxu0
    %v1624 = vadd.f32 %v1379, %v1616
    %v1625 = vadd.f32 %v1380, %v1621
    %v1626 = vld [vmem:[%s14] sm:$0x1]
    %v1628 = vlaneseq
    %v1629 = vshrl.u32 %v1628, 7
    %v1630 = vsub.s32 0, %v1629
    %v1631 = vrot.slane %v1626, %v1630
    %v1633 = vadd.f32 %v1624, %v1631
    %v1634 = vadd.f32 %v1625, %v1631
    %s1635 = scalar_lea.vmem %s3, 1
    %v1636 = vld [vmem:[%s1635] sm:$0x1]
    %s1637 = scalar_lea.vmem %s4, 1
    %v1638 = vld [vmem:[%s1637] sm:$0x1]
    %v1639 = vsel %vm70, %v1633, 0.0
    %1640 = vadd.xlane.f32.xlu0 %v1639
    %v1641 = vpop.xlane.xlu0 %1640
    %v1642 = vsel %vm70, %v1634, 0.0
    %1643 = vadd.xlane.f32.xlu0 %v1642
    %v1644 = vpop.xlane.xlu0 %1643
    %v1645 = vmul.f32 %v1641, %v77
    %v1646 = vmul.f32 %v1644, %v77
    %v1647 = vsub.f32 %v1633, %v1645
    %v1648 = vsub.f32 %v1634, %v1646
    %v1649 = vmul.f32 %v1647, %v1647
    %v1650 = vmul.f32 %v1648, %v1648
    %v1651 = vsel %vm70, %v1649, 0.0
    %1652 = vadd.xlane.f32.xlu0 %v1651
    %v1653 = vpop.xlane.xlu0 %1652
    %v1654 = vsel %vm70, %v1650, 0.0
    %1655 = vadd.xlane.f32.xlu0 %v1654
    %v1656 = vpop.xlane.xlu0 %1655
    %v1657 = vmul.f32 %v1653, %v77
    %v1658 = vmul.f32 %v1656, %v77
    %v1659 = vadd.f32 %v1657, 1e-05
    %v1660 = vadd.f32 %v1658, 1e-05
    %v1661 = vrsqrt.pop %v1659
    %v1662 = vrsqrt.pop %v1660
    %v1663 = vmul.f32 %v1647, %v1661
    %v1664 = vmul.f32 %v1648, %v1662
    %v1666 = vlaneseq
    %v1667 = vshrl.u32 %v1666, 7
    %v1668 = vsub.s32 0, %v1667
    %v1669 = vrot.slane %v1636, %v1668
    %v1671 = vmul.f32 %v1663, %v1669
    %v1672 = vmul.f32 %v1664, %v1669
    %v1674 = vlaneseq
    %v1675 = vshrl.u32 %v1674, 7
    %v1676 = vsub.s32 0, %v1675
    %v1677 = vrot.slane %v1638, %v1676
    %v1679 = vadd.f32 %v1671, %v1677
    %v1680 = vadd.f32 %v1672, %v1677
    %s1681 = scalar_lea.vmem %s5, 32
    %v1682 = vld [vmem:[%s1681] sm:$0xff]
    %v1683 = vld [vmem:[%s1681 + $0x8] sm:$0xff]
    %v1684 = vld [vmem:[%s1681 + $0x10] sm:$0xff]
    %v1685 = vld [vmem:[%s1681 + $0x18] sm:$0xff]
    %s1686 = scalar_lea.vmem %s6, 1
    %v1687 = vld [vmem:[%s1686] sm:$0x1]
    %v1689 = vlaneseq
    %v1690 = vshrl.u32 %v1689, 7
    %v1691 = vsub.s32 0, %v1690
    %v1692 = vrot.slane %v1687, %v1691
    %v1695 = vsel %vm70, %v1679, 0
    %v1698 = vsel %vm70, %v1680, 0
    %1700 = vmatprep.subr.mxu0 0.0
    %1701 = vmatpush1.msra.mxu0 %v1682
    %1702 = vmatprep.subr.mxu0 0.0
    %1703 = vmatpush1.msra.mxu0 %v1683
    %1704 = vmatprep.subr.mxu0 0.0
    %1705 = vmatpush1.msra.mxu0 %v1684
    %1706 = vmatprep.subr.mxu0 0.0
    %1707 = vmatpush1.msra.mxu0 %v1685
    %1708 = vmatprep.subr.mxu0 0.0
    %1709 = vmatpush1.msra.mxu0 0.0
    %1710 = vmatprep.subr.mxu0 0.0
    %1711 = vmatpush1.msra.mxu0 0.0
    %1712 = vmatprep.subr.mxu0 0.0
    %1713 = vmatpush1.msra.mxu0 0.0
    %1714 = vmatprep.subr.mxu0 0.0
    %1715 = vmatpush1.msra.mxu0 0.0
    %1716 = vmatprep.subr.mxu0 0.0
    %1717 = vmatpush1.msra.mxu0 0.0
    %1718 = vmatprep.subr.mxu0 0.0
    %1719 = vmatpush1.msra.mxu0 0.0
    %1720 = vmatprep.subr.mxu0 0.0
    %1721 = vmatpush1.msra.mxu0 0.0
    %1722 = vmatprep.subr.mxu0 0.0
    %1723 = vmatpush1.msra.mxu0 0.0
    %1724 = vmatprep.subr.mxu0 0.0
    %1725 = vmatpush1.msra.mxu0 0.0
    %1726 = vmatprep.subr.mxu0 0.0
    %1727 = vmatpush1.msra.mxu0 0.0
    %1728 = vmatprep.subr.mxu0 0.0
    %1729 = vmatpush1.msra.mxu0 0.0
    %1730 = vmatprep.subr.mxu0 0.0
    %1731 = vmatpush1.msra.mxu0 0.0
    %1732 = vmatprep.subr.mxu0 0.0
    %1733 = vmatpush1.msra.mxu0 0.0
    %1734 = vmatprep.subr.mxu0 0.0
    %1735 = vmatpush1.msra.mxu0 0.0
    %1736 = vmatprep.subr.mxu0 0.0
    %1737 = vmatpush1.msra.mxu0 0.0
    %1738 = vmatprep.subr.mxu0 0.0
    %1739 = vmatpush1.msra.mxu0 0.0
    %1740 = vmatprep.subr.mxu0 0.0
    %1741 = vmatpush1.msra.mxu0 0.0
    %1742 = vmatprep.subr.mxu0 0.0
    %1743 = vmatpush1.msra.mxu0 0.0
    %1744 = vmatprep.subr.mxu0 0.0
    %1745 = vmatpush1.msra.mxu0 0.0
    %1746 = vmatprep.subr.mxu0 0.0
    %1747 = vmatpush1.msra.mxu0 0.0
    %1748 = vmatprep.subr.mxu0 0.0
    %1749 = vmatpush1.msra.mxu0 0.0
    %1750 = vmatprep.subr.mxu0 0.0
    %1751 = vmatpush1.msra.mxu0 0.0
    %1752 = vmatprep.subr.mxu0 0.0
    %1753 = vmatpush1.msra.mxu0 0.0
    %1754 = vmatprep.subr.mxu0 0.0
    %1755 = vmatpush1.msra.mxu0 0.0
    %1756 = vmatprep.subr.mxu0 0.0
    %1757 = vmatpush1.msra.mxu0 0.0
    %1758 = vmatprep.subr.mxu0 0.0
    %1759 = vmatpush1.msra.mxu0 0.0
    %1760 = vmatprep.subr.mxu0 0.0
    %1761 = vmatpush1.msra.mxu0 0.0
    %1762 = vmatprep.subr.mxu0 0.0
    %1763 = vmatpush1.msra.mxu0 0.0
    %1764 = vmatprep.mubr.f32.mxu0 0.0
    %1765 = vmatmul.mubr.f32.gmra.mrb[0].mxu0 %v1695
    %v1766 = vpop.f32.mrb[0].mxu0
    %v1767 = vadd.f32 %v1692, %v1766
    %v1768 = vpop.f32.mrb[0].mxu0
    %1769 = vmatprep.mubr.f32.mxu0 0.0
    %1770 = vmatmul.mubr.f32.gmra.mrb[0].mxu0 %v1698
    %v1771 = vpop.f32.mrb[0].mxu0
    %v1772 = vadd.f32 %v1692, %v1771
    %v1773 = vpop.f32.mrb[0].mxu0
    %1774 = vdwg.mxu0
    %1777 = vrot.lane.b32.xlu0 %v1767, 120
    %v1778 = vpop.permute.xlu0 %1777
    %1779 = vrot.lane.b32.xlu0 %v1772, 120
    %v1780 = vpop.permute.xlu0 %1779
    %1783 = vrot.lane.b32.xlu0 %v1767, 112
    %v1784 = vpop.permute.xlu0 %1783
    %1785 = vrot.lane.b32.xlu0 %v1772, 112
    %v1786 = vpop.permute.xlu0 %1785
    %1789 = vrot.lane.b32.xlu0 %v1767, 104
    %v1790 = vpop.permute.xlu0 %1789
    %1791 = vrot.lane.b32.xlu0 %v1772, 104
    %v1792 = vpop.permute.xlu0 %1791
    %v1795 = vmul.f32 %v1767, 0.35355338
    %v1796 = vmul.f32 %v1772, 0.35355338
    %v1797 = vmul.f32 %v1778, 0.35355338
    %v1798 = vmul.f32 %v1780, 0.35355338
    %v1799 = vmul.f32 %v1784, 0.35355338
    %v1800 = vmul.f32 %v1786, 0.35355338
    %v1801 = vmul.f32 %v1790, 0.35355338
    %v1802 = vmul.f32 %v1792, 0.35355338
    %1803 = vrot.lane.b32.xlu0 %v1767, 96
    %v1804 = vpop.permute.xlu0 %1803
    %1805 = vrot.lane.b32.xlu0 %v1772, 96
    %v1806 = vpop.permute.xlu0 %1805
    %v1808 = vsel %vm238, %v1795, 0
    %v1811 = vsel %vm238, %v1796, 0
    %v1813 = vsel %vm238, %v1804, 0
    %v1815 = vsel %vm238, %v1806, 0
    %1817 = vmatprep.subr.mxu0 0.0
    %1818 = vmatpush1.xpose.msra.mxu0 %v1813
    %1819 = vmatprep.subr.mxu0 0.0
    %1820 = vmatpush1.xpose.msra.mxu0 %v1815
    %1821 = vmatprep.subr.mxu0 0.0
    %1822 = vmatpush1.xpose.msra.mxu0 0.0
    %1823 = vmatprep.subr.mxu0 0.0
    %1824 = vmatpush1.xpose.msra.mxu0 0.0
    %1825 = vmatprep.subr.mxu0 0.0
    %1826 = vmatpush1.xpose.msra.mxu0 0.0
    %1827 = vmatprep.subr.mxu0 0.0
    %1828 = vmatpush1.xpose.msra.mxu0 0.0
    %1829 = vmatprep.subr.mxu0 0.0
    %1830 = vmatpush1.xpose.msra.mxu0 0.0
    %1831 = vmatprep.subr.mxu0 0.0
    %1832 = vmatpush1.xpose.msra.mxu0 0.0
    %1833 = vmatprep.subr.mxu0 0.0
    %1834 = vmatpush1.xpose.msra.mxu0 0.0
    %1835 = vmatprep.subr.mxu0 0.0
    %1836 = vmatpush1.xpose.msra.mxu0 0.0
    %1837 = vmatprep.subr.mxu0 0.0
    %1838 = vmatpush1.xpose.msra.mxu0 0.0
    %1839 = vmatprep.subr.mxu0 0.0
    %1840 = vmatpush1.xpose.msra.mxu0 0.0
    %1841 = vmatprep.subr.mxu0 0.0
    %1842 = vmatpush1.xpose.msra.mxu0 0.0
    %1843 = vmatprep.subr.mxu0 0.0
    %1844 = vmatpush1.xpose.msra.mxu0 0.0
    %1845 = vmatprep.subr.mxu0 0.0
    %1846 = vmatpush1.xpose.msra.mxu0 0.0
    %1847 = vmatprep.subr.mxu0 0.0
    %1848 = vmatpush1.xpose.msra.mxu0 0.0
    %1849 = vmatprep.subr.mxu0 0.0
    %1850 = vmatpush1.xpose.msra.mxu0 0.0
    %1851 = vmatprep.subr.mxu0 0.0
    %1852 = vmatpush1.xpose.msra.mxu0 0.0
    %1853 = vmatprep.subr.mxu0 0.0
    %1854 = vmatpush1.xpose.msra.mxu0 0.0
    %1855 = vmatprep.subr.mxu0 0.0
    %1856 = vmatpush1.xpose.msra.mxu0 0.0
    %1857 = vmatprep.subr.mxu0 0.0
    %1858 = vmatpush1.xpose.msra.mxu0 0.0
    %1859 = vmatprep.subr.mxu0 0.0
    %1860 = vmatpush1.xpose.msra.mxu0 0.0
    %1861 = vmatprep.subr.mxu0 0.0
    %1862 = vmatpush1.xpose.msra.mxu0 0.0
    %1863 = vmatprep.subr.mxu0 0.0
    %1864 = vmatpush1.xpose.msra.mxu0 0.0
    %1865 = vmatprep.subr.mxu0 0.0
    %1866 = vmatpush1.xpose.msra.mxu0 0.0
    %1867 = vmatprep.subr.mxu0 0.0
    %1868 = vmatpush1.xpose.msra.mxu0 0.0
    %1869 = vmatprep.subr.mxu0 0.0
    %1870 = vmatpush1.xpose.msra.mxu0 0.0
    %1871 = vmatprep.subr.mxu0 0.0
    %1872 = vmatpush1.xpose.msra.mxu0 0.0
    %1873 = vmatprep.subr.mxu0 0.0
    %1874 = vmatpush1.xpose.msra.mxu0 0.0
    %1875 = vmatprep.subr.mxu0 0.0
    %1876 = vmatpush1.xpose.msra.mxu0 0.0
    %1877 = vmatprep.subr.mxu0 0.0
    %1878 = vmatpush1.xpose.msra.mxu0 0.0
    %1879 = vmatprep.subr.mxu0 0.0
    %1880 = vmatpush1.xpose.msra.mxu0 0.0
    %1881 = vmatprep.mubr.f32.mxu0 0.0
    %1882 = vmatmul.mubr.f32.gmra.mrb[0].mxu0 %v1808
    %v1883 = vpop.f32.mrb[0].mxu0
    %v1884 = vadd.f32 %v66, %v1883
    %v1885 = vpop.f32.mrb[0].mxu0
    %1886 = vmatprep.mubr.f32.mxu0 0.0
    %1887 = vmatmul.mubr.f32.gmra.mrb[0].mxu0 %v1811
    %v1888 = vpop.f32.mrb[0].mxu0
    %v1889 = vadd.f32 %v67, %v1888
    %v1890 = vpop.f32.mrb[0].mxu0
    %1891 = vdwg.mxu0
    %1892 = vrot.lane.b32.xlu0 %v1778, 96
    %v1893 = vpop.permute.xlu0 %1892
    %1894 = vrot.lane.b32.xlu0 %v1780, 96
    %v1895 = vpop.permute.xlu0 %1894
    %v1897 = vsel %vm238, %v1797, 0
    %v1900 = vsel %vm238, %v1798, 0
    %v1902 = vsel %vm238, %v1893, 0
    %v1904 = vsel %vm238, %v1895, 0
    %1906 = vmatprep.subr.mxu0 0.0
    %1907 = vmatpush1.xpose.msra.mxu0 %v1902
    %1908 = vmatprep.subr.mxu0 0.0
    %1909 = vmatpush1.xpose.msra.mxu0 %v1904
    %1910 = vmatprep.subr.mxu0 0.0
    %1911 = vmatpush1.xpose.msra.mxu0 0.0
    %1912 = vmatprep.subr.mxu0 0.0
    %1913 = vmatpush1.xpose.msra.mxu0 0.0
    %1914 = vmatprep.subr.mxu0 0.0
    %1915 = vmatpush1.xpose.msra.mxu0 0.0
    %1916 = vmatprep.subr.mxu0 0.0
    %1917 = vmatpush1.xpose.msra.mxu0 0.0
    %1918 = vmatprep.subr.mxu0 0.0
    %1919 = vmatpush1.xpose.msra.mxu0 0.0
    %1920 = vmatprep.subr.mxu0 0.0
    %1921 = vmatpush1.xpose.msra.mxu0 0.0
    %1922 = vmatprep.subr.mxu0 0.0
    %1923 = vmatpush1.xpose.msra.mxu0 0.0
    %1924 = vmatprep.subr.mxu0 0.0
    %1925 = vmatpush1.xpose.msra.mxu0 0.0
    %1926 = vmatprep.subr.mxu0 0.0
    %1927 = vmatpush1.xpose.msra.mxu0 0.0
    %1928 = vmatprep.subr.mxu0 0.0
    %1929 = vmatpush1.xpose.msra.mxu0 0.0
    %1930 = vmatprep.subr.mxu0 0.0
    %1931 = vmatpush1.xpose.msra.mxu0 0.0
    %1932 = vmatprep.subr.mxu0 0.0
    %1933 = vmatpush1.xpose.msra.mxu0 0.0
    %1934 = vmatprep.subr.mxu0 0.0
    %1935 = vmatpush1.xpose.msra.mxu0 0.0
    %1936 = vmatprep.subr.mxu0 0.0
    %1937 = vmatpush1.xpose.msra.mxu0 0.0
    %1938 = vmatprep.subr.mxu0 0.0
    %1939 = vmatpush1.xpose.msra.mxu0 0.0
    %1940 = vmatprep.subr.mxu0 0.0
    %1941 = vmatpush1.xpose.msra.mxu0 0.0
    %1942 = vmatprep.subr.mxu0 0.0
    %1943 = vmatpush1.xpose.msra.mxu0 0.0
    %1944 = vmatprep.subr.mxu0 0.0
    %1945 = vmatpush1.xpose.msra.mxu0 0.0
    %1946 = vmatprep.subr.mxu0 0.0
    %1947 = vmatpush1.xpose.msra.mxu0 0.0
    %1948 = vmatprep.subr.mxu0 0.0
    %1949 = vmatpush1.xpose.msra.mxu0 0.0
    %1950 = vmatprep.subr.mxu0 0.0
    %1951 = vmatpush1.xpose.msra.mxu0 0.0
    %1952 = vmatprep.subr.mxu0 0.0
    %1953 = vmatpush1.xpose.msra.mxu0 0.0
    %1954 = vmatprep.subr.mxu0 0.0
    %1955 = vmatpush1.xpose.msra.mxu0 0.0
    %1956 = vmatprep.subr.mxu0 0.0
    %1957 = vmatpush1.xpose.msra.mxu0 0.0
    %1958 = vmatprep.subr.mxu0 0.0
    %1959 = vmatpush1.xpose.msra.mxu0 0.0
    %1960 = vmatprep.subr.mxu0 0.0
    %1961 = vmatpush1.xpose.msra.mxu0 0.0
    %1962 = vmatprep.subr.mxu0 0.0
    %1963 = vmatpush1.xpose.msra.mxu0 0.0
    %1964 = vmatprep.subr.mxu0 0.0
    %1965 = vmatpush1.xpose.msra.mxu0 0.0
    %1966 = vmatprep.subr.mxu0 0.0
    %1967 = vmatpush1.xpose.msra.mxu0 0.0
    %1968 = vmatprep.subr.mxu0 0.0
    %1969 = vmatpush1.xpose.msra.mxu0 0.0
    %1970 = vmatprep.mubr.f32.mxu0 0.0
    %1971 = vmatmul.mubr.f32.gmra.mrb[0].mxu0 %v1897
    %v1972 = vpop.f32.mrb[0].mxu0
    %v1973 = vadd.f32 %v66, %v1972
    %v1974 = vpop.f32.mrb[0].mxu0
    %1975 = vmatprep.mubr.f32.mxu0 0.0
    %1976 = vmatmul.mubr.f32.gmra.mrb[0].mxu0 %v1900
    %v1977 = vpop.f32.mrb[0].mxu0
    %v1978 = vadd.f32 %v67, %v1977
    %v1979 = vpop.f32.mrb[0].mxu0
    %1980 = vdwg.mxu0
    %1981 = vrot.lane.b32.xlu0 %v1784, 96
    %v1982 = vpop.permute.xlu0 %1981
    %1983 = vrot.lane.b32.xlu0 %v1786, 96
    %v1984 = vpop.permute.xlu0 %1983
    %v1986 = vsel %vm238, %v1799, 0
    %v1989 = vsel %vm238, %v1800, 0
    %v1991 = vsel %vm238, %v1982, 0
    %v1993 = vsel %vm238, %v1984, 0
    %1995 = vmatprep.subr.mxu0 0.0
    %1996 = vmatpush1.xpose.msra.mxu0 %v1991
    %1997 = vmatprep.subr.mxu0 0.0
    %1998 = vmatpush1.xpose.msra.mxu0 %v1993
    %1999 = vmatprep.subr.mxu0 0.0
    %2000 = vmatpush1.xpose.msra.mxu0 0.0
    %2001 = vmatprep.subr.mxu0 0.0
    %2002 = vmatpush1.xpose.msra.mxu0 0.0
    %2003 = vmatprep.subr.mxu0 0.0
    %2004 = vmatpush1.xpose.msra.mxu0 0.0
    %2005 = vmatprep.subr.mxu0 0.0
    %2006 = vmatpush1.xpose.msra.mxu0 0.0
    %2007 = vmatprep.subr.mxu0 0.0
    %2008 = vmatpush1.xpose.msra.mxu0 0.0
    %2009 = vmatprep.subr.mxu0 0.0
    %2010 = vmatpush1.xpose.msra.mxu0 0.0
    %2011 = vmatprep.subr.mxu0 0.0
    %2012 = vmatpush1.xpose.msra.mxu0 0.0
    %2013 = vmatprep.subr.mxu0 0.0
    %2014 = vmatpush1.xpose.msra.mxu0 0.0
    %2015 = vmatprep.subr.mxu0 0.0
    %2016 = vmatpush1.xpose.msra.mxu0 0.0
    %2017 = vmatprep.subr.mxu0 0.0
    %2018 = vmatpush1.xpose.msra.mxu0 0.0
    %2019 = vmatprep.subr.mxu0 0.0
    %2020 = vmatpush1.xpose.msra.mxu0 0.0
    %2021 = vmatprep.subr.mxu0 0.0
    %2022 = vmatpush1.xpose.msra.mxu0 0.0
    %2023 = vmatprep.subr.mxu0 0.0
    %2024 = vmatpush1.xpose.msra.mxu0 0.0
    %2025 = vmatprep.subr.mxu0 0.0
    %2026 = vmatpush1.xpose.msra.mxu0 0.0
    %2027 = vmatprep.subr.mxu0 0.0
    %2028 = vmatpush1.xpose.msra.mxu0 0.0
    %2029 = vmatprep.subr.mxu0 0.0
    %2030 = vmatpush1.xpose.msra.mxu0 0.0
    %2031 = vmatprep.subr.mxu0 0.0
    %2032 = vmatpush1.xpose.msra.mxu0 0.0
    %2033 = vmatprep.subr.mxu0 0.0
    %2034 = vmatpush1.xpose.msra.mxu0 0.0
    %2035 = vmatprep.subr.mxu0 0.0
    %2036 = vmatpush1.xpose.msra.mxu0 0.0
    %2037 = vmatprep.subr.mxu0 0.0
    %2038 = vmatpush1.xpose.msra.mxu0 0.0
    %2039 = vmatprep.subr.mxu0 0.0
    %2040 = vmatpush1.xpose.msra.mxu0 0.0
    %2041 = vmatprep.subr.mxu0 0.0
    %2042 = vmatpush1.xpose.msra.mxu0 0.0
    %2043 = vmatprep.subr.mxu0 0.0
    %2044 = vmatpush1.xpose.msra.mxu0 0.0
    %2045 = vmatprep.subr.mxu0 0.0
    %2046 = vmatpush1.xpose.msra.mxu0 0.0
    %2047 = vmatprep.subr.mxu0 0.0
    %2048 = vmatpush1.xpose.msra.mxu0 0.0
    %2049 = vmatprep.subr.mxu0 0.0
    %2050 = vmatpush1.xpose.msra.mxu0 0.0
    %2051 = vmatprep.subr.mxu0 0.0
    %2052 = vmatpush1.xpose.msra.mxu0 0.0
    %2053 = vmatprep.subr.mxu0 0.0
    %2054 = vmatpush1.xpose.msra.mxu0 0.0
    %2055 = vmatprep.subr.mxu0 0.0
    %2056 = vmatpush1.xpose.msra.mxu0 0.0
    %2057 = vmatprep.subr.mxu0 0.0
    %2058 = vmatpush1.xpose.msra.mxu0 0.0
    %2059 = vmatprep.mubr.f32.mxu0 0.0
    %2060 = vmatmul.mubr.f32.gmra.mrb[0].mxu0 %v1986
    %v2061 = vpop.f32.mrb[0].mxu0
    %v2062 = vadd.f32 %v66, %v2061
    %v2063 = vpop.f32.mrb[0].mxu0
    %2064 = vmatprep.mubr.f32.mxu0 0.0
    %2065 = vmatmul.mubr.f32.gmra.mrb[0].mxu0 %v1989
    %v2066 = vpop.f32.mrb[0].mxu0
    %v2067 = vadd.f32 %v67, %v2066
    %v2068 = vpop.f32.mrb[0].mxu0
    %2069 = vdwg.mxu0
    %2070 = vrot.lane.b32.xlu0 %v1790, 96
    %v2071 = vpop.permute.xlu0 %2070
    %2072 = vrot.lane.b32.xlu0 %v1792, 96
    %v2073 = vpop.permute.xlu0 %2072
    %v2075 = vsel %vm238, %v1801, 0
    %v2078 = vsel %vm238, %v1802, 0
    %v2080 = vsel %vm238, %v2071, 0
    %v2082 = vsel %vm238, %v2073, 0
    %2084 = vmatprep.subr.mxu0 0.0
    %2085 = vmatpush1.xpose.msra.mxu0 %v2080
    %2086 = vmatprep.subr.mxu0 0.0
    %2087 = vmatpush1.xpose.msra.mxu0 %v2082
    %2088 = vmatprep.subr.mxu0 0.0
    %2089 = vmatpush1.xpose.msra.mxu0 0.0
    %2090 = vmatprep.subr.mxu0 0.0
    %2091 = vmatpush1.xpose.msra.mxu0 0.0
    %2092 = vmatprep.subr.mxu0 0.0
    %2093 = vmatpush1.xpose.msra.mxu0 0.0
    %2094 = vmatprep.subr.mxu0 0.0
    %2095 = vmatpush1.xpose.msra.mxu0 0.0
    %2096 = vmatprep.subr.mxu0 0.0
    %2097 = vmatpush1.xpose.msra.mxu0 0.0
    %2098 = vmatprep.subr.mxu0 0.0
    %2099 = vmatpush1.xpose.msra.mxu0 0.0
    %2100 = vmatprep.subr.mxu0 0.0
    %2101 = vmatpush1.xpose.msra.mxu0 0.0
    %2102 = vmatprep.subr.mxu0 0.0
    %2103 = vmatpush1.xpose.msra.mxu0 0.0
    %2104 = vmatprep.subr.mxu0 0.0
    %2105 = vmatpush1.xpose.msra.mxu0 0.0
    %2106 = vmatprep.subr.mxu0 0.0
    %2107 = vmatpush1.xpose.msra.mxu0 0.0
    %2108 = vmatprep.subr.mxu0 0.0
    %2109 = vmatpush1.xpose.msra.mxu0 0.0
    %2110 = vmatprep.subr.mxu0 0.0
    %2111 = vmatpush1.xpose.msra.mxu0 0.0
    %2112 = vmatprep.subr.mxu0 0.0
    %2113 = vmatpush1.xpose.msra.mxu0 0.0
    %2114 = vmatprep.subr.mxu0 0.0
    %2115 = vmatpush1.xpose.msra.mxu0 0.0
    %2116 = vmatprep.subr.mxu0 0.0
    %2117 = vmatpush1.xpose.msra.mxu0 0.0
    %2118 = vmatprep.subr.mxu0 0.0
    %2119 = vmatpush1.xpose.msra.mxu0 0.0
    %2120 = vmatprep.subr.mxu0 0.0
    %2121 = vmatpush1.xpose.msra.mxu0 0.0
    %2122 = vmatprep.subr.mxu0 0.0
    %2123 = vmatpush1.xpose.msra.mxu0 0.0
    %2124 = vmatprep.subr.mxu0 0.0
    %2125 = vmatpush1.xpose.msra.mxu0 0.0
    %2126 = vmatprep.subr.mxu0 0.0
    %2127 = vmatpush1.xpose.msra.mxu0 0.0
    %2128 = vmatprep.subr.mxu0 0.0
    %2129 = vmatpush1.xpose.msra.mxu0 0.0
    %2130 = vmatprep.subr.mxu0 0.0
    %2131 = vmatpush1.xpose.msra.mxu0 0.0
    %2132 = vmatprep.subr.mxu0 0.0
    %2133 = vmatpush1.xpose.msra.mxu0 0.0
    %2134 = vmatprep.subr.mxu0 0.0
    %2135 = vmatpush1.xpose.msra.mxu0 0.0
    %2136 = vmatprep.subr.mxu0 0.0
    %2137 = vmatpush1.xpose.msra.mxu0 0.0
    %2138 = vmatprep.subr.mxu0 0.0
    %2139 = vmatpush1.xpose.msra.mxu0 0.0
    %2140 = vmatprep.subr.mxu0 0.0
    %2141 = vmatpush1.xpose.msra.mxu0 0.0
    %2142 = vmatprep.subr.mxu0 0.0
    %2143 = vmatpush1.xpose.msra.mxu0 0.0
    %2144 = vmatprep.subr.mxu0 0.0
    %2145 = vmatpush1.xpose.msra.mxu0 0.0
    %2146 = vmatprep.subr.mxu0 0.0
    %2147 = vmatpush1.xpose.msra.mxu0 0.0
    %2148 = vmatprep.mubr.f32.mxu0 0.0
    %2149 = vmatmul.mubr.f32.gmra.mrb[0].mxu0 %v2075
    %v2150 = vpop.f32.mrb[0].mxu0
    %v2151 = vadd.f32 %v66, %v2150
    %v2152 = vpop.f32.mrb[0].mxu0
    %2153 = vmatprep.mubr.f32.mxu0 0.0
    %2154 = vmatmul.mubr.f32.gmra.mrb[0].mxu0 %v2078
    %v2155 = vpop.f32.mrb[0].mxu0
    %v2156 = vadd.f32 %v67, %v2155
    %v2157 = vpop.f32.mrb[0].mxu0
    %2158 = vdwg.mxu0
    %v2159 = vsel %vm591, %v1884, -inf
    %2160 = vmax.xlane.f32.xlu0 %v2159
    %v2161 = vpop.xlane.xlu0 %2160
    %v2162 = vsel %vm591, %v1889, -inf
    %2163 = vmax.xlane.f32.xlu0 %v2162
    %v2164 = vpop.xlane.xlu0 %2163
    %v2165 = vsel %vm591, %v1973, -inf
    %2166 = vmax.xlane.f32.xlu0 %v2165
    %v2167 = vpop.xlane.xlu0 %2166
    %v2168 = vsel %vm591, %v1978, -inf
    %2169 = vmax.xlane.f32.xlu0 %v2168
    %v2170 = vpop.xlane.xlu0 %2169
    %v2171 = vsel %vm591, %v2062, -inf
    %2172 = vmax.xlane.f32.xlu0 %v2171
    %v2173 = vpop.xlane.xlu0 %2172
    %v2174 = vsel %vm591, %v2067, -inf
    %2175 = vmax.xlane.f32.xlu0 %v2174
    %v2176 = vpop.xlane.xlu0 %2175
    %v2177 = vsel %vm591, %v2151, -inf
    %2178 = vmax.xlane.f32.xlu0 %v2177
    %v2179 = vpop.xlane.xlu0 %2178
    %v2180 = vsel %vm591, %v2156, -inf
    %2181 = vmax.xlane.f32.xlu0 %v2180
    %v2182 = vpop.xlane.xlu0 %2181
    %v2183 = vsub.f32 %v1884, %v2161
    %v2184 = vsub.f32 %v1889, %v2164
    %v2185 = vsub.f32 %v1973, %v2167
    %v2186 = vsub.f32 %v1978, %v2170
    %v2187 = vsub.f32 %v2062, %v2173
    %v2188 = vsub.f32 %v2067, %v2176
    %v2189 = vsub.f32 %v2151, %v2179
    %v2190 = vsub.f32 %v2156, %v2182
    %v2191 = vmul.f32 %v2183, 1.442695
    %v2192 = vpow.pop %v2191
    %v2193 = vmul.f32 %v2184, 1.442695
    %v2194 = vpow.pop %v2193
    %v2195 = vmul.f32 %v2185, 1.442695
    %v2196 = vpow.pop %v2195
    %v2197 = vmul.f32 %v2186, 1.442695
    %v2198 = vpow.pop %v2197
    %v2199 = vmul.f32 %v2187, 1.442695
    %v2200 = vpow.pop %v2199
    %v2201 = vmul.f32 %v2188, 1.442695
    %v2202 = vpow.pop %v2201
    %v2203 = vmul.f32 %v2189, 1.442695
    %v2204 = vpow.pop %v2203
    %v2205 = vmul.f32 %v2190, 1.442695
    %v2206 = vpow.pop %v2205
    %v2207 = vsel %vm591, %v2192, 0.0
    %2208 = vadd.xlane.f32.xlu0 %v2207
    %v2209 = vpop.xlane.xlu0 %2208
    %v2210 = vsel %vm591, %v2194, 0.0
    %2211 = vadd.xlane.f32.xlu0 %v2210
    %v2212 = vpop.xlane.xlu0 %2211
    %v2213 = vsel %vm591, %v2196, 0.0
    %2214 = vadd.xlane.f32.xlu0 %v2213
    %v2215 = vpop.xlane.xlu0 %2214
    %v2216 = vsel %vm591, %v2198, 0.0
    %2217 = vadd.xlane.f32.xlu0 %v2216
    %v2218 = vpop.xlane.xlu0 %2217
    %v2219 = vsel %vm591, %v2200, 0.0
    %2220 = vadd.xlane.f32.xlu0 %v2219
    %v2221 = vpop.xlane.xlu0 %2220
    %v2222 = vsel %vm591, %v2202, 0.0
    %2223 = vadd.xlane.f32.xlu0 %v2222
    %v2224 = vpop.xlane.xlu0 %2223
    %v2225 = vsel %vm591, %v2204, 0.0
    %2226 = vadd.xlane.f32.xlu0 %v2225
    %v2227 = vpop.xlane.xlu0 %2226
    %v2228 = vsel %vm591, %v2206, 0.0
    %2229 = vadd.xlane.f32.xlu0 %v2228
    %v2230 = vpop.xlane.xlu0 %2229
    %v2231 = vrcp.pop %v2209
    %v2232 = vrcp.pop %v2212
    %v2233 = vrcp.pop %v2215
    %v2234 = vrcp.pop %v2218
    %v2235 = vrcp.pop %v2221
    %v2236 = vrcp.pop %v2224
    %v2237 = vrcp.pop %v2227
    %v2238 = vrcp.pop %v2230
    %v2239 = vmul.f32 %v2192, %v2231
    %v2240 = vmul.f32 %v2194, %v2232
    %v2241 = vmul.f32 %v2196, %v2233
    %v2242 = vmul.f32 %v2198, %v2234
    %v2243 = vmul.f32 %v2200, %v2235
    %v2244 = vmul.f32 %v2202, %v2236
    %v2245 = vmul.f32 %v2204, %v2237
    %v2246 = vmul.f32 %v2206, %v2238
    %2247 = vrot.lane.b32.xlu0 %v1767, 64
    %v2248 = vpop.permute.xlu0 %2247
    %2249 = vrot.lane.b32.xlu0 %v1772, 64
    %v2250 = vpop.permute.xlu0 %2249
    %v2254 = vsel %vm591, %v2239, 0
    %v2257 = vsel %vm591, %v2240, 0
    %2259 = vmatprep.subr.mxu0 0.0
    %2260 = vmatpush1.msra.mxu0 %v2248
    %2261 = vmatprep.subr.mxu0 0.0
    %2262 = vmatpush1.msra.mxu0 %v2250
    %2263 = vmatprep.subr.mxu0 0.0
    %2264 = vmatpush1.msra.mxu0 0.0
    %2265 = vmatprep.subr.mxu0 0.0
    %2266 = vmatpush1.msra.mxu0 0.0
    %2267 = vmatprep.subr.mxu0 0.0
    %2268 = vmatpush1.msra.mxu0 0.0
    %2269 = vmatprep.subr.mxu0 0.0
    %2270 = vmatpush1.msra.mxu0 0.0
    %2271 = vmatprep.subr.mxu0 0.0
    %2272 = vmatpush1.msra.mxu0 0.0
    %2273 = vmatprep.subr.mxu0 0.0
    %2274 = vmatpush1.msra.mxu0 0.0
    %2275 = vmatprep.subr.mxu0 0.0
    %2276 = vmatpush1.msra.mxu0 0.0
    %2277 = vmatprep.subr.mxu0 0.0
    %2278 = vmatpush1.msra.mxu0 0.0
    %2279 = vmatprep.subr.mxu0 0.0
    %2280 = vmatpush1.msra.mxu0 0.0
    %2281 = vmatprep.subr.mxu0 0.0
    %2282 = vmatpush1.msra.mxu0 0.0
    %2283 = vmatprep.subr.mxu0 0.0
    %2284 = vmatpush1.msra.mxu0 0.0
    %2285 = vmatprep.subr.mxu0 0.0
    %2286 = vmatpush1.msra.mxu0 0.0
    %2287 = vmatprep.subr.mxu0 0.0
    %2288 = vmatpush1.msra.mxu0 0.0
    %2289 = vmatprep.subr.mxu0 0.0
    %2290 = vmatpush1.msra.mxu0 0.0
    %2291 = vmatprep.subr.mxu0 0.0
    %2292 = vmatpush1.msra.mxu0 0.0
    %2293 = vmatprep.subr.mxu0 0.0
    %2294 = vmatpush1.msra.mxu0 0.0
    %2295 = vmatprep.subr.mxu0 0.0
    %2296 = vmatpush1.msra.mxu0 0.0
    %2297 = vmatprep.subr.mxu0 0.0
    %2298 = vmatpush1.msra.mxu0 0.0
    %2299 = vmatprep.subr.mxu0 0.0
    %2300 = vmatpush1.msra.mxu0 0.0
    %2301 = vmatprep.subr.mxu0 0.0
    %2302 = vmatpush1.msra.mxu0 0.0
    %2303 = vmatprep.subr.mxu0 0.0
    %2304 = vmatpush1.msra.mxu0 0.0
    %2305 = vmatprep.subr.mxu0 0.0
    %2306 = vmatpush1.msra.mxu0 0.0
    %2307 = vmatprep.subr.mxu0 0.0
    %2308 = vmatpush1.msra.mxu0 0.0
    %2309 = vmatprep.subr.mxu0 0.0
    %2310 = vmatpush1.msra.mxu0 0.0
    %2311 = vmatprep.subr.mxu0 0.0
    %2312 = vmatpush1.msra.mxu0 0.0
    %2313 = vmatprep.subr.mxu0 0.0
    %2314 = vmatpush1.msra.mxu0 0.0
    %2315 = vmatprep.subr.mxu0 0.0
    %2316 = vmatpush1.msra.mxu0 0.0
    %2317 = vmatprep.subr.mxu0 0.0
    %2318 = vmatpush1.msra.mxu0 0.0
    %2319 = vmatprep.subr.mxu0 0.0
    %2320 = vmatpush1.msra.mxu0 0.0
    %2321 = vmatprep.subr.mxu0 0.0
    %2322 = vmatpush1.msra.mxu0 0.0
    %2323 = vmatprep.mubr.f32.mxu0 0.0
    %2324 = vmatmul.mubr.f32.gmra.mrb[0].mxu0 %v2254
    %v2325 = vpop.f32.mrb[0].mxu0
    %v2326 = vadd.f32 0.0, %v2325
    %v2327 = vpop.f32.mrb[0].mxu0
    %2328 = vmatprep.mubr.f32.mxu0 0.0
    %2329 = vmatmul.mubr.f32.gmra.mrb[0].mxu0 %v2257
    %v2330 = vpop.f32.mrb[0].mxu0
    %v2331 = vadd.f32 0.0, %v2330
    %v2332 = vpop.f32.mrb[0].mxu0
    %2333 = vdwg.mxu0
    %2334 = vrot.lane.b32.xlu0 %v1778, 64
    %v2335 = vpop.permute.xlu0 %2334
    %2336 = vrot.lane.b32.xlu0 %v1780, 64
    %v2337 = vpop.permute.xlu0 %2336
    %v2341 = vsel %vm591, %v2241, 0
    %v2344 = vsel %vm591, %v2242, 0
    %2346 = vmatprep.subr.mxu0 0.0
    %2347 = vmatpush1.msra.mxu0 %v2335
    %2348 = vmatprep.subr.mxu0 0.0
    %2349 = vmatpush1.msra.mxu0 %v2337
    %2350 = vmatprep.subr.mxu0 0.0
    %2351 = vmatpush1.msra.mxu0 0.0
    %2352 = vmatprep.subr.mxu0 0.0
    %2353 = vmatpush1.msra.mxu0 0.0
    %2354 = vmatprep.subr.mxu0 0.0
    %2355 = vmatpush1.msra.mxu0 0.0
    %2356 = vmatprep.subr.mxu0 0.0
    %2357 = vmatpush1.msra.mxu0 0.0
    %2358 = vmatprep.subr.mxu0 0.0
    %2359 = vmatpush1.msra.mxu0 0.0
    %2360 = vmatprep.subr.mxu0 0.0
    %2361 = vmatpush1.msra.mxu0 0.0
    %2362 = vmatprep.subr.mxu0 0.0
    %2363 = vmatpush1.msra.mxu0 0.0
    %2364 = vmatprep.subr.mxu0 0.0
    %2365 = vmatpush1.msra.mxu0 0.0
    %2366 = vmatprep.subr.mxu0 0.0
    %2367 = vmatpush1.msra.mxu0 0.0
    %2368 = vmatprep.subr.mxu0 0.0
    %2369 = vmatpush1.msra.mxu0 0.0
    %2370 = vmatprep.subr.mxu0 0.0
    %2371 = vmatpush1.msra.mxu0 0.0
    %2372 = vmatprep.subr.mxu0 0.0
    %2373 = vmatpush1.msra.mxu0 0.0
    %2374 = vmatprep.subr.mxu0 0.0
    %2375 = vmatpush1.msra.mxu0 0.0
    %2376 = vmatprep.subr.mxu0 0.0
    %2377 = vmatpush1.msra.mxu0 0.0
    %2378 = vmatprep.subr.mxu0 0.0
    %2379 = vmatpush1.msra.mxu0 0.0
    %2380 = vmatprep.subr.mxu0 0.0
    %2381 = vmatpush1.msra.mxu0 0.0
    %2382 = vmatprep.subr.mxu0 0.0
    %2383 = vmatpush1.msra.mxu0 0.0
    %2384 = vmatprep.subr.mxu0 0.0
    %2385 = vmatpush1.msra.mxu0 0.0
    %2386 = vmatprep.subr.mxu0 0.0
    %2387 = vmatpush1.msra.mxu0 0.0
    %2388 = vmatprep.subr.mxu0 0.0
    %2389 = vmatpush1.msra.mxu0 0.0
    %2390 = vmatprep.subr.mxu0 0.0
    %2391 = vmatpush1.msra.mxu0 0.0
    %2392 = vmatprep.subr.mxu0 0.0
    %2393 = vmatpush1.msra.mxu0 0.0
    %2394 = vmatprep.subr.mxu0 0.0
    %2395 = vmatpush1.msra.mxu0 0.0
    %2396 = vmatprep.subr.mxu0 0.0
    %2397 = vmatpush1.msra.mxu0 0.0
    %2398 = vmatprep.subr.mxu0 0.0
    %2399 = vmatpush1.msra.mxu0 0.0
    %2400 = vmatprep.subr.mxu0 0.0
    %2401 = vmatpush1.msra.mxu0 0.0
    %2402 = vmatprep.subr.mxu0 0.0
    %2403 = vmatpush1.msra.mxu0 0.0
    %2404 = vmatprep.subr.mxu0 0.0
    %2405 = vmatpush1.msra.mxu0 0.0
    %2406 = vmatprep.subr.mxu0 0.0
    %2407 = vmatpush1.msra.mxu0 0.0
    %2408 = vmatprep.subr.mxu0 0.0
    %2409 = vmatpush1.msra.mxu0 0.0
    %2410 = vmatprep.mubr.f32.mxu0 0.0
    %2411 = vmatmul.mubr.f32.gmra.mrb[0].mxu0 %v2341
    %v2412 = vpop.f32.mrb[0].mxu0
    %v2413 = vadd.f32 0.0, %v2412
    %v2414 = vpop.f32.mrb[0].mxu0
    %2415 = vmatprep.mubr.f32.mxu0 0.0
    %2416 = vmatmul.mubr.f32.gmra.mrb[0].mxu0 %v2344
    %v2417 = vpop.f32.mrb[0].mxu0
    %v2418 = vadd.f32 0.0, %v2417
    %v2419 = vpop.f32.mrb[0].mxu0
    %2420 = vdwg.mxu0
    %2421 = vrot.lane.b32.xlu0 %v1784, 64
    %v2422 = vpop.permute.xlu0 %2421
    %2423 = vrot.lane.b32.xlu0 %v1786, 64
    %v2424 = vpop.permute.xlu0 %2423
    %v2428 = vsel %vm591, %v2243, 0
    %v2431 = vsel %vm591, %v2244, 0
    %2433 = vmatprep.subr.mxu0 0.0
    %2434 = vmatpush1.msra.mxu0 %v2422
    %2435 = vmatprep.subr.mxu0 0.0
    %2436 = vmatpush1.msra.mxu0 %v2424
    %2437 = vmatprep.subr.mxu0 0.0
    %2438 = vmatpush1.msra.mxu0 0.0
    %2439 = vmatprep.subr.mxu0 0.0
    %2440 = vmatpush1.msra.mxu0 0.0
    %2441 = vmatprep.subr.mxu0 0.0
    %2442 = vmatpush1.msra.mxu0 0.0
    %2443 = vmatprep.subr.mxu0 0.0
    %2444 = vmatpush1.msra.mxu0 0.0
    %2445 = vmatprep.subr.mxu0 0.0
    %2446 = vmatpush1.msra.mxu0 0.0
    %2447 = vmatprep.subr.mxu0 0.0
    %2448 = vmatpush1.msra.mxu0 0.0
    %2449 = vmatprep.subr.mxu0 0.0
    %2450 = vmatpush1.msra.mxu0 0.0
    %2451 = vmatprep.subr.mxu0 0.0
    %2452 = vmatpush1.msra.mxu0 0.0
    %2453 = vmatprep.subr.mxu0 0.0
    %2454 = vmatpush1.msra.mxu0 0.0
    %2455 = vmatprep.subr.mxu0 0.0
    %2456 = vmatpush1.msra.mxu0 0.0
    %2457 = vmatprep.subr.mxu0 0.0
    %2458 = vmatpush1.msra.mxu0 0.0
    %2459 = vmatprep.subr.mxu0 0.0
    %2460 = vmatpush1.msra.mxu0 0.0
    %2461 = vmatprep.subr.mxu0 0.0
    %2462 = vmatpush1.msra.mxu0 0.0
    %2463 = vmatprep.subr.mxu0 0.0
    %2464 = vmatpush1.msra.mxu0 0.0
    %2465 = vmatprep.subr.mxu0 0.0
    %2466 = vmatpush1.msra.mxu0 0.0
    %2467 = vmatprep.subr.mxu0 0.0
    %2468 = vmatpush1.msra.mxu0 0.0
    %2469 = vmatprep.subr.mxu0 0.0
    %2470 = vmatpush1.msra.mxu0 0.0
    %2471 = vmatprep.subr.mxu0 0.0
    %2472 = vmatpush1.msra.mxu0 0.0
    %2473 = vmatprep.subr.mxu0 0.0
    %2474 = vmatpush1.msra.mxu0 0.0
    %2475 = vmatprep.subr.mxu0 0.0
    %2476 = vmatpush1.msra.mxu0 0.0
    %2477 = vmatprep.subr.mxu0 0.0
    %2478 = vmatpush1.msra.mxu0 0.0
    %2479 = vmatprep.subr.mxu0 0.0
    %2480 = vmatpush1.msra.mxu0 0.0
    %2481 = vmatprep.subr.mxu0 0.0
    %2482 = vmatpush1.msra.mxu0 0.0
    %2483 = vmatprep.subr.mxu0 0.0
    %2484 = vmatpush1.msra.mxu0 0.0
    %2485 = vmatprep.subr.mxu0 0.0
    %2486 = vmatpush1.msra.mxu0 0.0
    %2487 = vmatprep.subr.mxu0 0.0
    %2488 = vmatpush1.msra.mxu0 0.0
    %2489 = vmatprep.subr.mxu0 0.0
    %2490 = vmatpush1.msra.mxu0 0.0
    %2491 = vmatprep.subr.mxu0 0.0
    %2492 = vmatpush1.msra.mxu0 0.0
    %2493 = vmatprep.subr.mxu0 0.0
    %2494 = vmatpush1.msra.mxu0 0.0
    %2495 = vmatprep.subr.mxu0 0.0
    %2496 = vmatpush1.msra.mxu0 0.0
    %2497 = vmatprep.mubr.f32.mxu0 0.0
    %2498 = vmatmul.mubr.f32.gmra.mrb[0].mxu0 %v2428
    %v2499 = vpop.f32.mrb[0].mxu0
    %v2500 = vadd.f32 0.0, %v2499
    %v2501 = vpop.f32.mrb[0].mxu0
    %2502 = vmatprep.mubr.f32.mxu0 0.0
    %2503 = vmatmul.mubr.f32.gmra.mrb[0].mxu0 %v2431
    %v2504 = vpop.f32.mrb[0].mxu0
    %v2505 = vadd.f32 0.0, %v2504
    %v2506 = vpop.f32.mrb[0].mxu0
    %2507 = vdwg.mxu0
    %2508 = vrot.lane.b32.xlu0 %v1790, 64
    %v2509 = vpop.permute.xlu0 %2508
    %2510 = vrot.lane.b32.xlu0 %v1792, 64
    %v2511 = vpop.permute.xlu0 %2510
    %v2515 = vsel %vm591, %v2245, 0
    %v2518 = vsel %vm591, %v2246, 0
    %2520 = vmatprep.subr.mxu0 0.0
    %2521 = vmatpush1.msra.mxu0 %v2509
    %2522 = vmatprep.subr.mxu0 0.0
    %2523 = vmatpush1.msra.mxu0 %v2511
    %2524 = vmatprep.subr.mxu0 0.0
    %2525 = vmatpush1.msra.mxu0 0.0
    %2526 = vmatprep.subr.mxu0 0.0
    %2527 = vmatpush1.msra.mxu0 0.0
    %2528 = vmatprep.subr.mxu0 0.0
    %2529 = vmatpush1.msra.mxu0 0.0
    %2530 = vmatprep.subr.mxu0 0.0
    %2531 = vmatpush1.msra.mxu0 0.0
    %2532 = vmatprep.subr.mxu0 0.0
    %2533 = vmatpush1.msra.mxu0 0.0
    %2534 = vmatprep.subr.mxu0 0.0
    %2535 = vmatpush1.msra.mxu0 0.0
    %2536 = vmatprep.subr.mxu0 0.0
    %2537 = vmatpush1.msra.mxu0 0.0
    %2538 = vmatprep.subr.mxu0 0.0
    %2539 = vmatpush1.msra.mxu0 0.0
    %2540 = vmatprep.subr.mxu0 0.0
    %2541 = vmatpush1.msra.mxu0 0.0
    %2542 = vmatprep.subr.mxu0 0.0
    %2543 = vmatpush1.msra.mxu0 0.0
    %2544 = vmatprep.subr.mxu0 0.0
    %2545 = vmatpush1.msra.mxu0 0.0
    %2546 = vmatprep.subr.mxu0 0.0
    %2547 = vmatpush1.msra.mxu0 0.0
    %2548 = vmatprep.subr.mxu0 0.0
    %2549 = vmatpush1.msra.mxu0 0.0
    %2550 = vmatprep.subr.mxu0 0.0
    %2551 = vmatpush1.msra.mxu0 0.0
    %2552 = vmatprep.subr.mxu0 0.0
    %2553 = vmatpush1.msra.mxu0 0.0
    %2554 = vmatprep.subr.mxu0 0.0
    %2555 = vmatpush1.msra.mxu0 0.0
    %2556 = vmatprep.subr.mxu0 0.0
    %2557 = vmatpush1.msra.mxu0 0.0
    %2558 = vmatprep.subr.mxu0 0.0
    %2559 = vmatpush1.msra.mxu0 0.0
    %2560 = vmatprep.subr.mxu0 0.0
    %2561 = vmatpush1.msra.mxu0 0.0
    %2562 = vmatprep.subr.mxu0 0.0
    %2563 = vmatpush1.msra.mxu0 0.0
    %2564 = vmatprep.subr.mxu0 0.0
    %2565 = vmatpush1.msra.mxu0 0.0
    %2566 = vmatprep.subr.mxu0 0.0
    %2567 = vmatpush1.msra.mxu0 0.0
    %2568 = vmatprep.subr.mxu0 0.0
    %2569 = vmatpush1.msra.mxu0 0.0
    %2570 = vmatprep.subr.mxu0 0.0
    %2571 = vmatpush1.msra.mxu0 0.0
    %2572 = vmatprep.subr.mxu0 0.0
    %2573 = vmatpush1.msra.mxu0 0.0
    %2574 = vmatprep.subr.mxu0 0.0
    %2575 = vmatpush1.msra.mxu0 0.0
    %2576 = vmatprep.subr.mxu0 0.0
    %2577 = vmatpush1.msra.mxu0 0.0
    %2578 = vmatprep.subr.mxu0 0.0
    %2579 = vmatpush1.msra.mxu0 0.0
    %2580 = vmatprep.subr.mxu0 0.0
    %2581 = vmatpush1.msra.mxu0 0.0
    %2582 = vmatprep.subr.mxu0 0.0
    %2583 = vmatpush1.msra.mxu0 0.0
    %2584 = vmatprep.mubr.f32.mxu0 0.0
    %2585 = vmatmul.mubr.f32.gmra.mrb[0].mxu0 %v2515
    %v2586 = vpop.f32.mrb[0].mxu0
    %v2587 = vadd.f32 0.0, %v2586
    %v2588 = vpop.f32.mrb[0].mxu0
    %2589 = vmatprep.mubr.f32.mxu0 0.0
    %2590 = vmatmul.mubr.f32.gmra.mrb[0].mxu0 %v2518
    %v2591 = vpop.f32.mrb[0].mxu0
    %v2592 = vadd.f32 0.0, %v2591
    %v2593 = vpop.f32.mrb[0].mxu0
    %2594 = vdwg.mxu0
    %s2595 = scalar_lea.vmem %s7, 32
    %v2596 = vld [vmem:[%s2595] sm:$0xff]
    %v2597 = vld [vmem:[%s2595 + $0x8] sm:$0xff]
    %v2598 = vld [vmem:[%s2595 + $0x10] sm:$0xff]
    %v2599 = vld [vmem:[%s2595 + $0x18] sm:$0xff]
    %v2601 = vsel %vm238, %v2326, 0
    %v2604 = vsel %vm238, %v2331, 0
    %2606 = vmatprep.subr.mxu0 0.0
    %2607 = vmatpush1.msra.mxu0 %v2596
    %2608 = vmatprep.subr.mxu0 0.0
    %2609 = vmatpush1.msra.mxu0 0.0
    %2610 = vmatprep.subr.mxu0 0.0
    %2611 = vmatpush1.msra.mxu0 0.0
    %2612 = vmatprep.subr.mxu0 0.0
    %2613 = vmatpush1.msra.mxu0 0.0
    %2614 = vmatprep.subr.mxu0 0.0
    %2615 = vmatpush1.msra.mxu0 0.0
    %2616 = vmatprep.subr.mxu0 0.0
    %2617 = vmatpush1.msra.mxu0 0.0
    %2618 = vmatprep.subr.mxu0 0.0
    %2619 = vmatpush1.msra.mxu0 0.0
    %2620 = vmatprep.subr.mxu0 0.0
    %2621 = vmatpush1.msra.mxu0 0.0
    %2622 = vmatprep.subr.mxu0 0.0
    %2623 = vmatpush1.msra.mxu0 0.0
    %2624 = vmatprep.subr.mxu0 0.0
    %2625 = vmatpush1.msra.mxu0 0.0
    %2626 = vmatprep.subr.mxu0 0.0
    %2627 = vmatpush1.msra.mxu0 0.0
    %2628 = vmatprep.subr.mxu0 0.0
    %2629 = vmatpush1.msra.mxu0 0.0
    %2630 = vmatprep.subr.mxu0 0.0
    %2631 = vmatpush1.msra.mxu0 0.0
    %2632 = vmatprep.subr.mxu0 0.0
    %2633 = vmatpush1.msra.mxu0 0.0
    %2634 = vmatprep.subr.mxu0 0.0
    %2635 = vmatpush1.msra.mxu0 0.0
    %2636 = vmatprep.subr.mxu0 0.0
    %2637 = vmatpush1.msra.mxu0 0.0
    %2638 = vmatprep.subr.mxu0 0.0
    %2639 = vmatpush1.msra.mxu0 0.0
    %2640 = vmatprep.subr.mxu0 0.0
    %2641 = vmatpush1.msra.mxu0 0.0
    %2642 = vmatprep.subr.mxu0 0.0
    %2643 = vmatpush1.msra.mxu0 0.0
    %2644 = vmatprep.subr.mxu0 0.0
    %2645 = vmatpush1.msra.mxu0 0.0
    %2646 = vmatprep.subr.mxu0 0.0
    %2647 = vmatpush1.msra.mxu0 0.0
    %2648 = vmatprep.subr.mxu0 0.0
    %2649 = vmatpush1.msra.mxu0 0.0
    %2650 = vmatprep.subr.mxu0 0.0
    %2651 = vmatpush1.msra.mxu0 0.0
    %2652 = vmatprep.subr.mxu0 0.0
    %2653 = vmatpush1.msra.mxu0 0.0
    %2654 = vmatprep.subr.mxu0 0.0
    %2655 = vmatpush1.msra.mxu0 0.0
    %2656 = vmatprep.subr.mxu0 0.0
    %2657 = vmatpush1.msra.mxu0 0.0
    %2658 = vmatprep.subr.mxu0 0.0
    %2659 = vmatpush1.msra.mxu0 0.0
    %2660 = vmatprep.subr.mxu0 0.0
    %2661 = vmatpush1.msra.mxu0 0.0
    %2662 = vmatprep.subr.mxu0 0.0
    %2663 = vmatpush1.msra.mxu0 0.0
    %2664 = vmatprep.subr.mxu0 0.0
    %2665 = vmatpush1.msra.mxu0 0.0
    %2666 = vmatprep.subr.mxu0 0.0
    %2667 = vmatpush1.msra.mxu0 0.0
    %2668 = vmatprep.subr.mxu0 0.0
    %2669 = vmatpush1.msra.mxu0 0.0
    %2670 = vmatprep.mubr.f32.mxu0 0.0
    %2671 = vmatmul.mubr.f32.gmra.mrb[0].mxu0 %v2601
    %v2672 = vpop.f32.mrb[0].mxu0
    %v2673 = vadd.f32 0.0, %v2672
    %v2674 = vpop.f32.mrb[0].mxu0
    %2675 = vmatprep.mubr.f32.mxu0 0.0
    %2676 = vmatmul.mubr.f32.gmra.mrb[0].mxu0 %v2604
    %v2677 = vpop.f32.mrb[0].mxu0
    %v2678 = vadd.f32 0.0, %v2677
    %v2679 = vpop.f32.mrb[0].mxu0
    %2680 = vdwg.mxu0
    %v2682 = vsel %vm238, %v2413, 0
    %v2685 = vsel %vm238, %v2418, 0
    %2687 = vmatprep.subr.mxu0 0.0
    %2688 = vmatpush1.msra.mxu0 %v2597
    %2689 = vmatprep.subr.mxu0 0.0
    %2690 = vmatpush1.msra.mxu0 0.0
    %2691 = vmatprep.subr.mxu0 0.0
    %2692 = vmatpush1.msra.mxu0 0.0
    %2693 = vmatprep.subr.mxu0 0.0
    %2694 = vmatpush1.msra.mxu0 0.0
    %2695 = vmatprep.subr.mxu0 0.0
    %2696 = vmatpush1.msra.mxu0 0.0
    %2697 = vmatprep.subr.mxu0 0.0
    %2698 = vmatpush1.msra.mxu0 0.0
    %2699 = vmatprep.subr.mxu0 0.0
    %2700 = vmatpush1.msra.mxu0 0.0
    %2701 = vmatprep.subr.mxu0 0.0
    %2702 = vmatpush1.msra.mxu0 0.0
    %2703 = vmatprep.subr.mxu0 0.0
    %2704 = vmatpush1.msra.mxu0 0.0
    %2705 = vmatprep.subr.mxu0 0.0
    %2706 = vmatpush1.msra.mxu0 0.0
    %2707 = vmatprep.subr.mxu0 0.0
    %2708 = vmatpush1.msra.mxu0 0.0
    %2709 = vmatprep.subr.mxu0 0.0
    %2710 = vmatpush1.msra.mxu0 0.0
    %2711 = vmatprep.subr.mxu0 0.0
    %2712 = vmatpush1.msra.mxu0 0.0
    %2713 = vmatprep.subr.mxu0 0.0
    %2714 = vmatpush1.msra.mxu0 0.0
    %2715 = vmatprep.subr.mxu0 0.0
    %2716 = vmatpush1.msra.mxu0 0.0
    %2717 = vmatprep.subr.mxu0 0.0
    %2718 = vmatpush1.msra.mxu0 0.0
    %2719 = vmatprep.subr.mxu0 0.0
    %2720 = vmatpush1.msra.mxu0 0.0
    %2721 = vmatprep.subr.mxu0 0.0
    %2722 = vmatpush1.msra.mxu0 0.0
    %2723 = vmatprep.subr.mxu0 0.0
    %2724 = vmatpush1.msra.mxu0 0.0
    %2725 = vmatprep.subr.mxu0 0.0
    %2726 = vmatpush1.msra.mxu0 0.0
    %2727 = vmatprep.subr.mxu0 0.0
    %2728 = vmatpush1.msra.mxu0 0.0
    %2729 = vmatprep.subr.mxu0 0.0
    %2730 = vmatpush1.msra.mxu0 0.0
    %2731 = vmatprep.subr.mxu0 0.0
    %2732 = vmatpush1.msra.mxu0 0.0
    %2733 = vmatprep.subr.mxu0 0.0
    %2734 = vmatpush1.msra.mxu0 0.0
    %2735 = vmatprep.subr.mxu0 0.0
    %2736 = vmatpush1.msra.mxu0 0.0
    %2737 = vmatprep.subr.mxu0 0.0
    %2738 = vmatpush1.msra.mxu0 0.0
    %2739 = vmatprep.subr.mxu0 0.0
    %2740 = vmatpush1.msra.mxu0 0.0
    %2741 = vmatprep.subr.mxu0 0.0
    %2742 = vmatpush1.msra.mxu0 0.0
    %2743 = vmatprep.subr.mxu0 0.0
    %2744 = vmatpush1.msra.mxu0 0.0
    %2745 = vmatprep.subr.mxu0 0.0
    %2746 = vmatpush1.msra.mxu0 0.0
    %2747 = vmatprep.subr.mxu0 0.0
    %2748 = vmatpush1.msra.mxu0 0.0
    %2749 = vmatprep.subr.mxu0 0.0
    %2750 = vmatpush1.msra.mxu0 0.0
    %2751 = vmatprep.mubr.f32.mxu0 0.0
    %2752 = vmatmul.mubr.f32.gmra.mrb[0].mxu0 %v2682
    %v2753 = vpop.f32.mrb[0].mxu0
    %v2754 = vadd.f32 0.0, %v2753
    %v2755 = vpop.f32.mrb[0].mxu0
    %2756 = vmatprep.mubr.f32.mxu0 0.0
    %2757 = vmatmul.mubr.f32.gmra.mrb[0].mxu0 %v2685
    %v2758 = vpop.f32.mrb[0].mxu0
    %v2759 = vadd.f32 0.0, %v2758
    %v2760 = vpop.f32.mrb[0].mxu0
    %2761 = vdwg.mxu0
    %v2763 = vsel %vm238, %v2500, 0
    %v2766 = vsel %vm238, %v2505, 0
    %2768 = vmatprep.subr.mxu0 0.0
    %2769 = vmatpush1.msra.mxu0 %v2598
    %2770 = vmatprep.subr.mxu0 0.0
    %2771 = vmatpush1.msra.mxu0 0.0
    %2772 = vmatprep.subr.mxu0 0.0
    %2773 = vmatpush1.msra.mxu0 0.0
    %2774 = vmatprep.subr.mxu0 0.0
    %2775 = vmatpush1.msra.mxu0 0.0
    %2776 = vmatprep.subr.mxu0 0.0
    %2777 = vmatpush1.msra.mxu0 0.0
    %2778 = vmatprep.subr.mxu0 0.0
    %2779 = vmatpush1.msra.mxu0 0.0
    %2780 = vmatprep.subr.mxu0 0.0
    %2781 = vmatpush1.msra.mxu0 0.0
    %2782 = vmatprep.subr.mxu0 0.0
    %2783 = vmatpush1.msra.mxu0 0.0
    %2784 = vmatprep.subr.mxu0 0.0
    %2785 = vmatpush1.msra.mxu0 0.0
    %2786 = vmatprep.subr.mxu0 0.0
    %2787 = vmatpush1.msra.mxu0 0.0
    %2788 = vmatprep.subr.mxu0 0.0
    %2789 = vmatpush1.msra.mxu0 0.0
    %2790 = vmatprep.subr.mxu0 0.0
    %2791 = vmatpush1.msra.mxu0 0.0
    %2792 = vmatprep.subr.mxu0 0.0
    %2793 = vmatpush1.msra.mxu0 0.0
    %2794 = vmatprep.subr.mxu0 0.0
    %2795 = vmatpush1.msra.mxu0 0.0
    %2796 = vmatprep.subr.mxu0 0.0
    %2797 = vmatpush1.msra.mxu0 0.0
    %2798 = vmatprep.subr.mxu0 0.0
    %2799 = vmatpush1.msra.mxu0 0.0
    %2800 = vmatprep.subr.mxu0 0.0
    %2801 = vmatpush1.msra.mxu0 0.0
    %2802 = vmatprep.subr.mxu0 0.0
    %2803 = vmatpush1.msra.mxu0 0.0
    %2804 = vmatprep.subr.mxu0 0.0
    %2805 = vmatpush1.msra.mxu0 0.0
    %2806 = vmatprep.subr.mxu0 0.0
    %2807 = vmatpush1.msra.mxu0 0.0
    %2808 = vmatprep.subr.mxu0 0.0
    %2809 = vmatpush1.msra.mxu0 0.0
    %2810 = vmatprep.subr.mxu0 0.0
    %2811 = vmatpush1.msra.mxu0 0.0
    %2812 = vmatprep.subr.mxu0 0.0
    %2813 = vmatpush1.msra.mxu0 0.0
    %2814 = vmatprep.subr.mxu0 0.0
    %2815 = vmatpush1.msra.mxu0 0.0
    %2816 = vmatprep.subr.mxu0 0.0
    %2817 = vmatpush1.msra.mxu0 0.0
    %2818 = vmatprep.subr.mxu0 0.0
    %2819 = vmatpush1.msra.mxu0 0.0
    %2820 = vmatprep.subr.mxu0 0.0
    %2821 = vmatpush1.msra.mxu0 0.0
    %2822 = vmatprep.subr.mxu0 0.0
    %2823 = vmatpush1.msra.mxu0 0.0
    %2824 = vmatprep.subr.mxu0 0.0
    %2825 = vmatpush1.msra.mxu0 0.0
    %2826 = vmatprep.subr.mxu0 0.0
    %2827 = vmatpush1.msra.mxu0 0.0
    %2828 = vmatprep.subr.mxu0 0.0
    %2829 = vmatpush1.msra.mxu0 0.0
    %2830 = vmatprep.subr.mxu0 0.0
    %2831 = vmatpush1.msra.mxu0 0.0
    %2832 = vmatprep.mubr.f32.mxu0 0.0
    %2833 = vmatmul.mubr.f32.gmra.mrb[0].mxu0 %v2763
    %v2834 = vpop.f32.mrb[0].mxu0
    %v2835 = vadd.f32 0.0, %v2834
    %v2836 = vpop.f32.mrb[0].mxu0
    %2837 = vmatprep.mubr.f32.mxu0 0.0
    %2838 = vmatmul.mubr.f32.gmra.mrb[0].mxu0 %v2766
    %v2839 = vpop.f32.mrb[0].mxu0
    %v2840 = vadd.f32 0.0, %v2839
    %v2841 = vpop.f32.mrb[0].mxu0
    %2842 = vdwg.mxu0
    %v2844 = vsel %vm238, %v2587, 0
    %v2847 = vsel %vm238, %v2592, 0
    %2849 = vmatprep.subr.mxu0 0.0
    %2850 = vmatpush1.msra.mxu0 %v2599
    %2851 = vmatprep.subr.mxu0 0.0
    %2852 = vmatpush1.msra.mxu0 0.0
    %2853 = vmatprep.subr.mxu0 0.0
    %2854 = vmatpush1.msra.mxu0 0.0
    %2855 = vmatprep.subr.mxu0 0.0
    %2856 = vmatpush1.msra.mxu0 0.0
    %2857 = vmatprep.subr.mxu0 0.0
    %2858 = vmatpush1.msra.mxu0 0.0
    %2859 = vmatprep.subr.mxu0 0.0
    %2860 = vmatpush1.msra.mxu0 0.0
    %2861 = vmatprep.subr.mxu0 0.0
    %2862 = vmatpush1.msra.mxu0 0.0
    %2863 = vmatprep.subr.mxu0 0.0
    %2864 = vmatpush1.msra.mxu0 0.0
    %2865 = vmatprep.subr.mxu0 0.0
    %2866 = vmatpush1.msra.mxu0 0.0
    %2867 = vmatprep.subr.mxu0 0.0
    %2868 = vmatpush1.msra.mxu0 0.0
    %2869 = vmatprep.subr.mxu0 0.0
    %2870 = vmatpush1.msra.mxu0 0.0
    %2871 = vmatprep.subr.mxu0 0.0
    %2872 = vmatpush1.msra.mxu0 0.0
    %2873 = vmatprep.subr.mxu0 0.0
    %2874 = vmatpush1.msra.mxu0 0.0
    %2875 = vmatprep.subr.mxu0 0.0
    %2876 = vmatpush1.msra.mxu0 0.0
    %2877 = vmatprep.subr.mxu0 0.0
    %2878 = vmatpush1.msra.mxu0 0.0
    %2879 = vmatprep.subr.mxu0 0.0
    %2880 = vmatpush1.msra.mxu0 0.0
    %2881 = vmatprep.subr.mxu0 0.0
    %2882 = vmatpush1.msra.mxu0 0.0
    %2883 = vmatprep.subr.mxu0 0.0
    %2884 = vmatpush1.msra.mxu0 0.0
    %2885 = vmatprep.subr.mxu0 0.0
    %2886 = vmatpush1.msra.mxu0 0.0
    %2887 = vmatprep.subr.mxu0 0.0
    %2888 = vmatpush1.msra.mxu0 0.0
    %2889 = vmatprep.subr.mxu0 0.0
    %2890 = vmatpush1.msra.mxu0 0.0
    %2891 = vmatprep.subr.mxu0 0.0
    %2892 = vmatpush1.msra.mxu0 0.0
    %2893 = vmatprep.subr.mxu0 0.0
    %2894 = vmatpush1.msra.mxu0 0.0
    %2895 = vmatprep.subr.mxu0 0.0
    %2896 = vmatpush1.msra.mxu0 0.0
    %2897 = vmatprep.subr.mxu0 0.0
    %2898 = vmatpush1.msra.mxu0 0.0
    %2899 = vmatprep.subr.mxu0 0.0
    %2900 = vmatpush1.msra.mxu0 0.0
    %2901 = vmatprep.subr.mxu0 0.0
    %2902 = vmatpush1.msra.mxu0 0.0
    %2903 = vmatprep.subr.mxu0 0.0
    %2904 = vmatpush1.msra.mxu0 0.0
    %2905 = vmatprep.subr.mxu0 0.0
    %2906 = vmatpush1.msra.mxu0 0.0
    %2907 = vmatprep.subr.mxu0 0.0
    %2908 = vmatpush1.msra.mxu0 0.0
    %2909 = vmatprep.subr.mxu0 0.0
    %2910 = vmatpush1.msra.mxu0 0.0
    %2911 = vmatprep.subr.mxu0 0.0
    %2912 = vmatpush1.msra.mxu0 0.0
    %2913 = vmatprep.mubr.f32.mxu0 0.0
    %2914 = vmatmul.mubr.f32.gmra.mrb[0].mxu0 %v2844
    %v2915 = vpop.f32.mrb[0].mxu0
    %v2916 = vadd.f32 0.0, %v2915
    %v2917 = vpop.f32.mrb[0].mxu0
    %2918 = vmatprep.mubr.f32.mxu0 0.0
    %2919 = vmatmul.mubr.f32.gmra.mrb[0].mxu0 %v2847
    %v2920 = vpop.f32.mrb[0].mxu0
    %v2921 = vadd.f32 0.0, %v2920
    %v2922 = vpop.f32.mrb[0].mxu0
    %2923 = vdwg.mxu0
    %v2924 = vsel %vm70, %v2673, 0.0
    %v2925 = vsel %vm70, %v2754, 0.0
    %v2926 = vadd.f32 %v2924, %v2925
    %v2927 = vsel %vm70, %v2835, 0.0
    %v2928 = vadd.f32 %v2926, %v2927
    %v2929 = vsel %vm70, %v2916, 0.0
    %v2930 = vadd.f32 %v2928, %v2929
    %v2931 = vsel %vm70, %v2678, 0.0
    %v2932 = vsel %vm70, %v2759, 0.0
    %v2933 = vadd.f32 %v2931, %v2932
    %v2934 = vsel %vm70, %v2840, 0.0
    %v2935 = vadd.f32 %v2933, %v2934
    %v2936 = vsel %vm70, %v2921, 0.0
    %v2937 = vadd.f32 %v2935, %v2936
    %v2938 = vadd.f32 %v1633, %v2930
    %v2939 = vadd.f32 %v1634, %v2937
    %s2940 = scalar_lea.vmem %s8, 1
    %v2941 = vld [vmem:[%s2940] sm:$0x1]
    %v2943 = vlaneseq
    %v2944 = vshrl.u32 %v2943, 7
    %v2945 = vsub.s32 0, %v2944
    %v2946 = vrot.slane %v2941, %v2945
    %v2948 = vadd.f32 %v2938, %v2946
    %v2949 = vadd.f32 %v2939, %v2946
    %s2950 = scalar_lea.vmem %s9, 1
    %v2951 = vld [vmem:[%s2950] sm:$0x1]
    %s2952 = scalar_lea.vmem %s10, 1
    %v2953 = vld [vmem:[%s2952] sm:$0x1]
    %v2954 = vsel %vm70, %v2948, 0.0
    %2955 = vadd.xlane.f32.xlu0 %v2954
    %v2956 = vpop.xlane.xlu0 %2955
    %v2957 = vsel %vm70, %v2949, 0.0
    %2958 = vadd.xlane.f32.xlu0 %v2957
    %v2959 = vpop.xlane.xlu0 %2958
    %v2960 = vmul.f32 %v2956, %v77
    %v2961 = vmul.f32 %v2959, %v77
    %v2962 = vsub.f32 %v2948, %v2960
    %v2963 = vsub.f32 %v2949, %v2961
    %v2964 = vmul.f32 %v2962, %v2962
    %v2965 = vmul.f32 %v2963, %v2963
    %v2966 = vsel %vm70, %v2964, 0.0
    %2967 = vadd.xlane.f32.xlu0 %v2966
    %v2968 = vpop.xlane.xlu0 %2967
    %v2969 = vsel %vm70, %v2965, 0.0
    %2970 = vadd.xlane.f32.xlu0 %v2969
    %v2971 = vpop.xlane.xlu0 %2970
    %v2972 = vmul.f32 %v2968, %v77
    %v2973 = vmul.f32 %v2971, %v77
    %v2974 = vadd.f32 %v2972, 1e-05
    %v2975 = vadd.f32 %v2973, 1e-05
    %v2976 = vrsqrt.pop %v2974
    %v2977 = vrsqrt.pop %v2975
    %v2978 = vmul.f32 %v2962, %v2976
    %v2979 = vmul.f32 %v2963, %v2977
    %v2981 = vlaneseq
    %v2982 = vshrl.u32 %v2981, 7
    %v2983 = vsub.s32 0, %v2982
    %v2984 = vrot.slane %v2951, %v2983
    %v2986 = vmul.f32 %v2978, %v2984
    %v2987 = vmul.f32 %v2979, %v2984
    %v2989 = vlaneseq
    %v2990 = vshrl.u32 %v2989, 7
    %v2991 = vsub.s32 0, %v2990
    %v2992 = vrot.slane %v2953, %v2991
    %v2994 = vadd.f32 %v2986, %v2992
    %v2995 = vadd.f32 %v2987, %v2992
    %s2996 = scalar_lea.vmem %s11, 32
    %v2997 = vld [vmem:[%s2996] sm:$0xff]
    %v2998 = vld [vmem:[%s2996 + $0x8] sm:$0xff]
    %v2999 = vld [vmem:[%s2996 + $0x10] sm:$0xff]
    %v3000 = vld [vmem:[%s2996 + $0x18] sm:$0xff]
    %s3001 = scalar_lea.vmem %s12, 1
    %v3002 = vld [vmem:[%s3001] sm:$0x1]
    %v3004 = vlaneseq
    %v3005 = vshrl.u32 %v3004, 7
    %v3006 = vsub.s32 0, %v3005
    %v3007 = vrot.slane %v3002, %v3006
    %v3010 = vsel %vm70, %v2994, 0
    %v3013 = vsel %vm70, %v2995, 0
    %3015 = vmatprep.subr.mxu0 0.0
    %3016 = vmatpush1.msra.mxu0 %v2997
    %3017 = vmatprep.subr.mxu0 0.0
    %3018 = vmatpush1.msra.mxu0 %v2998
    %3019 = vmatprep.subr.mxu0 0.0
    %3020 = vmatpush1.msra.mxu0 %v2999
    %3021 = vmatprep.subr.mxu0 0.0
    %3022 = vmatpush1.msra.mxu0 %v3000
    %3023 = vmatprep.subr.mxu0 0.0
    %3024 = vmatpush1.msra.mxu0 0.0
    %3025 = vmatprep.subr.mxu0 0.0
    %3026 = vmatpush1.msra.mxu0 0.0
    %3027 = vmatprep.subr.mxu0 0.0
    %3028 = vmatpush1.msra.mxu0 0.0
    %3029 = vmatprep.subr.mxu0 0.0
    %3030 = vmatpush1.msra.mxu0 0.0
    %3031 = vmatprep.subr.mxu0 0.0
    %3032 = vmatpush1.msra.mxu0 0.0
    %3033 = vmatprep.subr.mxu0 0.0
    %3034 = vmatpush1.msra.mxu0 0.0
    %3035 = vmatprep.subr.mxu0 0.0
    %3036 = vmatpush1.msra.mxu0 0.0
    %3037 = vmatprep.subr.mxu0 0.0
    %3038 = vmatpush1.msra.mxu0 0.0
    %3039 = vmatprep.subr.mxu0 0.0
    %3040 = vmatpush1.msra.mxu0 0.0
    %3041 = vmatprep.subr.mxu0 0.0
    %3042 = vmatpush1.msra.mxu0 0.0
    %3043 = vmatprep.subr.mxu0 0.0
    %3044 = vmatpush1.msra.mxu0 0.0
    %3045 = vmatprep.subr.mxu0 0.0
    %3046 = vmatpush1.msra.mxu0 0.0
    %3047 = vmatprep.subr.mxu0 0.0
    %3048 = vmatpush1.msra.mxu0 0.0
    %3049 = vmatprep.subr.mxu0 0.0
    %3050 = vmatpush1.msra.mxu0 0.0
    %3051 = vmatprep.subr.mxu0 0.0
    %3052 = vmatpush1.msra.mxu0 0.0
    %3053 = vmatprep.subr.mxu0 0.0
    %3054 = vmatpush1.msra.mxu0 0.0
    %3055 = vmatprep.subr.mxu0 0.0
    %3056 = vmatpush1.msra.mxu0 0.0
    %3057 = vmatprep.subr.mxu0 0.0
    %3058 = vmatpush1.msra.mxu0 0.0
    %3059 = vmatprep.subr.mxu0 0.0
    %3060 = vmatpush1.msra.mxu0 0.0
    %3061 = vmatprep.subr.mxu0 0.0
    %3062 = vmatpush1.msra.mxu0 0.0
    %3063 = vmatprep.subr.mxu0 0.0
    %3064 = vmatpush1.msra.mxu0 0.0
    %3065 = vmatprep.subr.mxu0 0.0
    %3066 = vmatpush1.msra.mxu0 0.0
    %3067 = vmatprep.subr.mxu0 0.0
    %3068 = vmatpush1.msra.mxu0 0.0
    %3069 = vmatprep.subr.mxu0 0.0
    %3070 = vmatpush1.msra.mxu0 0.0
    %3071 = vmatprep.subr.mxu0 0.0
    %3072 = vmatpush1.msra.mxu0 0.0
    %3073 = vmatprep.subr.mxu0 0.0
    %3074 = vmatpush1.msra.mxu0 0.0
    %3075 = vmatprep.subr.mxu0 0.0
    %3076 = vmatpush1.msra.mxu0 0.0
    %3077 = vmatprep.subr.mxu0 0.0
    %3078 = vmatpush1.msra.mxu0 0.0
    %3079 = vmatprep.mubr.f32.mxu0 0.0
    %3080 = vmatmul.mubr.f32.gmra.mrb[0].mxu0 %v3010
    %v3081 = vpop.f32.mrb[0].mxu0
    %v3082 = vadd.f32 %v3007, %v3081
    %v3083 = vpop.f32.mrb[0].mxu0
    %3084 = vmatprep.mubr.f32.mxu0 0.0
    %3085 = vmatmul.mubr.f32.gmra.mrb[0].mxu0 %v3013
    %v3086 = vpop.f32.mrb[0].mxu0
    %v3087 = vadd.f32 %v3007, %v3086
    %v3088 = vpop.f32.mrb[0].mxu0
    %3089 = vdwg.mxu0
    %v3090 = vmul.f32 %v3082, 1.702
    %v3091 = vmul.f32 %v3087, 1.702
    %v3092 = vxor.u32 %v3090, 2147483648
    %v3093 = vxor.u32 %v3091, 2147483648
    %v3094 = vmul.f32 %v3092, 1.442695
    %v3095 = vpow.pop %v3094
    %v3096 = vmul.f32 %v3093, 1.442695
    %v3097 = vpow.pop %v3096
    %v3098 = vadd.f32 %v3095, 1.0
    %v3099 = vadd.f32 %v3097, 1.0
    %v3100 = vrcp.pop %v3098
    %v3101 = vmul.f32 1.0, %v3100
    %v3102 = vrcp.pop %v3099
    %v3103 = vmul.f32 1.0, %v3102
    %v3104 = vmul.f32 %v3082, %v3101
    %v3105 = vmul.f32 %v3087, %v3103
    %s3106 = scalar_lea.vmem %s13, 128
    %v3107 = vld [vmem:[%s3106] sm:$0xff]
    %v3108 = vld [vmem:[%s3106 + $0x8] sm:$0xff]
    %v3109 = vld [vmem:[%s3106 + $0x10] sm:$0xff]
    %v3110 = vld [vmem:[%s3106 + $0x18] sm:$0xff]
    %v3111 = vld [vmem:[%s3106 + $0x20] sm:$0xff]
    %v3112 = vld [vmem:[%s3106 + $0x28] sm:$0xff]
    %v3113 = vld [vmem:[%s3106 + $0x30] sm:$0xff]
    %v3114 = vld [vmem:[%s3106 + $0x38] sm:$0xff]
    %v3115 = vld [vmem:[%s3106 + $0x40] sm:$0xff]
    %v3116 = vld [vmem:[%s3106 + $0x48] sm:$0xff]
    %v3117 = vld [vmem:[%s3106 + $0x50] sm:$0xff]
    %v3118 = vld [vmem:[%s3106 + $0x58] sm:$0xff]
    %v3119 = vld [vmem:[%s3106 + $0x60] sm:$0xff]
    %v3120 = vld [vmem:[%s3106 + $0x68] sm:$0xff]
    %v3121 = vld [vmem:[%s3106 + $0x70] sm:$0xff]
    %v3122 = vld [vmem:[%s3106 + $0x78] sm:$0xff]
    %3123 = vmatprep.subr.mxu0 0.0
    %3124 = vmatpush1.msra.mxu0 %v3107
    %3125 = vmatprep.subr.mxu0 0.0
    %3126 = vmatpush1.msra.mxu0 %v3108
    %3127 = vmatprep.subr.mxu0 0.0
    %3128 = vmatpush1.msra.mxu0 %v3109
    %3129 = vmatprep.subr.mxu0 0.0
    %3130 = vmatpush1.msra.mxu0 %v3110
    %3131 = vmatprep.subr.mxu0 0.0
    %3132 = vmatpush1.msra.mxu0 %v3111
    %3133 = vmatprep.subr.mxu0 0.0
    %3134 = vmatpush1.msra.mxu0 %v3112
    %3135 = vmatprep.subr.mxu0 0.0
    %3136 = vmatpush1.msra.mxu0 %v3113
    %3137 = vmatprep.subr.mxu0 0.0
    %3138 = vmatpush1.msra.mxu0 %v3114
    %3139 = vmatprep.subr.mxu0 0.0
    %3140 = vmatpush1.msra.mxu0 %v3115
    %3141 = vmatprep.subr.mxu0 0.0
    %3142 = vmatpush1.msra.mxu0 %v3116
    %3143 = vmatprep.subr.mxu0 0.0
    %3144 = vmatpush1.msra.mxu0 %v3117
    %3145 = vmatprep.subr.mxu0 0.0
    %3146 = vmatpush1.msra.mxu0 %v3118
    %3147 = vmatprep.subr.mxu0 0.0
    %3148 = vmatpush1.msra.mxu0 %v3119
    %3149 = vmatprep.subr.mxu0 0.0
    %3150 = vmatpush1.msra.mxu0 %v3120
    %3151 = vmatprep.subr.mxu0 0.0
    %3152 = vmatpush1.msra.mxu0 %v3121
    %3153 = vmatprep.subr.mxu0 0.0
    %3154 = vmatpush1.msra.mxu0 %v3122
    %3155 = vmatprep.subr.mxu0 0.0
    %3156 = vmatpush1.msra.mxu0 0.0
    %3157 = vmatprep.subr.mxu0 0.0
    %3158 = vmatpush1.msra.mxu0 0.0
    %3159 = vmatprep.subr.mxu0 0.0
    %3160 = vmatpush1.msra.mxu0 0.0
    %3161 = vmatprep.subr.mxu0 0.0
    %3162 = vmatpush1.msra.mxu0 0.0
    %3163 = vmatprep.subr.mxu0 0.0
    %3164 = vmatpush1.msra.mxu0 0.0
    %3165 = vmatprep.subr.mxu0 0.0
    %3166 = vmatpush1.msra.mxu0 0.0
    %3167 = vmatprep.subr.mxu0 0.0
    %3168 = vmatpush1.msra.mxu0 0.0
    %3169 = vmatprep.subr.mxu0 0.0
    %3170 = vmatpush1.msra.mxu0 0.0
    %3171 = vmatprep.subr.mxu0 0.0
    %3172 = vmatpush1.msra.mxu0 0.0
    %3173 = vmatprep.subr.mxu0 0.0
    %3174 = vmatpush1.msra.mxu0 0.0
    %3175 = vmatprep.subr.mxu0 0.0
    %3176 = vmatpush1.msra.mxu0 0.0
    %3177 = vmatprep.subr.mxu0 0.0
    %3178 = vmatpush1.msra.mxu0 0.0
    %3179 = vmatprep.subr.mxu0 0.0
    %3180 = vmatpush1.msra.mxu0 0.0
    %3181 = vmatprep.subr.mxu0 0.0
    %3182 = vmatpush1.msra.mxu0 0.0
    %3183 = vmatprep.subr.mxu0 0.0
    %3184 = vmatpush1.msra.mxu0 0.0
    %3185 = vmatprep.subr.mxu0 0.0
    %3186 = vmatpush1.msra.mxu0 0.0
    %3187 = vmatprep.mubr.f32.mxu0 0.0
    %3188 = vmatmul.mubr.f32.gmra.mrb[0].mxu0 %v3104
    %v3189 = vpop.f32.mrb[0].mxu0
    %v3190 = vadd.f32 0.0, %v3189
    %v3191 = vpop.f32.mrb[0].mxu0
    %3192 = vmatprep.mubr.f32.mxu0 0.0
    %3193 = vmatmul.mubr.f32.gmra.mrb[0].mxu0 %v3105
    %v3194 = vpop.f32.mrb[0].mxu0
    %v3195 = vadd.f32 0.0, %v3194
    %v3196 = vpop.f32.mrb[0].mxu0
    %3197 = vdwg.mxu0
    %v3198 = vadd.f32 %v2948, %v3190
    %v3199 = vadd.f32 %v2949, %v3195
    %s3200 = scalar_lea.vmem %s14, 1
    %v3201 = vld [vmem:[%s3200] sm:$0x1]
    %v3203 = vlaneseq
    %v3204 = vshrl.u32 %v3203, 7
    %v3205 = vsub.s32 0, %v3204
    %v3206 = vrot.slane %v3201, %v3205
    %v3208 = vadd.f32 %v3198, %v3206
    %v3209 = vadd.f32 %v3199, %v3206
    %3210 = vst.msk [vmem:[#allocation2] sm:$0xff] %vm70, %v3208
    %3211 = vst.msk [vmem:[#allocation2 + $0x8] sm:$0xff] %vm70, %v3209
    %s3212 = sld [smem:[#allocation4]]
    %s3213 = scalar_lea.vmem [#allocation2], %s3212
    %v3214 = vld [vmem:[%s3213] sm:$0x1]
    %s3215 = sld [smem:[#allocation4 + $0x1]]
    %s3216 = sadd.s32 %s3215, 8
    %s3217 = scalar_lea.vmem [#allocation2], %s3216
    %v3218 = vld [vmem:[%s3217] sm:$0x1]
    %v3220 = vrot.slane %v3218, 7
    %vm3222 = vcmask 1040384
    %v3223 = vsel %vm3222, %v3214, %v3220
    %v3224 = vld [vmem:[%s15] sm:$0x1]
    %v3225 = vld [vmem:[%s16] sm:$0x1]
    %vm3226 = vcmask 254976
    %v3227 = vsel %vm3226, %v3223, 0.0
    %3228 = vadd.xlane.f32.xlu0 %v3227
    %v3229 = vpop.xlane.xlu0 %3228
    %v3230 = vmul.f32 %v3229, %v77
    %v3231 = vsub.f32 %v3223, %v3230
    %v3232 = vmul.f32 %v3231, %v3231
    %v3233 = vsel %vm3226, %v3232, 0.0
    %3234 = vadd.xlane.f32.xlu0 %v3233
    %v3235 = vpop.xlane.xlu0 %3234
    %v3236 = vmul.f32 %v3235, %v77
    %v3237 = vadd.f32 %v3236, 1e-05
    %v3238 = vrsqrt.pop %v3237
    %v3239 = vmul.f32 %v3231, %v3238
    %v3241 = vlaneseq
    %v3242 = vshrl.u32 %v3241, 7
    %v3243 = vsub.s32 0, %v3242
    %v3244 = vrot.slane %v3224, %v3243
    %v3246 = vmul.f32 %v3239, %v3244
    %v3248 = vlaneseq
    %v3249 = vshrl.u32 %v3248, 7
    %v3250 = vsub.s32 0, %v3249
    %v3251 = vrot.slane %v3225, %v3250
    %v3253 = vadd.f32 %v3246, %v3251
    %v3254 = vld [vmem:[%s17] sm:$0xff]
    %v3255 = vld [vmem:[%s17 + $0x8] sm:$0xff]
    %v3256 = vld [vmem:[%s17 + $0x10] sm:$0xff]
    %v3257 = vld [vmem:[%s17 + $0x18] sm:$0xff]
    %v3259 = vsel %vm70, %v3253, 0
    %3261 = vmatprep.subr.mxu0 0.0
    %3262 = vmatpush1.msra.mxu0 %v3254
    %3263 = vmatprep.subr.mxu0 0.0
    %3264 = vmatpush1.msra.mxu0 %v3255
    %3265 = vmatprep.subr.mxu0 0.0
    %3266 = vmatpush1.msra.mxu0 %v3256
    %3267 = vmatprep.subr.mxu0 0.0
    %3268 = vmatpush1.msra.mxu0 %v3257
    %3269 = vmatprep.subr.mxu0 0.0
    %3270 = vmatpush1.msra.mxu0 0.0
    %3271 = vmatprep.subr.mxu0 0.0
    %3272 = vmatpush1.msra.mxu0 0.0
    %3273 = vmatprep.subr.mxu0 0.0
    %3274 = vmatpush1.msra.mxu0 0.0
    %3275 = vmatprep.subr.mxu0 0.0
    %3276 = vmatpush1.msra.mxu0 0.0
    %3277 = vmatprep.subr.mxu0 0.0
    %3278 = vmatpush1.msra.mxu0 0.0
    %3279 = vmatprep.subr.mxu0 0.0
    %3280 = vmatpush1.msra.mxu0 0.0
    %3281 = vmatprep.subr.mxu0 0.0
    %3282 = vmatpush1.msra.mxu0 0.0
    %3283 = vmatprep.subr.mxu0 0.0
    %3284 = vmatpush1.msra.mxu0 0.0
    %3285 = vmatprep.subr.mxu0 0.0
    %3286 = vmatpush1.msra.mxu0 0.0
    %3287 = vmatprep.subr.mxu0 0.0
    %3288 = vmatpush1.msra.mxu0 0.0
    %3289 = vmatprep.subr.mxu0 0.0
    %3290 = vmatpush1.msra.mxu0 0.0
    %3291 = vmatprep.subr.mxu0 0.0
    %3292 = vmatpush1.msra.mxu0 0.0
    %3293 = vmatprep.subr.mxu0 0.0
    %3294 = vmatpush1.msra.mxu0 0.0
    %3295 = vmatprep.subr.mxu0 0.0
    %3296 = vmatpush1.msra.mxu0 0.0
    %3297 = vmatprep.subr.mxu0 0.0
    %3298 = vmatpush1.msra.mxu0 0.0
    %3299 = vmatprep.subr.mxu0 0.0
    %3300 = vmatpush1.msra.mxu0 0.0
    %3301 = vmatprep.subr.mxu0 0.0
    %3302 = vmatpush1.msra.mxu0 0.0
    %3303 = vmatprep.subr.mxu0 0.0
    %3304 = vmatpush1.msra.mxu0 0.0
    %3305 = vmatprep.subr.mxu0 0.0
    %3306 = vmatpush1.msra.mxu0 0.0
    %3307 = vmatprep.subr.mxu0 0.0
    %3308 = vmatpush1.msra.mxu0 0.0
    %3309 = vmatprep.subr.mxu0 0.0
    %3310 = vmatpush1.msra.mxu0 0.0
    %3311 = vmatprep.subr.mxu0 0.0
    %3312 = vmatpush1.msra.mxu0 0.0
    %3313 = vmatprep.subr.mxu0 0.0
    %3314 = vmatpush1.msra.mxu0 0.0
    %3315 = vmatprep.subr.mxu0 0.0
    %3316 = vmatpush1.msra.mxu0 0.0
    %3317 = vmatprep.subr.mxu0 0.0
    %3318 = vmatpush1.msra.mxu0 0.0
    %3319 = vmatprep.subr.mxu0 0.0
    %3320 = vmatpush1.msra.mxu0 0.0
    %3321 = vmatprep.subr.mxu0 0.0
    %3322 = vmatpush1.msra.mxu0 0.0
    %3323 = vmatprep.subr.mxu0 0.0
    %3324 = vmatpush1.msra.mxu0 0.0
    %3325 = vmatprep.mubr.f32.mxu0 0.0
    %3326 = vmatmul.mubr.f32.gmra.mrb[0].mxu0 %v3259
    %v3327 = vpop.f32.mrb[0].mxu0
    %v3328 = vadd.f32 0.0, %v3327
    %v3329 = vpop.f32.mrb[0].mxu0
    %3330 = vdwg.mxu0
    %3331 = vst.msk [vmem:[#allocation5] sm:$0x3] %vm3226, %v3328
    // Predicated region
    $region70: #{tpu_custom_call.1} parent=1 // pred_check
      _
    $region71: #{tpu_custom_call.1} parent=1 // pred_check_branch
      %3333 = sbr.rel (0) target = $region73
    $region72: #{tpu_custom_call.1} parent=1 // pred_region
      %s3335 = ssub.s32 32, 32
      %3336 = vsyncadd [#allocation6], %s3335
      %s3338 = sshll.u32 [#allocation5], 4
      %s3339 = int_to_ptr.vmem [resolvable:$true] %s3338
      %3341 = dma.vmem_to_hbm [thread:$0]  %s3339, 32, %s18, [#allocation6]
    $region73: #{tpu_custom_call.1} parent=1 // pred_fallthru
      _
    // Predicated region
    $region74: #{tpu_custom_call.1} parent=1 // pred_check
      _
    $region75: #{tpu_custom_call.1} parent=1 // pred_check_branch
      %3343 = sbr.rel (0) target = $region77
    $region76: #{tpu_custom_call.1} parent=1 // pred_region
      %3344 = dma.done [#allocation6], 32
    $region77: #{tpu_custom_call.1} parent=1 // pred_fallthru
      _
    %3345 = vsyncpa [#allocation6], 1

</llo_original>
